<compile_context>
chip_gen: v6e
topology: v6e:2x2x1
jax: 0.10.0
libtpu: 0.0.40
codegen_flags: <defaults>
</compile_context>

<pallas_src>
import math

import numpy as np
import jax
import jax.numpy as jnp
from jax.experimental import pallas as pl
from jax.experimental.pallas import tpu as pltpu


# ----------------------------------------------------------------------------
# Configuration (mirrors the PyTorch `config` object used by the module)
# ----------------------------------------------------------------------------
class Config:
    window_size = 16   # length of the raw 1-D input sequence per batch element
    small_window = 4   # sliding-window size (== n_features fed to encoder rnn1)
    small_stride = 2   # sliding-window stride


CONFIG = Config()
BATCH = 2
BATCH_PAD = 8                      # pad batch to fill the 8-sublane vreg dimension
N_FEATURES = CONFIG.small_window   # 4  (LSTM1 input size must equal window size)
EMBED = 8                          # embedding_dim
OUT_LANES = 128                    # lane-dense output padding


def _window_starts(total, window, stride):
    count = math.ceil((total - window) / stride)
    starts = [i * stride for i in range(count)]
    if count * stride < total:
        starts.append(total - window)
    return starts


WINDOW_STARTS = _window_starts(CONFIG.window_size, CONFIG.small_window, CONFIG.small_stride)
SEQ_LEN = len(WINDOW_STARTS)                              # 7
LENGTH_FIT = CONFIG.window_size - CONFIG.small_window     # 12
KEEP = min(SEQ_LEN * CONFIG.small_stride, LENGTH_FIT)     # 12 (return_window truncation)
OUT_WIDTH = KEEP + N_FEATURES                             # 16


def _make_mix_np(batch, seq_len, batch_pad):
    # mix[t*Bp + b, j] = 1 iff b < batch and j == (b*seq_len + t) % batch,
    # reproducing torch x.repeat(seq_len,1).reshape(batch, seq_len, E) row mixing.
    m = np.zeros((seq_len, batch_pad, batch_pad), np.float32)
    for t in range(seq_len):
        for b in range(batch):
            m[t, b, (b * seq_len + t) % batch] = 1.0
    return m.reshape(seq_len * batch_pad, batch_pad)


MIX_NP = _make_mix_np(BATCH, SEQ_LEN, BATCH_PAD)


# ----------------------------------------------------------------------------
# In-kernel LSTM cell epilogue (PyTorch nn.LSTM semantics, gate order i, f, g, o)
# ----------------------------------------------------------------------------
def _lstm_from_gates(gates, c, H):
    # Full-width transcendentals first (4H lanes still fit one vreg row), slice after:
    # 2 EUP pushes per cell instead of 4, all on the serial recurrence chain.
    sig = jax.nn.sigmoid(gates)
    th = jnp.tanh(gates)
    i = sig[:, 0 * H:1 * H]
    f = sig[:, 1 * H:2 * H]
    g = th[:, 2 * H:3 * H]
    o = sig[:, 3 * H:4 * H]
    c_new = f * c + i * g
    h_new = o * jnp.tanh(c_new)
    return h_new, c_new


# ----------------------------------------------------------------------------
# Fused sliding-window + encoder + decoder + output-linear + return-window kernel
# ----------------------------------------------------------------------------
def autoencoder_kernel(x_ref,                             # (Bp, window_size)  zero-padded batch
                       mix_ref,                           # (S*Bp, Bp)  decoder-input one-hot mix
                       wih1e_ref, whh1e_ref, b1e_ref,     # enc rnn1: (F,4H1e) (H1e,4H1e) (1,4H1e)
                       wih2e_ref, whh2e_ref, b2e_ref,     # enc rnn2: (H1e,4H2e) (H2e,4H2e) (1,4H2e)
                       wih1d_ref, whh1d_ref, b1d_ref,     # dec rnn1: (E,4E) (E,4E) (1,4E)
                       wih2d_ref, whh2d_ref, b2d_ref,     # dec rnn2: (E,8E) (2E,8E) (1,8E)
                       wout_ref, bout_ref,                # Linear (lane-padded): (2E,128) (1,128)
                       out_ref,                           # (Bp, 128)
                       xp1_ref, xp1d_ref, d2_ref):        # VMEM scratch slabs
    f32 = jnp.float32
    Bp = x_ref.shape[0]
    S = SEQ_LEN
    Fw = CONFIG.small_window
    H1e = whh1e_ref.shape[0]
    H2e = whh2e_ref.shape[0]
    H1d = whh1d_ref.shape[0]
    H2d = whh2d_ref.shape[0]

    # ---- sliding window + time-major flatten (static slices, off the critical path) ----
    xpad = x_ref[...]                                                  # (Bp, T)
    xw = jnp.concatenate([xpad[:, s:s + Fw] for s in WINDOW_STARTS], axis=0)   # (S*Bp, F)

    # ---- encoder layer-1 input projections for ALL steps: one matmul, staged in VMEM ----
    xp1_ref[...] = jnp.dot(xw, wih1e_ref[...], preferred_element_type=f32) + b1e_ref[...]

    # ---- hoist loop-invariant weights / biases (broadcast biases exactly once) ----
    w_hh1e = whh1e_ref[...]
    w_ih2e = wih2e_ref[...]
    w_hh2e = whh2e_ref[...]
    b2e = jnp.broadcast_to(b2e_ref[...], (Bp, 4 * H2e))
    w_hh1d = whh1d_ref[...]
    w_ih2d = wih2d_ref[...]
    w_hh2d = whh2d_ref[...]
    b2d = jnp.broadcast_to(b2d_ref[...], (Bp, 4 * H2d))

    # ---- encoder recurrence (fully unrolled; layer-2 ih/hh matmuls kept split) ----
    h1 = jnp.zeros((Bp, H1e), f32)
    c1 = jnp.zeros((Bp, H1e), f32)
    h2 = jnp.zeros((Bp, H2e), f32)
    c2 = jnp.zeros((Bp, H2e), f32)
    for t in range(S):
        g1 = xp1_ref[t * Bp:(t + 1) * Bp, :] + jnp.dot(h1, w_hh1e,
                                                       preferred_element_type=f32)
        h1, c1 = _lstm_from_gates(g1, c1, H1e)
        g2 = (jnp.dot(h1, w_ih2e, preferred_element_type=f32)
              + jnp.dot(h2, w_hh2e, preferred_element_type=f32) + b2e)
        h2, c2 = _lstm_from_gates(g2, c2, H2e)

    # ---- decoder input: project the Bp embedding rows once, replicate per step via the
    #      precomputed one-hot mix (reproduces torch repeat/reshape batch-row mixing) ----
    proj = jnp.dot(h2, wih1d_ref[...], preferred_element_type=f32) + b1d_ref[...]
    xp1d_ref[...] = jnp.dot(mix_ref[...], proj, preferred_element_type=f32)   # (S*Bp, 4*H1d)

    # ---- decoder recurrence (fully unrolled; per-step hd2 staged into VMEM scratch) ----
    hd1 = jnp.zeros((Bp, H1d), f32)
    cd1 = jnp.zeros((Bp, H1d), f32)
    hd2 = jnp.zeros((Bp, H2d), f32)
    cd2 = jnp.zeros((Bp, H2d), f32)
    for t in range(S):
        g1 = xp1d_ref[t * Bp:(t + 1) * Bp, :] + jnp.dot(hd1, w_hh1d,
                                                        preferred_element_type=f32)
        hd1, cd1 = _lstm_from_gates(g1, cd1, H1d)
        g2 = (jnp.dot(hd1, w_ih2d, preferred_element_type=f32)
              + jnp.dot(hd2, w_hh2d, preferred_element_type=f32) + b2d)
        hd2, cd2 = _lstm_from_gates(g2, cd2, H2d)
        d2_ref[t * Bp:(t + 1) * Bp, :] = hd2

    # ---- output Linear over all steps (lane-padded weights) + fused _return_window ----
    out_full = (jnp.dot(d2_ref[...], wout_ref[...], preferred_element_type=f32)
                + bout_ref[...])                                       # (S*Bp, 128)
    pieces = []
    taken, t = 0, 0
    while taken < KEEP:                      # first `length_fit` values: cols 0:stride per step
        w = min(CONFIG.small_stride, KEEP - taken)
        pieces.append(out_full[t * Bp:(t + 1) * Bp, 0:w])
        taken += w
        t += 1
    pieces.append(out_full[(S - 1) * Bp:S * Bp, 0:N_FEATURES])         # last step, all features
    final = jnp.concatenate(pieces, axis=1)                            # (Bp, OUT_WIDTH)
    out_ref[...] = jnp.concatenate(
        [final, jnp.zeros((Bp, OUT_LANES - OUT_WIDTH), f32)], axis=1)  # one unmasked full store


# ----------------------------------------------------------------------------
# pallas_call wrapper: grid-less, whole arrays resident in VMEM
# ----------------------------------------------------------------------------
def _prepare_kernel_args(params):
    """Weight layout prep (transpose / bias fold / lane pad). Run once, outside jit."""
    e1, e2 = params["enc1"], params["enc2"]
    d1, d2 = params["dec1"], params["dec2"]
    po = params["out"]
    nf = po["w"].shape[0]
    wout = jnp.pad(po["w"].T, ((0, 0), (0, OUT_LANES - nf)))
    bout = jnp.pad(po["b"][None, :], ((0, 0), (0, OUT_LANES - nf)))
    return (
        jnp.asarray(MIX_NP),
        e1["w_ih"].T, e1["w_hh"].T, (e1["b_ih"] + e1["b_hh"])[None, :],
        e2["w_ih"].T, e2["w_hh"].T, (e2["b_ih"] + e2["b_hh"])[None, :],
        d1["w_ih"].T, d1["w_hh"].T, (d1["b_ih"] + d1["b_hh"])[None, :],
        d2["w_ih"].T, d2["w_hh"].T, (d2["b_ih"] + d2["b_hh"])[None, :],
        wout, bout,
    )


def run_autoencoder(x_padded, kargs):
    vmem = pl.BlockSpec(memory_space=pltpu.MemorySpace.VMEM)
    return pl.pallas_call(
        autoencoder_kernel,
        out_shape=jax.ShapeDtypeStruct((BATCH_PAD, OUT_LANES), jnp.float32),
        in_specs=[vmem] * (1 + len(kargs)),
        out_specs=vmem,
        scratch_shapes=[
            pltpu.VMEM((SEQ_LEN * BATCH_PAD, 4 * 2 * EMBED), jnp.float32),  # xp1  (enc L1 proj)
            pltpu.VMEM((SEQ_LEN * BATCH_PAD, 4 * EMBED), jnp.float32),      # xp1d (dec L1 proj)
            pltpu.VMEM((SEQ_LEN * BATCH_PAD, 2 * EMBED), jnp.float32),      # d2   (dec L2 outs)
        ],
    )(x_padded, *kargs)


def forward(x, kargs):
    # x: (B, window_size) float32 -> (B, window_size, 1), matching RecurrentAutoencoder.forward
    B = x.shape[0]
    assert B <= BATCH_PAD
    xp = jnp.pad(x, ((0, BATCH_PAD - B), (0, 0)))        # zero-pad batch to 8 sublanes
    out = run_autoencoder(xp, kargs)                     # (Bp, 128)
    return out[:B, :OUT_WIDTH].reshape(B, OUT_WIDTH, 1)


# ----------------------------------------------------------------------------
# Deterministic parameter init (same shapes / init scheme as nn.LSTM / nn.Linear)
# ----------------------------------------------------------------------------
def init_lstm(key, input_size, hidden):
    bound = 1.0 / math.sqrt(hidden)
    k1, k2, k3, k4 = jax.random.split(key, 4)
    return dict(
        w_ih=jax.random.uniform(k1, (4 * hidden, input_size), jnp.float32, -bound, bound),
        w_hh=jax.random.uniform(k2, (4 * hidden, hidden), jnp.float32, -bound, bound),
        b_ih=jax.random.uniform(k3, (4 * hidden,), jnp.float32, -bound, bound),
        b_hh=jax.random.uniform(k4, (4 * hidden,), jnp.float32, -bound, bound),
    )


def init_params(key):
    k1, k2, k3, k4, k5 = jax.random.split(key, 5)
    hidden_enc = 2 * EMBED
    hidden_dec = 2 * EMBED
    bound = 1.0 / math.sqrt(hidden_dec)
    ka, kb = jax.random.split(k5)
    return dict(
        enc1=init_lstm(k1, N_FEATURES, hidden_enc),      # LSTM(n_features -> 2E)
        enc2=init_lstm(k2, hidden_enc, EMBED),           # LSTM(2E -> E)
        dec1=init_lstm(k3, EMBED, EMBED),                # LSTM(E -> E)
        dec2=init_lstm(k4, EMBED, hidden_dec),           # LSTM(E -> 2E)
        out=dict(                                        # Linear(2E -> n_features)
            w=jax.random.uniform(ka, (N_FEATURES, hidden_dec), jnp.float32, -bound, bound),
            b=jax.random.uniform(kb, (N_FEATURES,), jnp.float32, -bound, bound),
        ),
    )


# ----------------------------------------------------------------------------
# Pure-JAX reference (mirrors the PyTorch module exactly; for numerical checks)
# ----------------------------------------------------------------------------
def sliding_window(x, window_size, stride):
    B, T = x.shape
    count = math.ceil((T - window_size) / stride)
    windows = []
    start = 0
    for _ in range(count):
        windows.append(x[:, start:start + window_size])
        start += stride
    if start < T:
        windows.append(x[:, T - window_size:T])
    return jnp.stack(windows, axis=1)


def return_window(x, seq_len, cfg):
    B = x.shape[0]
    flat = x[:, :seq_len, 0:cfg.small_stride].reshape(B, -1)
    length_fit = cfg.window_size - cfg.small_window
    if flat.shape[1] > length_fit:
        flat = flat[:, :length_fit]
    flat = jnp.concatenate([flat, x[:, -1, :].reshape(B, -1)], axis=1)
    return flat.reshape(B, -1, 1)


def lstm_ref(x, p):
    H = p["w_hh"].shape[1]
    B, T, _ = x.shape
    h = jnp.zeros((B, H), jnp.float32)
    c = jnp.zeros((B, H), jnp.float32)
    outs = []
    for t in range(T):
        gates = x[:, t] @ p["w_ih"].T + h @ p["w_hh"].T + p["b_ih"] + p["b_hh"]
        i = jax.nn.sigmoid(gates[:, :H])
        f = jax.nn.sigmoid(gates[:, H:2 * H])
        g = jnp.tanh(gates[:, 2 * H:3 * H])
        o = jax.nn.sigmoid(gates[:, 3 * H:])
        c = f * c + i * g
        h = o * jnp.tanh(c)
        outs.append(h)
    return jnp.stack(outs, 1), h


def forward_ref(x, params):
    B = x.shape[0]
    windows = sliding_window(x, CONFIG.small_window, CONFIG.small_stride)
    o1, _ = lstm_ref(windows, params["enc1"])
    _, enc_h = lstm_ref(o1, params["enc2"])
    # deliberately reproduces PyTorch repeat/reshape batch-row mixing
    dec_in = jnp.tile(enc_h, (SEQ_LEN, 1)).reshape(B, SEQ_LEN, EMBED)
    d1, _ = lstm_ref(dec_in, params["dec1"])
    d2, _ = lstm_ref(d1, params["dec2"])
    out = d2 @ params["out"]["w"].T + params["out"]["b"]
    return return_window(out, SEQ_LEN, CONFIG)


if __name__ == "__main__":
    key = jax.random.PRNGKey(0)
    kx, kp = jax.random.split(key)
    params = init_params(kp)
    x = jax.random.normal(kx, (BATCH, CONFIG.window_size), dtype=jnp.float32)

    kargs = _prepare_kernel_args(params)           # weight layout prep: once, outside jit
    fwd = jax.jit(lambda inp: forward(inp, kargs))
    out = jax.block_until_ready(fwd(x))

    ref = forward_ref(x, params)
    assert out.shape == (BATCH, CONFIG.window_size, 1), out.shape
    assert bool(jnp.all(jnp.isfinite(out)))
    max_err = float(jnp.max(jnp.abs(out - ref)))
    if max_err > 1e-4:
        raise SystemExit(f"numerical mismatch vs reference: max_err={max_err}")
    print("KERNEL_OK")
</pallas_src>

<mosaic_0001>
module attributes {stable_mosaic.version = 11 : i64} {
  func.func @autoencoder_kernel(%arg0: memref<8x16xf32, #tpu.memory_space<vmem>>, %arg1: memref<56x8xf32, #tpu.memory_space<vmem>>, %arg2: memref<4x64xf32, #tpu.memory_space<vmem>>, %arg3: memref<16x64xf32, #tpu.memory_space<vmem>>, %arg4: memref<1x64xf32, #tpu.memory_space<vmem>>, %arg5: memref<16x32xf32, #tpu.memory_space<vmem>>, %arg6: memref<8x32xf32, #tpu.memory_space<vmem>>, %arg7: memref<1x32xf32, #tpu.memory_space<vmem>>, %arg8: memref<8x32xf32, #tpu.memory_space<vmem>>, %arg9: memref<8x32xf32, #tpu.memory_space<vmem>>, %arg10: memref<1x32xf32, #tpu.memory_space<vmem>>, %arg11: memref<8x64xf32, #tpu.memory_space<vmem>>, %arg12: memref<16x64xf32, #tpu.memory_space<vmem>>, %arg13: memref<1x64xf32, #tpu.memory_space<vmem>>, %arg14: memref<16x128xf32, #tpu.memory_space<vmem>>, %arg15: memref<1x128xf32, #tpu.memory_space<vmem>>, %arg16: memref<8x128xf32, #tpu.memory_space<vmem>>, %arg17: memref<56x64xf32, #tpu.memory_space<vmem>>, %arg18: memref<56x32xf32, #tpu.memory_space<vmem>>, %arg19: memref<56x16xf32, #tpu.memory_space<vmem>>) attributes {dimension_semantics = [], scalar_prefetch = 0 : i64, scratch_operands = 3 : i64, tpu.core_type = #tpu.core_type<tc>} {
    %c0 = arith.constant 0 : index
    %c0_0 = arith.constant 0 : index
    %0 = vector.load %arg0[%c0, %c0_0] : memref<8x16xf32, #tpu.memory_space<vmem>>, vector<8x16xf32>
    %1 = vector.extract_strided_slice %0 {offsets = [0, 0], sizes = [8, 4], strides = [1, 1]} : vector<8x16xf32> to vector<8x4xf32>
    %2 = vector.extract_strided_slice %0 {offsets = [0, 2], sizes = [8, 4], strides = [1, 1]} : vector<8x16xf32> to vector<8x4xf32>
    %3 = vector.extract_strided_slice %0 {offsets = [0, 4], sizes = [8, 4], strides = [1, 1]} : vector<8x16xf32> to vector<8x4xf32>
    %4 = vector.extract_strided_slice %0 {offsets = [0, 6], sizes = [8, 4], strides = [1, 1]} : vector<8x16xf32> to vector<8x4xf32>
    %5 = vector.extract_strided_slice %0 {offsets = [0, 8], sizes = [8, 4], strides = [1, 1]} : vector<8x16xf32> to vector<8x4xf32>
    %6 = vector.extract_strided_slice %0 {offsets = [0, 10], sizes = [8, 4], strides = [1, 1]} : vector<8x16xf32> to vector<8x4xf32>
    %7 = vector.extract_strided_slice %0 {offsets = [0, 12], sizes = [8, 4], strides = [1, 1]} : vector<8x16xf32> to vector<8x4xf32>
    %8 = tpu.concatenate %1, %2, %3, %4, %5, %6, %7 in 0 : vector<8x4xf32>, vector<8x4xf32>, vector<8x4xf32>, vector<8x4xf32>, vector<8x4xf32>, vector<8x4xf32>, vector<8x4xf32> -> vector<56x4xf32>
    %c0_1 = arith.constant 0 : index
    %c0_2 = arith.constant 0 : index
    %9 = vector.load %arg2[%c0_1, %c0_2] : memref<4x64xf32, #tpu.memory_space<vmem>>, vector<4x64xf32>
    %cst = arith.constant dense<0.000000e+00> : vector<56x64xf32>
    %10 = tpu.matmul %8, %9, %cst {dimension_numbers = #tpu.dot_dimension_numbers<[1], [0], [0], [1], [0, 0, 1, 1], [], []>} : vector<56x4xf32>, vector<4x64xf32>, vector<56x64xf32> -> vector<56x64xf32>
    %c0_3 = arith.constant 0 : index
    %c0_4 = arith.constant 0 : index
    %11 = vector.load %arg4[%c0_3, %c0_4] : memref<1x64xf32, #tpu.memory_space<vmem>>, vector<1x64xf32>
    %12 = vector.broadcast %11 : vector<1x64xf32> to vector<56x64xf32>
    %13 = arith.addf %10, %12 : vector<56x64xf32>
    %c0_5 = arith.constant 0 : index
    %c0_6 = arith.constant 0 : index
    %14 = vector.load %arg17[%c0_5, %c0_6] : memref<56x64xf32, #tpu.memory_space<vmem>>, vector<56x64xf32>
    tpu.vector_store %arg17[%c0_5, %c0_6], %13 {strides = array<i32>} : memref<56x64xf32, #tpu.memory_space<vmem>>, vector<56x64xf32>,
    %c0_7 = arith.constant 0 : index
    %c0_8 = arith.constant 0 : index
    %15 = vector.load %arg3[%c0_7, %c0_8] : memref<16x64xf32, #tpu.memory_space<vmem>>, vector<16x64xf32>
    %c0_9 = arith.constant 0 : index
    %c0_10 = arith.constant 0 : index
    %16 = vector.load %arg5[%c0_9, %c0_10] : memref<16x32xf32, #tpu.memory_space<vmem>>, vector<16x32xf32>
    %c0_11 = arith.constant 0 : index
    %c0_12 = arith.constant 0 : index
    %17 = vector.load %arg6[%c0_11, %c0_12] : memref<8x32xf32, #tpu.memory_space<vmem>>, vector<8x32xf32>
    %c0_13 = arith.constant 0 : index
    %c0_14 = arith.constant 0 : index
    %18 = vector.load %arg7[%c0_13, %c0_14] : memref<1x32xf32, #tpu.memory_space<vmem>>, vector<1x32xf32>
    %19 = vector.shape_cast %18 : vector<1x32xf32> to vector<1x32xf32>
    %20 = vector.broadcast %19 : vector<1x32xf32> to vector<8x32xf32>
    %c0_15 = arith.constant 0 : index
    %c0_16 = arith.constant 0 : index
    %21 = vector.load %arg9[%c0_15, %c0_16] : memref<8x32xf32, #tpu.memory_space<vmem>>, vector<8x32xf32>
    %c0_17 = arith.constant 0 : index
    %c0_18 = arith.constant 0 : index
    %22 = vector.load %arg11[%c0_17, %c0_18] : memref<8x64xf32, #tpu.memory_space<vmem>>, vector<8x64xf32>
    %c0_19 = arith.constant 0 : index
    %c0_20 = arith.constant 0 : index
    %23 = vector.load %arg12[%c0_19, %c0_20] : memref<16x64xf32, #tpu.memory_space<vmem>>, vector<16x64xf32>
    %c0_21 = arith.constant 0 : index
    %c0_22 = arith.constant 0 : index
    %24 = vector.load %arg13[%c0_21, %c0_22] : memref<1x64xf32, #tpu.memory_space<vmem>>, vector<1x64xf32>
    %25 = vector.shape_cast %24 : vector<1x64xf32> to vector<1x64xf32>
    %26 = vector.broadcast %25 : vector<1x64xf32> to vector<8x64xf32>
    %cst_23 = arith.constant 0.000000e+00 : f32
    %27 = vector.broadcast %cst_23 : f32 to vector<8x16xf32>
    %cst_24 = arith.constant 0.000000e+00 : f32
    %28 = vector.broadcast %cst_24 : f32 to vector<8x16xf32>
    %cst_25 = arith.constant 0.000000e+00 : f32
    %29 = vector.broadcast %cst_25 : f32 to vector<8x8xf32>
    %cst_26 = arith.constant 0.000000e+00 : f32
    %30 = vector.broadcast %cst_26 : f32 to vector<8x8xf32>
    %c0_27 = arith.constant 0 : index
    %c0_28 = arith.constant 0 : index
    %31 = vector.load %arg17[%c0_27, %c0_28] : memref<56x64xf32, #tpu.memory_space<vmem>>, vector<8x64xf32>
    %cst_29 = arith.constant dense<0.000000e+00> : vector<8x64xf32>
    %32 = tpu.matmul %27, %15, %cst_29 {dimension_numbers = #tpu.dot_dimension_numbers<[1], [0], [0], [1], [0, 0, 1, 1], [], []>} : vector<8x16xf32>, vector<16x64xf32>, vector<8x64xf32> -> vector<8x64xf32>
    %33 = arith.addf %31, %32 : vector<8x64xf32>
    %34 = arith.negf %33 : vector<8x64xf32>
    %35 = math.exp %34 : vector<8x64xf32>
    %cst_30 = arith.constant 1.000000e+00 : f32
    %36 = vector.broadcast %cst_30 : f32 to vector<8x64xf32>
    %37 = arith.addf %36, %35 : vector<8x64xf32>
    %38 = arith.divf %36, %37 : vector<8x64xf32>
    %39 = math.tanh %33 : vector<8x64xf32>
    %40 = vector.extract_strided_slice %38 {offsets = [0, 0], sizes = [8, 16], strides = [1, 1]} : vector<8x64xf32> to vector<8x16xf32>
    %41 = vector.extract_strided_slice %38 {offsets = [0, 16], sizes = [8, 16], strides = [1, 1]} : vector<8x64xf32> to vector<8x16xf32>
    %42 = vector.extract_strided_slice %39 {offsets = [0, 32], sizes = [8, 16], strides = [1, 1]} : vector<8x64xf32> to vector<8x16xf32>
    %43 = vector.extract_strided_slice %38 {offsets = [0, 48], sizes = [8, 16], strides = [1, 1]} : vector<8x64xf32> to vector<8x16xf32>
    %44 = arith.mulf %41, %28 : vector<8x16xf32>
    %45 = arith.mulf %40, %42 : vector<8x16xf32>
    %46 = arith.addf %44, %45 : vector<8x16xf32>
    %47 = math.tanh %46 : vector<8x16xf32>
    %48 = arith.mulf %43, %47 : vector<8x16xf32>
    %cst_31 = arith.constant dense<0.000000e+00> : vector<8x32xf32>
    %49 = tpu.matmul %48, %16, %cst_31 {dimension_numbers = #tpu.dot_dimension_numbers<[1], [0], [0], [1], [0, 0, 1, 1], [], []>} : vector<8x16xf32>, vector<16x32xf32>, vector<8x32xf32> -> vector<8x32xf32>
    %cst_32 = arith.constant dense<0.000000e+00> : vector<8x32xf32>
    %50 = tpu.matmul %29, %17, %cst_32 {dimension_numbers = #tpu.dot_dimension_numbers<[1], [0], [0], [1], [0, 0, 1, 1], [], []>} : vector<8x8xf32>, vector<8x32xf32>, vector<8x32xf32> -> vector<8x32xf32>
    %51 = arith.addf %49, %50 : vector<8x32xf32>
    %52 = arith.addf %51, %20 : vector<8x32xf32>
    %53 = arith.negf %52 : vector<8x32xf32>
    %54 = math.exp %53 : vector<8x32xf32>
    %cst_33 = arith.constant 1.000000e+00 : f32
    %55 = vector.broadcast %cst_33 : f32 to vector<8x32xf32>
    %56 = arith.addf %55, %54 : vector<8x32xf32>
    %57 = arith.divf %55, %56 : vector<8x32xf32>
    %58 = math.tanh %52 : vector<8x32xf32>
    %59 = vector.extract_strided_slice %57 {offsets = [0, 0], sizes = [8, 8], strides = [1, 1]} : vector<8x32xf32> to vector<8x8xf32>
    %60 = vector.extract_strided_slice %57 {offsets = [0, 8], sizes = [8, 8], strides = [1, 1]} : vector<8x32xf32> to vector<8x8xf32>
    %61 = vector.extract_strided_slice %58 {offsets = [0, 16], sizes = [8, 8], strides = [1, 1]} : vector<8x32xf32> to vector<8x8xf32>
    %62 = vector.extract_strided_slice %57 {offsets = [0, 24], sizes = [8, 8], strides = [1, 1]} : vector<8x32xf32> to vector<8x8xf32>
    %63 = arith.mulf %60, %30 : vector<8x8xf32>
    %64 = arith.mulf %59, %61 : vector<8x8xf32>
    %65 = arith.addf %63, %64 : vector<8x8xf32>
    %66 = math.tanh %65 : vector<8x8xf32>
    %67 = arith.mulf %62, %66 : vector<8x8xf32>
    %c8 = arith.constant 8 : index
    %c0_34 = arith.constant 0 : index
    %68 = vector.load %arg17[%c8, %c0_34] : memref<56x64xf32, #tpu.memory_space<vmem>>, vector<8x64xf32>
    %cst_35 = arith.constant dense<0.000000e+00> : vector<8x64xf32>
    %69 = tpu.matmul %48, %15, %cst_35 {dimension_numbers = #tpu.dot_dimension_numbers<[1], [0], [0], [1], [0, 0, 1, 1], [], []>} : vector<8x16xf32>, vector<16x64xf32>, vector<8x64xf32> -> vector<8x64xf32>
    %70 = arith.addf %68, %69 : vector<8x64xf32>
    %71 = arith.negf %70 : vector<8x64xf32>
    %72 = math.exp %71 : vector<8x64xf32>
    %cst_36 = arith.constant 1.000000e+00 : f32
    %73 = vector.broadcast %cst_36 : f32 to vector<8x64xf32>
    %74 = arith.addf %73, %72 : vector<8x64xf32>
    %75 = arith.divf %73, %74 : vector<8x64xf32>
    %76 = math.tanh %70 : vector<8x64xf32>
    %77 = vector.extract_strided_slice %75 {offsets = [0, 0], sizes = [8, 16], strides = [1, 1]} : vector<8x64xf32> to vector<8x16xf32>
    %78 = vector.extract_strided_slice %75 {offsets = [0, 16], sizes = [8, 16], strides = [1, 1]} : vector<8x64xf32> to vector<8x16xf32>
    %79 = vector.extract_strided_slice %76 {offsets = [0, 32], sizes = [8, 16], strides = [1, 1]} : vector<8x64xf32> to vector<8x16xf32>
    %80 = vector.extract_strided_slice %75 {offsets = [0, 48], sizes = [8, 16], strides = [1, 1]} : vector<8x64xf32> to vector<8x16xf32>
    %81 = arith.mulf %78, %46 : vector<8x16xf32>
    %82 = arith.mulf %77, %79 : vector<8x16xf32>
    %83 = arith.addf %81, %82 : vector<8x16xf32>
    %84 = math.tanh %83 : vector<8x16xf32>
    %85 = arith.mulf %80, %84 : vector<8x16xf32>
    %cst_37 = arith.constant dense<0.000000e+00> : vector<8x32xf32>
    %86 = tpu.matmul %85, %16, %cst_37 {dimension_numbers = #tpu.dot_dimension_numbers<[1], [0], [0], [1], [0, 0, 1, 1], [], []>} : vector<8x16xf32>, vector<16x32xf32>, vector<8x32xf32> -> vector<8x32xf32>
    %cst_38 = arith.constant dense<0.000000e+00> : vector<8x32xf32>
    %87 = tpu.matmul %67, %17, %cst_38 {dimension_numbers = #tpu.dot_dimension_numbers<[1], [0], [0], [1], [0, 0, 1, 1], [], []>} : vector<8x8xf32>, vector<8x32xf32>, vector<8x32xf32> -> vector<8x32xf32>
    %88 = arith.addf %86, %87 : vector<8x32xf32>
    %89 = arith.addf %88, %20 : vector<8x32xf32>
    %90 = arith.negf %89 : vector<8x32xf32>
    %91 = math.exp %90 : vector<8x32xf32>
    %cst_39 = arith.constant 1.000000e+00 : f32
    %92 = vector.broadcast %cst_39 : f32 to vector<8x32xf32>
    %93 = arith.addf %92, %91 : vector<8x32xf32>
    %94 = arith.divf %92, %93 : vector<8x32xf32>
    %95 = math.tanh %89 : vector<8x32xf32>
    %96 = vector.extract_strided_slice %94 {offsets = [0, 0], sizes = [8, 8], strides = [1, 1]} : vector<8x32xf32> to vector<8x8xf32>
    %97 = vector.extract_strided_slice %94 {offsets = [0, 8], sizes = [8, 8], strides = [1, 1]} : vector<8x32xf32> to vector<8x8xf32>
    %98 = vector.extract_strided_slice %95 {offsets = [0, 16], sizes = [8, 8], strides = [1, 1]} : vector<8x32xf32> to vector<8x8xf32>
    %99 = vector.extract_strided_slice %94 {offsets = [0, 24], sizes = [8, 8], strides = [1, 1]} : vector<8x32xf32> to vector<8x8xf32>
    %100 = arith.mulf %97, %65 : vector<8x8xf32>
    %101 = arith.mulf %96, %98 : vector<8x8xf32>
    %102 = arith.addf %100, %101 : vector<8x8xf32>
    %103 = math.tanh %102 : vector<8x8xf32>
    %104 = arith.mulf %99, %103 : vector<8x8xf32>
    %c16 = arith.constant 16 : index
    %c0_40 = arith.constant 0 : index
    %105 = vector.load %arg17[%c16, %c0_40] : memref<56x64xf32, #tpu.memory_space<vmem>>, vector<8x64xf32>
    %cst_41 = arith.constant dense<0.000000e+00> : vector<8x64xf32>
    %106 = tpu.matmul %85, %15, %cst_41 {dimension_numbers = #tpu.dot_dimension_numbers<[1], [0], [0], [1], [0, 0, 1, 1], [], []>} : vector<8x16xf32>, vector<16x64xf32>, vector<8x64xf32> -> vector<8x64xf32>
    %107 = arith.addf %105, %106 : vector<8x64xf32>
    %108 = arith.negf %107 : vector<8x64xf32>
    %109 = math.exp %108 : vector<8x64xf32>
    %cst_42 = arith.constant 1.000000e+00 : f32
    %110 = vector.broadcast %cst_42 : f32 to vector<8x64xf32>
    %111 = arith.addf %110, %109 : vector<8x64xf32>
    %112 = arith.divf %110, %111 : vector<8x64xf32>
    %113 = math.tanh %107 : vector<8x64xf32>
    %114 = vector.extract_strided_slice %112 {offsets = [0, 0], sizes = [8, 16], strides = [1, 1]} : vector<8x64xf32> to vector<8x16xf32>
    %115 = vector.extract_strided_slice %112 {offsets = [0, 16], sizes = [8, 16], strides = [1, 1]} : vector<8x64xf32> to vector<8x16xf32>
    %116 = vector.extract_strided_slice %113 {offsets = [0, 32], sizes = [8, 16], strides = [1, 1]} : vector<8x64xf32> to vector<8x16xf32>
    %117 = vector.extract_strided_slice %112 {offsets = [0, 48], sizes = [8, 16], strides = [1, 1]} : vector<8x64xf32> to vector<8x16xf32>
    %118 = arith.mulf %115, %83 : vector<8x16xf32>
    %119 = arith.mulf %114, %116 : vector<8x16xf32>
    %120 = arith.addf %118, %119 : vector<8x16xf32>
    %121 = math.tanh %120 : vector<8x16xf32>
    %122 = arith.mulf %117, %121 : vector<8x16xf32>
    %cst_43 = arith.constant dense<0.000000e+00> : vector<8x32xf32>
    %123 = tpu.matmul %122, %16, %cst_43 {dimension_numbers = #tpu.dot_dimension_numbers<[1], [0], [0], [1], [0, 0, 1, 1], [], []>} : vector<8x16xf32>, vector<16x32xf32>, vector<8x32xf32> -> vector<8x32xf32>
    %cst_44 = arith.constant dense<0.000000e+00> : vector<8x32xf32>
    %124 = tpu.matmul %104, %17, %cst_44 {dimension_numbers = #tpu.dot_dimension_numbers<[1], [0], [0], [1], [0, 0, 1, 1], [], []>} : vector<8x8xf32>, vector<8x32xf32>, vector<8x32xf32> -> vector<8x32xf32>
    %125 = arith.addf %123, %124 : vector<8x32xf32>
    %126 = arith.addf %125, %20 : vector<8x32xf32>
    %127 = arith.negf %126 : vector<8x32xf32>
    %128 = math.exp %127 : vector<8x32xf32>
    %cst_45 = arith.constant 1.000000e+00 : f32
    %129 = vector.broadcast %cst_45 : f32 to vector<8x32xf32>
    %130 = arith.addf %129, %128 : vector<8x32xf32>
    %131 = arith.divf %129, %130 : vector<8x32xf32>
    %132 = math.tanh %126 : vector<8x32xf32>
    %133 = vector.extract_strided_slice %131 {offsets = [0, 0], sizes = [8, 8], strides = [1, 1]} : vector<8x32xf32> to vector<8x8xf32>
    %134 = vector.extract_strided_slice %131 {offsets = [0, 8], sizes = [8, 8], strides = [1, 1]} : vector<8x32xf32> to vector<8x8xf32>
    %135 = vector.extract_strided_slice %132 {offsets = [0, 16], sizes = [8, 8], strides = [1, 1]} : vector<8x32xf32> to vector<8x8xf32>
    %136 = vector.extract_strided_slice %131 {offsets = [0, 24], sizes = [8, 8], strides = [1, 1]} : vector<8x32xf32> to vector<8x8xf32>
    %137 = arith.mulf %134, %102 : vector<8x8xf32>
    %138 = arith.mulf %133, %135 : vector<8x8xf32>
    %139 = arith.addf %137, %138 : vector<8x8xf32>
    %140 = math.tanh %139 : vector<8x8xf32>
    %141 = arith.mulf %136, %140 : vector<8x8xf32>
    %c24 = arith.constant 24 : index
    %c0_46 = arith.constant 0 : index
    %142 = vector.load %arg17[%c24, %c0_46] : memref<56x64xf32, #tpu.memory_space<vmem>>, vector<8x64xf32>
    %cst_47 = arith.constant dense<0.000000e+00> : vector<8x64xf32>
    %143 = tpu.matmul %122, %15, %cst_47 {dimension_numbers = #tpu.dot_dimension_numbers<[1], [0], [0], [1], [0, 0, 1, 1], [], []>} : vector<8x16xf32>, vector<16x64xf32>, vector<8x64xf32> -> vector<8x64xf32>
    %144 = arith.addf %142, %143 : vector<8x64xf32>
    %145 = arith.negf %144 : vector<8x64xf32>
    %146 = math.exp %145 : vector<8x64xf32>
    %cst_48 = arith.constant 1.000000e+00 : f32
    %147 = vector.broadcast %cst_48 : f32 to vector<8x64xf32>
    %148 = arith.addf %147, %146 : vector<8x64xf32>
    %149 = arith.divf %147, %148 : vector<8x64xf32>
    %150 = math.tanh %144 : vector<8x64xf32>
    %151 = vector.extract_strided_slice %149 {offsets = [0, 0], sizes = [8, 16], strides = [1, 1]} : vector<8x64xf32> to vector<8x16xf32>
    %152 = vector.extract_strided_slice %149 {offsets = [0, 16], sizes = [8, 16], strides = [1, 1]} : vector<8x64xf32> to vector<8x16xf32>
    %153 = vector.extract_strided_slice %150 {offsets = [0, 32], sizes = [8, 16], strides = [1, 1]} : vector<8x64xf32> to vector<8x16xf32>
    %154 = vector.extract_strided_slice %149 {offsets = [0, 48], sizes = [8, 16], strides = [1, 1]} : vector<8x64xf32> to vector<8x16xf32>
    %155 = arith.mulf %152, %120 : vector<8x16xf32>
    %156 = arith.mulf %151, %153 : vector<8x16xf32>
    %157 = arith.addf %155, %156 : vector<8x16xf32>
    %158 = math.tanh %157 : vector<8x16xf32>
    %159 = arith.mulf %154, %158 : vector<8x16xf32>
    %cst_49 = arith.constant dense<0.000000e+00> : vector<8x32xf32>
    %160 = tpu.matmul %159, %16, %cst_49 {dimension_numbers = #tpu.dot_dimension_numbers<[1], [0], [0], [1], [0, 0, 1, 1], [], []>} : vector<8x16xf32>, vector<16x32xf32>, vector<8x32xf32> -> vector<8x32xf32>
    %cst_50 = arith.constant dense<0.000000e+00> : vector<8x32xf32>
    %161 = tpu.matmul %141, %17, %cst_50 {dimension_numbers = #tpu.dot_dimension_numbers<[1], [0], [0], [1], [0, 0, 1, 1], [], []>} : vector<8x8xf32>, vector<8x32xf32>, vector<8x32xf32> -> vector<8x32xf32>
    %162 = arith.addf %160, %161 : vector<8x32xf32>
    %163 = arith.addf %162, %20 : vector<8x32xf32>
    %164 = arith.negf %163 : vector<8x32xf32>
    %165 = math.exp %164 : vector<8x32xf32>
    %cst_51 = arith.constant 1.000000e+00 : f32
    %166 = vector.broadcast %cst_51 : f32 to vector<8x32xf32>
    %167 = arith.addf %166, %165 : vector<8x32xf32>
    %168 = arith.divf %166, %167 : vector<8x32xf32>
    %169 = math.tanh %163 : vector<8x32xf32>
    %170 = vector.extract_strided_slice %168 {offsets = [0, 0], sizes = [8, 8], strides = [1, 1]} : vector<8x32xf32> to vector<8x8xf32>
    %171 = vector.extract_strided_slice %168 {offsets = [0, 8], sizes = [8, 8], strides = [1, 1]} : vector<8x32xf32> to vector<8x8xf32>
    %172 = vector.extract_strided_slice %169 {offsets = [0, 16], sizes = [8, 8], strides = [1, 1]} : vector<8x32xf32> to vector<8x8xf32>
    %173 = vector.extract_strided_slice %168 {offsets = [0, 24], sizes = [8, 8], strides = [1, 1]} : vector<8x32xf32> to vector<8x8xf32>
    %174 = arith.mulf %171, %139 : vector<8x8xf32>
    %175 = arith.mulf %170, %172 : vector<8x8xf32>
    %176 = arith.addf %174, %175 : vector<8x8xf32>
    %177 = math.tanh %176 : vector<8x8xf32>
    %178 = arith.mulf %173, %177 : vector<8x8xf32>
    %c32 = arith.constant 32 : index
    %c0_52 = arith.constant 0 : index
    %179 = vector.load %arg17[%c32, %c0_52] : memref<56x64xf32, #tpu.memory_space<vmem>>, vector<8x64xf32>
    %cst_53 = arith.constant dense<0.000000e+00> : vector<8x64xf32>
    %180 = tpu.matmul %159, %15, %cst_53 {dimension_numbers = #tpu.dot_dimension_numbers<[1], [0], [0], [1], [0, 0, 1, 1], [], []>} : vector<8x16xf32>, vector<16x64xf32>, vector<8x64xf32> -> vector<8x64xf32>
    %181 = arith.addf %179, %180 : vector<8x64xf32>
    %182 = arith.negf %181 : vector<8x64xf32>
    %183 = math.exp %182 : vector<8x64xf32>
    %cst_54 = arith.constant 1.000000e+00 : f32
    %184 = vector.broadcast %cst_54 : f32 to vector<8x64xf32>
    %185 = arith.addf %184, %183 : vector<8x64xf32>
    %186 = arith.divf %184, %185 : vector<8x64xf32>
    %187 = math.tanh %181 : vector<8x64xf32>
    %188 = vector.extract_strided_slice %186 {offsets = [0, 0], sizes = [8, 16], strides = [1, 1]} : vector<8x64xf32> to vector<8x16xf32>
    %189 = vector.extract_strided_slice %186 {offsets = [0, 16], sizes = [8, 16], strides = [1, 1]} : vector<8x64xf32> to vector<8x16xf32>
    %190 = vector.extract_strided_slice %187 {offsets = [0, 32], sizes = [8, 16], strides = [1, 1]} : vector<8x64xf32> to vector<8x16xf32>
    %191 = vector.extract_strided_slice %186 {offsets = [0, 48], sizes = [8, 16], strides = [1, 1]} : vector<8x64xf32> to vector<8x16xf32>
    %192 = arith.mulf %189, %157 : vector<8x16xf32>
    %193 = arith.mulf %188, %190 : vector<8x16xf32>
    %194 = arith.addf %192, %193 : vector<8x16xf32>
    %195 = math.tanh %194 : vector<8x16xf32>
    %196 = arith.mulf %191, %195 : vector<8x16xf32>
    %cst_55 = arith.constant dense<0.000000e+00> : vector<8x32xf32>
    %197 = tpu.matmul %196, %16, %cst_55 {dimension_numbers = #tpu.dot_dimension_numbers<[1], [0], [0], [1], [0, 0, 1, 1], [], []>} : vector<8x16xf32>, vector<16x32xf32>, vector<8x32xf32> -> vector<8x32xf32>
    %cst_56 = arith.constant dense<0.000000e+00> : vector<8x32xf32>
    %198 = tpu.matmul %178, %17, %cst_56 {dimension_numbers = #tpu.dot_dimension_numbers<[1], [0], [0], [1], [0, 0, 1, 1], [], []>} : vector<8x8xf32>, vector<8x32xf32>, vector<8x32xf32> -> vector<8x32xf32>
    %199 = arith.addf %197, %198 : vector<8x32xf32>
    %200 = arith.addf %199, %20 : vector<8x32xf32>
    %201 = arith.negf %200 : vector<8x32xf32>
    %202 = math.exp %201 : vector<8x32xf32>
    %cst_57 = arith.constant 1.000000e+00 : f32
    %203 = vector.broadcast %cst_57 : f32 to vector<8x32xf32>
    %204 = arith.addf %203, %202 : vector<8x32xf32>
    %205 = arith.divf %203, %204 : vector<8x32xf32>
    %206 = math.tanh %200 : vector<8x32xf32>
    %207 = vector.extract_strided_slice %205 {offsets = [0, 0], sizes = [8, 8], strides = [1, 1]} : vector<8x32xf32> to vector<8x8xf32>
    %208 = vector.extract_strided_slice %205 {offsets = [0, 8], sizes = [8, 8], strides = [1, 1]} : vector<8x32xf32> to vector<8x8xf32>
    %209 = vector.extract_strided_slice %206 {offsets = [0, 16], sizes = [8, 8], strides = [1, 1]} : vector<8x32xf32> to vector<8x8xf32>
    %210 = vector.extract_strided_slice %205 {offsets = [0, 24], sizes = [8, 8], strides = [1, 1]} : vector<8x32xf32> to vector<8x8xf32>
    %211 = arith.mulf %208, %176 : vector<8x8xf32>
    %212 = arith.mulf %207, %209 : vector<8x8xf32>
    %213 = arith.addf %211, %212 : vector<8x8xf32>
    %214 = math.tanh %213 : vector<8x8xf32>
    %215 = arith.mulf %210, %214 : vector<8x8xf32>
    %c40 = arith.constant 40 : index
    %c0_58 = arith.constant 0 : index
    %216 = vector.load %arg17[%c40, %c0_58] : memref<56x64xf32, #tpu.memory_space<vmem>>, vector<8x64xf32>
    %cst_59 = arith.constant dense<0.000000e+00> : vector<8x64xf32>
    %217 = tpu.matmul %196, %15, %cst_59 {dimension_numbers = #tpu.dot_dimension_numbers<[1], [0], [0], [1], [0, 0, 1, 1], [], []>} : vector<8x16xf32>, vector<16x64xf32>, vector<8x64xf32> -> vector<8x64xf32>
    %218 = arith.addf %216, %217 : vector<8x64xf32>
    %219 = arith.negf %218 : vector<8x64xf32>
    %220 = math.exp %219 : vector<8x64xf32>
    %cst_60 = arith.constant 1.000000e+00 : f32
    %221 = vector.broadcast %cst_60 : f32 to vector<8x64xf32>
    %222 = arith.addf %221, %220 : vector<8x64xf32>
    %223 = arith.divf %221, %222 : vector<8x64xf32>
    %224 = math.tanh %218 : vector<8x64xf32>
    %225 = vector.extract_strided_slice %223 {offsets = [0, 0], sizes = [8, 16], strides = [1, 1]} : vector<8x64xf32> to vector<8x16xf32>
    %226 = vector.extract_strided_slice %223 {offsets = [0, 16], sizes = [8, 16], strides = [1, 1]} : vector<8x64xf32> to vector<8x16xf32>
    %227 = vector.extract_strided_slice %224 {offsets = [0, 32], sizes = [8, 16], strides = [1, 1]} : vector<8x64xf32> to vector<8x16xf32>
    %228 = vector.extract_strided_slice %223 {offsets = [0, 48], sizes = [8, 16], strides = [1, 1]} : vector<8x64xf32> to vector<8x16xf32>
    %229 = arith.mulf %226, %194 : vector<8x16xf32>
    %230 = arith.mulf %225, %227 : vector<8x16xf32>
    %231 = arith.addf %229, %230 : vector<8x16xf32>
    %232 = math.tanh %231 : vector<8x16xf32>
    %233 = arith.mulf %228, %232 : vector<8x16xf32>
    %cst_61 = arith.constant dense<0.000000e+00> : vector<8x32xf32>
    %234 = tpu.matmul %233, %16, %cst_61 {dimension_numbers = #tpu.dot_dimension_numbers<[1], [0], [0], [1], [0, 0, 1, 1], [], []>} : vector<8x16xf32>, vector<16x32xf32>, vector<8x32xf32> -> vector<8x32xf32>
    %cst_62 = arith.constant dense<0.000000e+00> : vector<8x32xf32>
    %235 = tpu.matmul %215, %17, %cst_62 {dimension_numbers = #tpu.dot_dimension_numbers<[1], [0], [0], [1], [0, 0, 1, 1], [], []>} : vector<8x8xf32>, vector<8x32xf32>, vector<8x32xf32> -> vector<8x32xf32>
    %236 = arith.addf %234, %235 : vector<8x32xf32>
    %237 = arith.addf %236, %20 : vector<8x32xf32>
    %238 = arith.negf %237 : vector<8x32xf32>
    %239 = math.exp %238 : vector<8x32xf32>
    %cst_63 = arith.constant 1.000000e+00 : f32
    %240 = vector.broadcast %cst_63 : f32 to vector<8x32xf32>
    %241 = arith.addf %240, %239 : vector<8x32xf32>
    %242 = arith.divf %240, %241 : vector<8x32xf32>
    %243 = math.tanh %237 : vector<8x32xf32>
    %244 = vector.extract_strided_slice %242 {offsets = [0, 0], sizes = [8, 8], strides = [1, 1]} : vector<8x32xf32> to vector<8x8xf32>
    %245 = vector.extract_strided_slice %242 {offsets = [0, 8], sizes = [8, 8], strides = [1, 1]} : vector<8x32xf32> to vector<8x8xf32>
    %246 = vector.extract_strided_slice %243 {offsets = [0, 16], sizes = [8, 8], strides = [1, 1]} : vector<8x32xf32> to vector<8x8xf32>
    %247 = vector.extract_strided_slice %242 {offsets = [0, 24], sizes = [8, 8], strides = [1, 1]} : vector<8x32xf32> to vector<8x8xf32>
    %248 = arith.mulf %245, %213 : vector<8x8xf32>
    %249 = arith.mulf %244, %246 : vector<8x8xf32>
    %250 = arith.addf %248, %249 : vector<8x8xf32>
    %251 = math.tanh %250 : vector<8x8xf32>
    %252 = arith.mulf %247, %251 : vector<8x8xf32>
    %c48 = arith.constant 48 : index
    %c0_64 = arith.constant 0 : index
    %253 = vector.load %arg17[%c48, %c0_64] : memref<56x64xf32, #tpu.memory_space<vmem>>, vector<8x64xf32>
    %cst_65 = arith.constant dense<0.000000e+00> : vector<8x64xf32>
    %254 = tpu.matmul %233, %15, %cst_65 {dimension_numbers = #tpu.dot_dimension_numbers<[1], [0], [0], [1], [0, 0, 1, 1], [], []>} : vector<8x16xf32>, vector<16x64xf32>, vector<8x64xf32> -> vector<8x64xf32>
    %255 = arith.addf %253, %254 : vector<8x64xf32>
    %256 = arith.negf %255 : vector<8x64xf32>
    %257 = math.exp %256 : vector<8x64xf32>
    %cst_66 = arith.constant 1.000000e+00 : f32
    %258 = vector.broadcast %cst_66 : f32 to vector<8x64xf32>
    %259 = arith.addf %258, %257 : vector<8x64xf32>
    %260 = arith.divf %258, %259 : vector<8x64xf32>
    %261 = math.tanh %255 : vector<8x64xf32>
    %262 = vector.extract_strided_slice %260 {offsets = [0, 0], sizes = [8, 16], strides = [1, 1]} : vector<8x64xf32> to vector<8x16xf32>
    %263 = vector.extract_strided_slice %260 {offsets = [0, 16], sizes = [8, 16], strides = [1, 1]} : vector<8x64xf32> to vector<8x16xf32>
    %264 = vector.extract_strided_slice %261 {offsets = [0, 32], sizes = [8, 16], strides = [1, 1]} : vector<8x64xf32> to vector<8x16xf32>
    %265 = vector.extract_strided_slice %260 {offsets = [0, 48], sizes = [8, 16], strides = [1, 1]} : vector<8x64xf32> to vector<8x16xf32>
    %266 = arith.mulf %263, %231 : vector<8x16xf32>
    %267 = arith.mulf %262, %264 : vector<8x16xf32>
    %268 = arith.addf %266, %267 : vector<8x16xf32>
    %269 = math.tanh %268 : vector<8x16xf32>
    %270 = arith.mulf %265, %269 : vector<8x16xf32>
    %cst_67 = arith.constant dense<0.000000e+00> : vector<8x32xf32>
    %271 = tpu.matmul %270, %16, %cst_67 {dimension_numbers = #tpu.dot_dimension_numbers<[1], [0], [0], [1], [0, 0, 1, 1], [], []>} : vector<8x16xf32>, vector<16x32xf32>, vector<8x32xf32> -> vector<8x32xf32>
    %cst_68 = arith.constant dense<0.000000e+00> : vector<8x32xf32>
    %272 = tpu.matmul %252, %17, %cst_68 {dimension_numbers = #tpu.dot_dimension_numbers<[1], [0], [0], [1], [0, 0, 1, 1], [], []>} : vector<8x8xf32>, vector<8x32xf32>, vector<8x32xf32> -> vector<8x32xf32>
    %273 = arith.addf %271, %272 : vector<8x32xf32>
    %274 = arith.addf %273, %20 : vector<8x32xf32>
    %275 = arith.negf %274 : vector<8x32xf32>
    %276 = math.exp %275 : vector<8x32xf32>
    %cst_69 = arith.constant 1.000000e+00 : f32
    %277 = vector.broadcast %cst_69 : f32 to vector<8x32xf32>
    %278 = arith.addf %277, %276 : vector<8x32xf32>
    %279 = arith.divf %277, %278 : vector<8x32xf32>
    %280 = math.tanh %274 : vector<8x32xf32>
    %281 = vector.extract_strided_slice %279 {offsets = [0, 0], sizes = [8, 8], strides = [1, 1]} : vector<8x32xf32> to vector<8x8xf32>
    %282 = vector.extract_strided_slice %279 {offsets = [0, 8], sizes = [8, 8], strides = [1, 1]} : vector<8x32xf32> to vector<8x8xf32>
    %283 = vector.extract_strided_slice %280 {offsets = [0, 16], sizes = [8, 8], strides = [1, 1]} : vector<8x32xf32> to vector<8x8xf32>
    %284 = vector.extract_strided_slice %279 {offsets = [0, 24], sizes = [8, 8], strides = [1, 1]} : vector<8x32xf32> to vector<8x8xf32>
    %285 = arith.mulf %282, %250 : vector<8x8xf32>
    %286 = arith.mulf %281, %283 : vector<8x8xf32>
    %287 = arith.addf %285, %286 : vector<8x8xf32>
    %288 = math.tanh %287 : vector<8x8xf32>
    %289 = arith.mulf %284, %288 : vector<8x8xf32>
    %c0_70 = arith.constant 0 : index
    %c0_71 = arith.constant 0 : index
    %290 = vector.load %arg8[%c0_70, %c0_71] : memref<8x32xf32, #tpu.memory_space<vmem>>, vector<8x32xf32>
    %cst_72 = arith.constant dense<0.000000e+00> : vector<8x32xf32>
    %291 = tpu.matmul %289, %290, %cst_72 {dimension_numbers = #tpu.dot_dimension_numbers<[1], [0], [0], [1], [0, 0, 1, 1], [], []>} : vector<8x8xf32>, vector<8x32xf32>, vector<8x32xf32> -> vector<8x32xf32>
    %c0_73 = arith.constant 0 : index
    %c0_74 = arith.constant 0 : index
    %292 = vector.load %arg10[%c0_73, %c0_74] : memref<1x32xf32, #tpu.memory_space<vmem>>, vector<1x32xf32>
    %293 = vector.broadcast %292 : vector<1x32xf32> to vector<8x32xf32>
    %294 = arith.addf %291, %293 : vector<8x32xf32>
    %c0_75 = arith.constant 0 : index
    %c0_76 = arith.constant 0 : index
    %295 = vector.load %arg1[%c0_75, %c0_76] : memref<56x8xf32, #tpu.memory_space<vmem>>, vector<56x8xf32>
    %cst_77 = arith.constant dense<0.000000e+00> : vector<56x32xf32>
    %296 = tpu.matmul %295, %294, %cst_77 {dimension_numbers = #tpu.dot_dimension_numbers<[1], [0], [0], [1], [0, 0, 1, 1], [], []>} : vector<56x8xf32>, vector<8x32xf32>, vector<56x32xf32> -> vector<56x32xf32>
    %c0_78 = arith.constant 0 : index
    %c0_79 = arith.constant 0 : index
    %297 = vector.load %arg18[%c0_78, %c0_79] : memref<56x32xf32, #tpu.memory_space<vmem>>, vector<56x32xf32>
    tpu.vector_store %arg18[%c0_78, %c0_79], %296 {strides = array<i32>} : memref<56x32xf32, #tpu.memory_space<vmem>>, vector<56x32xf32>,
    %cst_80 = arith.constant 0.000000e+00 : f32
    %298 = vector.broadcast %cst_80 : f32 to vector<8x8xf32>
    %cst_81 = arith.constant 0.000000e+00 : f32
    %299 = vector.broadcast %cst_81 : f32 to vector<8x8xf32>
    %cst_82 = arith.constant 0.000000e+00 : f32
    %300 = vector.broadcast %cst_82 : f32 to vector<8x16xf32>
    %cst_83 = arith.constant 0.000000e+00 : f32
    %301 = vector.broadcast %cst_83 : f32 to vector<8x16xf32>
    %c0_84 = arith.constant 0 : index
    %c0_85 = arith.constant 0 : index
    %302 = vector.load %arg18[%c0_84, %c0_85] : memref<56x32xf32, #tpu.memory_space<vmem>>, vector<8x32xf32>
    %cst_86 = arith.constant dense<0.000000e+00> : vector<8x32xf32>
    %303 = tpu.matmul %298, %21, %cst_86 {dimension_numbers = #tpu.dot_dimension_numbers<[1], [0], [0], [1], [0, 0, 1, 1], [], []>} : vector<8x8xf32>, vector<8x32xf32>, vector<8x32xf32> -> vector<8x32xf32>
    %304 = arith.addf %302, %303 : vector<8x32xf32>
    %305 = arith.negf %304 : vector<8x32xf32>
    %306 = math.exp %305 : vector<8x32xf32>
    %cst_87 = arith.constant 1.000000e+00 : f32
    %307 = vector.broadcast %cst_87 : f32 to vector<8x32xf32>
    %308 = arith.addf %307, %306 : vector<8x32xf32>
    %309 = arith.divf %307, %308 : vector<8x32xf32>
    %310 = math.tanh %304 : vector<8x32xf32>
    %311 = vector.extract_strided_slice %309 {offsets = [0, 0], sizes = [8, 8], strides = [1, 1]} : vector<8x32xf32> to vector<8x8xf32>
    %312 = vector.extract_strided_slice %309 {offsets = [0, 8], sizes = [8, 8], strides = [1, 1]} : vector<8x32xf32> to vector<8x8xf32>
    %313 = vector.extract_strided_slice %310 {offsets = [0, 16], sizes = [8, 8], strides = [1, 1]} : vector<8x32xf32> to vector<8x8xf32>
    %314 = vector.extract_strided_slice %309 {offsets = [0, 24], sizes = [8, 8], strides = [1, 1]} : vector<8x32xf32> to vector<8x8xf32>
    %315 = arith.mulf %312, %299 : vector<8x8xf32>
    %316 = arith.mulf %311, %313 : vector<8x8xf32>
    %317 = arith.addf %315, %316 : vector<8x8xf32>
    %318 = math.tanh %317 : vector<8x8xf32>
    %319 = arith.mulf %314, %318 : vector<8x8xf32>
    %cst_88 = arith.constant dense<0.000000e+00> : vector<8x64xf32>
    %320 = tpu.matmul %319, %22, %cst_88 {dimension_numbers = #tpu.dot_dimension_numbers<[1], [0], [0], [1], [0, 0, 1, 1], [], []>} : vector<8x8xf32>, vector<8x64xf32>, vector<8x64xf32> -> vector<8x64xf32>
    %cst_89 = arith.constant dense<0.000000e+00> : vector<8x64xf32>
    %321 = tpu.matmul %300, %23, %cst_89 {dimension_numbers = #tpu.dot_dimension_numbers<[1], [0], [0], [1], [0, 0, 1, 1], [], []>} : vector<8x16xf32>, vector<16x64xf32>, vector<8x64xf32> -> vector<8x64xf32>
    %322 = arith.addf %320, %321 : vector<8x64xf32>
    %323 = arith.addf %322, %26 : vector<8x64xf32>
    %324 = arith.negf %323 : vector<8x64xf32>
    %325 = math.exp %324 : vector<8x64xf32>
    %cst_90 = arith.constant 1.000000e+00 : f32
    %326 = vector.broadcast %cst_90 : f32 to vector<8x64xf32>
    %327 = arith.addf %326, %325 : vector<8x64xf32>
    %328 = arith.divf %326, %327 : vector<8x64xf32>
    %329 = math.tanh %323 : vector<8x64xf32>
    %330 = vector.extract_strided_slice %328 {offsets = [0, 0], sizes = [8, 16], strides = [1, 1]} : vector<8x64xf32> to vector<8x16xf32>
    %331 = vector.extract_strided_slice %328 {offsets = [0, 16], sizes = [8, 16], strides = [1, 1]} : vector<8x64xf32> to vector<8x16xf32>
    %332 = vector.extract_strided_slice %329 {offsets = [0, 32], sizes = [8, 16], strides = [1, 1]} : vector<8x64xf32> to vector<8x16xf32>
    %333 = vector.extract_strided_slice %328 {offsets = [0, 48], sizes = [8, 16], strides = [1, 1]} : vector<8x64xf32> to vector<8x16xf32>
    %334 = arith.mulf %331, %301 : vector<8x16xf32>
    %335 = arith.mulf %330, %332 : vector<8x16xf32>
    %336 = arith.addf %334, %335 : vector<8x16xf32>
    %337 = math.tanh %336 : vector<8x16xf32>
    %338 = arith.mulf %333, %337 : vector<8x16xf32>
    %c0_91 = arith.constant 0 : index
    %c0_92 = arith.constant 0 : index
    %339 = vector.load %arg19[%c0_91, %c0_92] : memref<56x16xf32, #tpu.memory_space<vmem>>, vector<8x16xf32>
    tpu.vector_store %arg19[%c0_91, %c0_92], %338 {strides = array<i32>} : memref<56x16xf32, #tpu.memory_space<vmem>>, vector<8x16xf32>,
    %c8_93 = arith.constant 8 : index
    %c0_94 = arith.constant 0 : index
    %340 = vector.load %arg18[%c8_93, %c0_94] : memref<56x32xf32, #tpu.memory_space<vmem>>, vector<8x32xf32>
    %cst_95 = arith.constant dense<0.000000e+00> : vector<8x32xf32>
    %341 = tpu.matmul %319, %21, %cst_95 {dimension_numbers = #tpu.dot_dimension_numbers<[1], [0], [0], [1], [0, 0, 1, 1], [], []>} : vector<8x8xf32>, vector<8x32xf32>, vector<8x32xf32> -> vector<8x32xf32>
    %342 = arith.addf %340, %341 : vector<8x32xf32>
    %343 = arith.negf %342 : vector<8x32xf32>
    %344 = math.exp %343 : vector<8x32xf32>
    %cst_96 = arith.constant 1.000000e+00 : f32
    %345 = vector.broadcast %cst_96 : f32 to vector<8x32xf32>
    %346 = arith.addf %345, %344 : vector<8x32xf32>
    %347 = arith.divf %345, %346 : vector<8x32xf32>
    %348 = math.tanh %342 : vector<8x32xf32>
    %349 = vector.extract_strided_slice %347 {offsets = [0, 0], sizes = [8, 8], strides = [1, 1]} : vector<8x32xf32> to vector<8x8xf32>
    %350 = vector.extract_strided_slice %347 {offsets = [0, 8], sizes = [8, 8], strides = [1, 1]} : vector<8x32xf32> to vector<8x8xf32>
    %351 = vector.extract_strided_slice %348 {offsets = [0, 16], sizes = [8, 8], strides = [1, 1]} : vector<8x32xf32> to vector<8x8xf32>
    %352 = vector.extract_strided_slice %347 {offsets = [0, 24], sizes = [8, 8], strides = [1, 1]} : vector<8x32xf32> to vector<8x8xf32>
    %353 = arith.mulf %350, %317 : vector<8x8xf32>
    %354 = arith.mulf %349, %351 : vector<8x8xf32>
    %355 = arith.addf %353, %354 : vector<8x8xf32>
    %356 = math.tanh %355 : vector<8x8xf32>
    %357 = arith.mulf %352, %356 : vector<8x8xf32>
    %cst_97 = arith.constant dense<0.000000e+00> : vector<8x64xf32>
    %358 = tpu.matmul %357, %22, %cst_97 {dimension_numbers = #tpu.dot_dimension_numbers<[1], [0], [0], [1], [0, 0, 1, 1], [], []>} : vector<8x8xf32>, vector<8x64xf32>, vector<8x64xf32> -> vector<8x64xf32>
    %cst_98 = arith.constant dense<0.000000e+00> : vector<8x64xf32>
    %359 = tpu.matmul %338, %23, %cst_98 {dimension_numbers = #tpu.dot_dimension_numbers<[1], [0], [0], [1], [0, 0, 1, 1], [], []>} : vector<8x16xf32>, vector<16x64xf32>, vector<8x64xf32> -> vector<8x64xf32>
    %360 = arith.addf %358, %359 : vector<8x64xf32>
    %361 = arith.addf %360, %26 : vector<8x64xf32>
    %362 = arith.negf %361 : vector<8x64xf32>
    %363 = math.exp %362 : vector<8x64xf32>
    %cst_99 = arith.constant 1.000000e+00 : f32
    %364 = vector.broadcast %cst_99 : f32 to vector<8x64xf32>
    %365 = arith.addf %364, %363 : vector<8x64xf32>
    %366 = arith.divf %364, %365 : vector<8x64xf32>
    %367 = math.tanh %361 : vector<8x64xf32>
    %368 = vector.extract_strided_slice %366 {offsets = [0, 0], sizes = [8, 16], strides = [1, 1]} : vector<8x64xf32> to vector<8x16xf32>
    %369 = vector.extract_strided_slice %366 {offsets = [0, 16], sizes = [8, 16], strides = [1, 1]} : vector<8x64xf32> to vector<8x16xf32>
    %370 = vector.extract_strided_slice %367 {offsets = [0, 32], sizes = [8, 16], strides = [1, 1]} : vector<8x64xf32> to vector<8x16xf32>
    %371 = vector.extract_strided_slice %366 {offsets = [0, 48], sizes = [8, 16], strides = [1, 1]} : vector<8x64xf32> to vector<8x16xf32>
    %372 = arith.mulf %369, %336 : vector<8x16xf32>
    %373 = arith.mulf %368, %370 : vector<8x16xf32>
    %374 = arith.addf %372, %373 : vector<8x16xf32>
    %375 = math.tanh %374 : vector<8x16xf32>
    %376 = arith.mulf %371, %375 : vector<8x16xf32>
    %c8_100 = arith.constant 8 : index
    %c0_101 = arith.constant 0 : index
    %377 = vector.load %arg19[%c8_100, %c0_101] : memref<56x16xf32, #tpu.memory_space<vmem>>, vector<8x16xf32>
    tpu.vector_store %arg19[%c8_100, %c0_101], %376 {strides = array<i32>} : memref<56x16xf32, #tpu.memory_space<vmem>>, vector<8x16xf32>,
    %c16_102 = arith.constant 16 : index
    %c0_103 = arith.constant 0 : index
    %378 = vector.load %arg18[%c16_102, %c0_103] : memref<56x32xf32, #tpu.memory_space<vmem>>, vector<8x32xf32>
    %cst_104 = arith.constant dense<0.000000e+00> : vector<8x32xf32>
    %379 = tpu.matmul %357, %21, %cst_104 {dimension_numbers = #tpu.dot_dimension_numbers<[1], [0], [0], [1], [0, 0, 1, 1], [], []>} : vector<8x8xf32>, vector<8x32xf32>, vector<8x32xf32> -> vector<8x32xf32>
    %380 = arith.addf %378, %379 : vector<8x32xf32>
    %381 = arith.negf %380 : vector<8x32xf32>
    %382 = math.exp %381 : vector<8x32xf32>
    %cst_105 = arith.constant 1.000000e+00 : f32
    %383 = vector.broadcast %cst_105 : f32 to vector<8x32xf32>
    %384 = arith.addf %383, %382 : vector<8x32xf32>
    %385 = arith.divf %383, %384 : vector<8x32xf32>
    %386 = math.tanh %380 : vector<8x32xf32>
    %387 = vector.extract_strided_slice %385 {offsets = [0, 0], sizes = [8, 8], strides = [1, 1]} : vector<8x32xf32> to vector<8x8xf32>
    %388 = vector.extract_strided_slice %385 {offsets = [0, 8], sizes = [8, 8], strides = [1, 1]} : vector<8x32xf32> to vector<8x8xf32>
    %389 = vector.extract_strided_slice %386 {offsets = [0, 16], sizes = [8, 8], strides = [1, 1]} : vector<8x32xf32> to vector<8x8xf32>
    %390 = vector.extract_strided_slice %385 {offsets = [0, 24], sizes = [8, 8], strides = [1, 1]} : vector<8x32xf32> to vector<8x8xf32>
    %391 = arith.mulf %388, %355 : vector<8x8xf32>
    %392 = arith.mulf %387, %389 : vector<8x8xf32>
    %393 = arith.addf %391, %392 : vector<8x8xf32>
    %394 = math.tanh %393 : vector<8x8xf32>
    %395 = arith.mulf %390, %394 : vector<8x8xf32>
    %cst_106 = arith.constant dense<0.000000e+00> : vector<8x64xf32>
    %396 = tpu.matmul %395, %22, %cst_106 {dimension_numbers = #tpu.dot_dimension_numbers<[1], [0], [0], [1], [0, 0, 1, 1], [], []>} : vector<8x8xf32>, vector<8x64xf32>, vector<8x64xf32> -> vector<8x64xf32>
    %cst_107 = arith.constant dense<0.000000e+00> : vector<8x64xf32>
    %397 = tpu.matmul %376, %23, %cst_107 {dimension_numbers = #tpu.dot_dimension_numbers<[1], [0], [0], [1], [0, 0, 1, 1], [], []>} : vector<8x16xf32>, vector<16x64xf32>, vector<8x64xf32> -> vector<8x64xf32>
    %398 = arith.addf %396, %397 : vector<8x64xf32>
    %399 = arith.addf %398, %26 : vector<8x64xf32>
    %400 = arith.negf %399 : vector<8x64xf32>
    %401 = math.exp %400 : vector<8x64xf32>
    %cst_108 = arith.constant 1.000000e+00 : f32
    %402 = vector.broadcast %cst_108 : f32 to vector<8x64xf32>
    %403 = arith.addf %402, %401 : vector<8x64xf32>
    %404 = arith.divf %402, %403 : vector<8x64xf32>
    %405 = math.tanh %399 : vector<8x64xf32>
    %406 = vector.extract_strided_slice %404 {offsets = [0, 0], sizes = [8, 16], strides = [1, 1]} : vector<8x64xf32> to vector<8x16xf32>
    %407 = vector.extract_strided_slice %404 {offsets = [0, 16], sizes = [8, 16], strides = [1, 1]} : vector<8x64xf32> to vector<8x16xf32>
    %408 = vector.extract_strided_slice %405 {offsets = [0, 32], sizes = [8, 16], strides = [1, 1]} : vector<8x64xf32> to vector<8x16xf32>
    %409 = vector.extract_strided_slice %404 {offsets = [0, 48], sizes = [8, 16], strides = [1, 1]} : vector<8x64xf32> to vector<8x16xf32>
    %410 = arith.mulf %407, %374 : vector<8x16xf32>
    %411 = arith.mulf %406, %408 : vector<8x16xf32>
    %412 = arith.addf %410, %411 : vector<8x16xf32>
    %413 = math.tanh %412 : vector<8x16xf32>
    %414 = arith.mulf %409, %413 : vector<8x16xf32>
    %c16_109 = arith.constant 16 : index
    %c0_110 = arith.constant 0 : index
    %415 = vector.load %arg19[%c16_109, %c0_110] : memref<56x16xf32, #tpu.memory_space<vmem>>, vector<8x16xf32>
    tpu.vector_store %arg19[%c16_109, %c0_110], %414 {strides = array<i32>} : memref<56x16xf32, #tpu.memory_space<vmem>>, vector<8x16xf32>,
    %c24_111 = arith.constant 24 : index
    %c0_112 = arith.constant 0 : index
    %416 = vector.load %arg18[%c24_111, %c0_112] : memref<56x32xf32, #tpu.memory_space<vmem>>, vector<8x32xf32>
    %cst_113 = arith.constant dense<0.000000e+00> : vector<8x32xf32>
    %417 = tpu.matmul %395, %21, %cst_113 {dimension_numbers = #tpu.dot_dimension_numbers<[1], [0], [0], [1], [0, 0, 1, 1], [], []>} : vector<8x8xf32>, vector<8x32xf32>, vector<8x32xf32> -> vector<8x32xf32>
    %418 = arith.addf %416, %417 : vector<8x32xf32>
    %419 = arith.negf %418 : vector<8x32xf32>
    %420 = math.exp %419 : vector<8x32xf32>
    %cst_114 = arith.constant 1.000000e+00 : f32
    %421 = vector.broadcast %cst_114 : f32 to vector<8x32xf32>
    %422 = arith.addf %421, %420 : vector<8x32xf32>
    %423 = arith.divf %421, %422 : vector<8x32xf32>
    %424 = math.tanh %418 : vector<8x32xf32>
    %425 = vector.extract_strided_slice %423 {offsets = [0, 0], sizes = [8, 8], strides = [1, 1]} : vector<8x32xf32> to vector<8x8xf32>
    %426 = vector.extract_strided_slice %423 {offsets = [0, 8], sizes = [8, 8], strides = [1, 1]} : vector<8x32xf32> to vector<8x8xf32>
    %427 = vector.extract_strided_slice %424 {offsets = [0, 16], sizes = [8, 8], strides = [1, 1]} : vector<8x32xf32> to vector<8x8xf32>
    %428 = vector.extract_strided_slice %423 {offsets = [0, 24], sizes = [8, 8], strides = [1, 1]} : vector<8x32xf32> to vector<8x8xf32>
    %429 = arith.mulf %426, %393 : vector<8x8xf32>
    %430 = arith.mulf %425, %427 : vector<8x8xf32>
    %431 = arith.addf %429, %430 : vector<8x8xf32>
    %432 = math.tanh %431 : vector<8x8xf32>
    %433 = arith.mulf %428, %432 : vector<8x8xf32>
    %cst_115 = arith.constant dense<0.000000e+00> : vector<8x64xf32>
    %434 = tpu.matmul %433, %22, %cst_115 {dimension_numbers = #tpu.dot_dimension_numbers<[1], [0], [0], [1], [0, 0, 1, 1], [], []>} : vector<8x8xf32>, vector<8x64xf32>, vector<8x64xf32> -> vector<8x64xf32>
    %cst_116 = arith.constant dense<0.000000e+00> : vector<8x64xf32>
    %435 = tpu.matmul %414, %23, %cst_116 {dimension_numbers = #tpu.dot_dimension_numbers<[1], [0], [0], [1], [0, 0, 1, 1], [], []>} : vector<8x16xf32>, vector<16x64xf32>, vector<8x64xf32> -> vector<8x64xf32>
    %436 = arith.addf %434, %435 : vector<8x64xf32>
    %437 = arith.addf %436, %26 : vector<8x64xf32>
    %438 = arith.negf %437 : vector<8x64xf32>
    %439 = math.exp %438 : vector<8x64xf32>
    %cst_117 = arith.constant 1.000000e+00 : f32
    %440 = vector.broadcast %cst_117 : f32 to vector<8x64xf32>
    %441 = arith.addf %440, %439 : vector<8x64xf32>
    %442 = arith.divf %440, %441 : vector<8x64xf32>
    %443 = math.tanh %437 : vector<8x64xf32>
    %444 = vector.extract_strided_slice %442 {offsets = [0, 0], sizes = [8, 16], strides = [1, 1]} : vector<8x64xf32> to vector<8x16xf32>
    %445 = vector.extract_strided_slice %442 {offsets = [0, 16], sizes = [8, 16], strides = [1, 1]} : vector<8x64xf32> to vector<8x16xf32>
    %446 = vector.extract_strided_slice %443 {offsets = [0, 32], sizes = [8, 16], strides = [1, 1]} : vector<8x64xf32> to vector<8x16xf32>
    %447 = vector.extract_strided_slice %442 {offsets = [0, 48], sizes = [8, 16], strides = [1, 1]} : vector<8x64xf32> to vector<8x16xf32>
    %448 = arith.mulf %445, %412 : vector<8x16xf32>
    %449 = arith.mulf %444, %446 : vector<8x16xf32>
    %450 = arith.addf %448, %449 : vector<8x16xf32>
    %451 = math.tanh %450 : vector<8x16xf32>
    %452 = arith.mulf %447, %451 : vector<8x16xf32>
    %c24_118 = arith.constant 24 : index
    %c0_119 = arith.constant 0 : index
    %453 = vector.load %arg19[%c24_118, %c0_119] : memref<56x16xf32, #tpu.memory_space<vmem>>, vector<8x16xf32>
    tpu.vector_store %arg19[%c24_118, %c0_119], %452 {strides = array<i32>} : memref<56x16xf32, #tpu.memory_space<vmem>>, vector<8x16xf32>,
    %c32_120 = arith.constant 32 : index
    %c0_121 = arith.constant 0 : index
    %454 = vector.load %arg18[%c32_120, %c0_121] : memref<56x32xf32, #tpu.memory_space<vmem>>, vector<8x32xf32>
    %cst_122 = arith.constant dense<0.000000e+00> : vector<8x32xf32>
    %455 = tpu.matmul %433, %21, %cst_122 {dimension_numbers = #tpu.dot_dimension_numbers<[1], [0], [0], [1], [0, 0, 1, 1], [], []>} : vector<8x8xf32>, vector<8x32xf32>, vector<8x32xf32> -> vector<8x32xf32>
    %456 = arith.addf %454, %455 : vector<8x32xf32>
    %457 = arith.negf %456 : vector<8x32xf32>
    %458 = math.exp %457 : vector<8x32xf32>
    %cst_123 = arith.constant 1.000000e+00 : f32
    %459 = vector.broadcast %cst_123 : f32 to vector<8x32xf32>
    %460 = arith.addf %459, %458 : vector<8x32xf32>
    %461 = arith.divf %459, %460 : vector<8x32xf32>
    %462 = math.tanh %456 : vector<8x32xf32>
    %463 = vector.extract_strided_slice %461 {offsets = [0, 0], sizes = [8, 8], strides = [1, 1]} : vector<8x32xf32> to vector<8x8xf32>
    %464 = vector.extract_strided_slice %461 {offsets = [0, 8], sizes = [8, 8], strides = [1, 1]} : vector<8x32xf32> to vector<8x8xf32>
    %465 = vector.extract_strided_slice %462 {offsets = [0, 16], sizes = [8, 8], strides = [1, 1]} : vector<8x32xf32> to vector<8x8xf32>
    %466 = vector.extract_strided_slice %461 {offsets = [0, 24], sizes = [8, 8], strides = [1, 1]} : vector<8x32xf32> to vector<8x8xf32>
    %467 = arith.mulf %464, %431 : vector<8x8xf32>
    %468 = arith.mulf %463, %465 : vector<8x8xf32>
    %469 = arith.addf %467, %468 : vector<8x8xf32>
    %470 = math.tanh %469 : vector<8x8xf32>
    %471 = arith.mulf %466, %470 : vector<8x8xf32>
    %cst_124 = arith.constant dense<0.000000e+00> : vector<8x64xf32>
    %472 = tpu.matmul %471, %22, %cst_124 {dimension_numbers = #tpu.dot_dimension_numbers<[1], [0], [0], [1], [0, 0, 1, 1], [], []>} : vector<8x8xf32>, vector<8x64xf32>, vector<8x64xf32> -> vector<8x64xf32>
    %cst_125 = arith.constant dense<0.000000e+00> : vector<8x64xf32>
    %473 = tpu.matmul %452, %23, %cst_125 {dimension_numbers = #tpu.dot_dimension_numbers<[1], [0], [0], [1], [0, 0, 1, 1], [], []>} : vector<8x16xf32>, vector<16x64xf32>, vector<8x64xf32> -> vector<8x64xf32>
    %474 = arith.addf %472, %473 : vector<8x64xf32>
    %475 = arith.addf %474, %26 : vector<8x64xf32>
    %476 = arith.negf %475 : vector<8x64xf32>
    %477 = math.exp %476 : vector<8x64xf32>
    %cst_126 = arith.constant 1.000000e+00 : f32
    %478 = vector.broadcast %cst_126 : f32 to vector<8x64xf32>
    %479 = arith.addf %478, %477 : vector<8x64xf32>
    %480 = arith.divf %478, %479 : vector<8x64xf32>
    %481 = math.tanh %475 : vector<8x64xf32>
    %482 = vector.extract_strided_slice %480 {offsets = [0, 0], sizes = [8, 16], strides = [1, 1]} : vector<8x64xf32> to vector<8x16xf32>
    %483 = vector.extract_strided_slice %480 {offsets = [0, 16], sizes = [8, 16], strides = [1, 1]} : vector<8x64xf32> to vector<8x16xf32>
    %484 = vector.extract_strided_slice %481 {offsets = [0, 32], sizes = [8, 16], strides = [1, 1]} : vector<8x64xf32> to vector<8x16xf32>
    %485 = vector.extract_strided_slice %480 {offsets = [0, 48], sizes = [8, 16], strides = [1, 1]} : vector<8x64xf32> to vector<8x16xf32>
    %486 = arith.mulf %483, %450 : vector<8x16xf32>
    %487 = arith.mulf %482, %484 : vector<8x16xf32>
    %488 = arith.addf %486, %487 : vector<8x16xf32>
    %489 = math.tanh %488 : vector<8x16xf32>
    %490 = arith.mulf %485, %489 : vector<8x16xf32>
    %c32_127 = arith.constant 32 : index
    %c0_128 = arith.constant 0 : index
    %491 = vector.load %arg19[%c32_127, %c0_128] : memref<56x16xf32, #tpu.memory_space<vmem>>, vector<8x16xf32>
    tpu.vector_store %arg19[%c32_127, %c0_128], %490 {strides = array<i32>} : memref<56x16xf32, #tpu.memory_space<vmem>>, vector<8x16xf32>,
    %c40_129 = arith.constant 40 : index
    %c0_130 = arith.constant 0 : index
    %492 = vector.load %arg18[%c40_129, %c0_130] : memref<56x32xf32, #tpu.memory_space<vmem>>, vector<8x32xf32>
    %cst_131 = arith.constant dense<0.000000e+00> : vector<8x32xf32>
    %493 = tpu.matmul %471, %21, %cst_131 {dimension_numbers = #tpu.dot_dimension_numbers<[1], [0], [0], [1], [0, 0, 1, 1], [], []>} : vector<8x8xf32>, vector<8x32xf32>, vector<8x32xf32> -> vector<8x32xf32>
    %494 = arith.addf %492, %493 : vector<8x32xf32>
    %495 = arith.negf %494 : vector<8x32xf32>
    %496 = math.exp %495 : vector<8x32xf32>
    %cst_132 = arith.constant 1.000000e+00 : f32
    %497 = vector.broadcast %cst_132 : f32 to vector<8x32xf32>
    %498 = arith.addf %497, %496 : vector<8x32xf32>
    %499 = arith.divf %497, %498 : vector<8x32xf32>
    %500 = math.tanh %494 : vector<8x32xf32>
    %501 = vector.extract_strided_slice %499 {offsets = [0, 0], sizes = [8, 8], strides = [1, 1]} : vector<8x32xf32> to vector<8x8xf32>
    %502 = vector.extract_strided_slice %499 {offsets = [0, 8], sizes = [8, 8], strides = [1, 1]} : vector<8x32xf32> to vector<8x8xf32>
    %503 = vector.extract_strided_slice %500 {offsets = [0, 16], sizes = [8, 8], strides = [1, 1]} : vector<8x32xf32> to vector<8x8xf32>
    %504 = vector.extract_strided_slice %499 {offsets = [0, 24], sizes = [8, 8], strides = [1, 1]} : vector<8x32xf32> to vector<8x8xf32>
    %505 = arith.mulf %502, %469 : vector<8x8xf32>
    %506 = arith.mulf %501, %503 : vector<8x8xf32>
    %507 = arith.addf %505, %506 : vector<8x8xf32>
    %508 = math.tanh %507 : vector<8x8xf32>
    %509 = arith.mulf %504, %508 : vector<8x8xf32>
    %cst_133 = arith.constant dense<0.000000e+00> : vector<8x64xf32>
    %510 = tpu.matmul %509, %22, %cst_133 {dimension_numbers = #tpu.dot_dimension_numbers<[1], [0], [0], [1], [0, 0, 1, 1], [], []>} : vector<8x8xf32>, vector<8x64xf32>, vector<8x64xf32> -> vector<8x64xf32>
    %cst_134 = arith.constant dense<0.000000e+00> : vector<8x64xf32>
    %511 = tpu.matmul %490, %23, %cst_134 {dimension_numbers = #tpu.dot_dimension_numbers<[1], [0], [0], [1], [0, 0, 1, 1], [], []>} : vector<8x16xf32>, vector<16x64xf32>, vector<8x64xf32> -> vector<8x64xf32>
    %512 = arith.addf %510, %511 : vector<8x64xf32>
    %513 = arith.addf %512, %26 : vector<8x64xf32>
    %514 = arith.negf %513 : vector<8x64xf32>
    %515 = math.exp %514 : vector<8x64xf32>
    %cst_135 = arith.constant 1.000000e+00 : f32
    %516 = vector.broadcast %cst_135 : f32 to vector<8x64xf32>
    %517 = arith.addf %516, %515 : vector<8x64xf32>
    %518 = arith.divf %516, %517 : vector<8x64xf32>
    %519 = math.tanh %513 : vector<8x64xf32>
    %520 = vector.extract_strided_slice %518 {offsets = [0, 0], sizes = [8, 16], strides = [1, 1]} : vector<8x64xf32> to vector<8x16xf32>
    %521 = vector.extract_strided_slice %518 {offsets = [0, 16], sizes = [8, 16], strides = [1, 1]} : vector<8x64xf32> to vector<8x16xf32>
    %522 = vector.extract_strided_slice %519 {offsets = [0, 32], sizes = [8, 16], strides = [1, 1]} : vector<8x64xf32> to vector<8x16xf32>
    %523 = vector.extract_strided_slice %518 {offsets = [0, 48], sizes = [8, 16], strides = [1, 1]} : vector<8x64xf32> to vector<8x16xf32>
    %524 = arith.mulf %521, %488 : vector<8x16xf32>
    %525 = arith.mulf %520, %522 : vector<8x16xf32>
    %526 = arith.addf %524, %525 : vector<8x16xf32>
    %527 = math.tanh %526 : vector<8x16xf32>
    %528 = arith.mulf %523, %527 : vector<8x16xf32>
    %c40_136 = arith.constant 40 : index
    %c0_137 = arith.constant 0 : index
    %529 = vector.load %arg19[%c40_136, %c0_137] : memref<56x16xf32, #tpu.memory_space<vmem>>, vector<8x16xf32>
    tpu.vector_store %arg19[%c40_136, %c0_137], %528 {strides = array<i32>} : memref<56x16xf32, #tpu.memory_space<vmem>>, vector<8x16xf32>,
    %c48_138 = arith.constant 48 : index
    %c0_139 = arith.constant 0 : index
    %530 = vector.load %arg18[%c48_138, %c0_139] : memref<56x32xf32, #tpu.memory_space<vmem>>, vector<8x32xf32>
    %cst_140 = arith.constant dense<0.000000e+00> : vector<8x32xf32>
    %531 = tpu.matmul %509, %21, %cst_140 {dimension_numbers = #tpu.dot_dimension_numbers<[1], [0], [0], [1], [0, 0, 1, 1], [], []>} : vector<8x8xf32>, vector<8x32xf32>, vector<8x32xf32> -> vector<8x32xf32>
    %532 = arith.addf %530, %531 : vector<8x32xf32>
    %533 = arith.negf %532 : vector<8x32xf32>
    %534 = math.exp %533 : vector<8x32xf32>
    %cst_141 = arith.constant 1.000000e+00 : f32
    %535 = vector.broadcast %cst_141 : f32 to vector<8x32xf32>
    %536 = arith.addf %535, %534 : vector<8x32xf32>
    %537 = arith.divf %535, %536 : vector<8x32xf32>
    %538 = math.tanh %532 : vector<8x32xf32>
    %539 = vector.extract_strided_slice %537 {offsets = [0, 0], sizes = [8, 8], strides = [1, 1]} : vector<8x32xf32> to vector<8x8xf32>
    %540 = vector.extract_strided_slice %537 {offsets = [0, 8], sizes = [8, 8], strides = [1, 1]} : vector<8x32xf32> to vector<8x8xf32>
    %541 = vector.extract_strided_slice %538 {offsets = [0, 16], sizes = [8, 8], strides = [1, 1]} : vector<8x32xf32> to vector<8x8xf32>
    %542 = vector.extract_strided_slice %537 {offsets = [0, 24], sizes = [8, 8], strides = [1, 1]} : vector<8x32xf32> to vector<8x8xf32>
    %543 = arith.mulf %540, %507 : vector<8x8xf32>
    %544 = arith.mulf %539, %541 : vector<8x8xf32>
    %545 = arith.addf %543, %544 : vector<8x8xf32>
    %546 = math.tanh %545 : vector<8x8xf32>
    %547 = arith.mulf %542, %546 : vector<8x8xf32>
    %cst_142 = arith.constant dense<0.000000e+00> : vector<8x64xf32>
    %548 = tpu.matmul %547, %22, %cst_142 {dimension_numbers = #tpu.dot_dimension_numbers<[1], [0], [0], [1], [0, 0, 1, 1], [], []>} : vector<8x8xf32>, vector<8x64xf32>, vector<8x64xf32> -> vector<8x64xf32>
    %cst_143 = arith.constant dense<0.000000e+00> : vector<8x64xf32>
    %549 = tpu.matmul %528, %23, %cst_143 {dimension_numbers = #tpu.dot_dimension_numbers<[1], [0], [0], [1], [0, 0, 1, 1], [], []>} : vector<8x16xf32>, vector<16x64xf32>, vector<8x64xf32> -> vector<8x64xf32>
    %550 = arith.addf %548, %549 : vector<8x64xf32>
    %551 = arith.addf %550, %26 : vector<8x64xf32>
    %552 = arith.negf %551 : vector<8x64xf32>
    %553 = math.exp %552 : vector<8x64xf32>
    %cst_144 = arith.constant 1.000000e+00 : f32
    %554 = vector.broadcast %cst_144 : f32 to vector<8x64xf32>
    %555 = arith.addf %554, %553 : vector<8x64xf32>
    %556 = arith.divf %554, %555 : vector<8x64xf32>
    %557 = math.tanh %551 : vector<8x64xf32>
    %558 = vector.extract_strided_slice %556 {offsets = [0, 0], sizes = [8, 16], strides = [1, 1]} : vector<8x64xf32> to vector<8x16xf32>
    %559 = vector.extract_strided_slice %556 {offsets = [0, 16], sizes = [8, 16], strides = [1, 1]} : vector<8x64xf32> to vector<8x16xf32>
    %560 = vector.extract_strided_slice %557 {offsets = [0, 32], sizes = [8, 16], strides = [1, 1]} : vector<8x64xf32> to vector<8x16xf32>
    %561 = vector.extract_strided_slice %556 {offsets = [0, 48], sizes = [8, 16], strides = [1, 1]} : vector<8x64xf32> to vector<8x16xf32>
    %562 = arith.mulf %559, %526 : vector<8x16xf32>
    %563 = arith.mulf %558, %560 : vector<8x16xf32>
    %564 = arith.addf %562, %563 : vector<8x16xf32>
    %565 = math.tanh %564 : vector<8x16xf32>
    %566 = arith.mulf %561, %565 : vector<8x16xf32>
    %c48_145 = arith.constant 48 : index
    %c0_146 = arith.constant 0 : index
    %567 = vector.load %arg19[%c48_145, %c0_146] : memref<56x16xf32, #tpu.memory_space<vmem>>, vector<8x16xf32>
    tpu.vector_store %arg19[%c48_145, %c0_146], %566 {strides = array<i32>} : memref<56x16xf32, #tpu.memory_space<vmem>>, vector<8x16xf32>,
    %c0_147 = arith.constant 0 : index
    %c0_148 = arith.constant 0 : index
    %568 = vector.load %arg19[%c0_147, %c0_148] : memref<56x16xf32, #tpu.memory_space<vmem>>, vector<56x16xf32>
    %c0_149 = arith.constant 0 : index
    %c0_150 = arith.constant 0 : index
    %569 = vector.load %arg14[%c0_149, %c0_150] : memref<16x128xf32, #tpu.memory_space<vmem>>, vector<16x128xf32>
    %cst_151 = arith.constant dense<0.000000e+00> : vector<56x128xf32>
    %570 = tpu.matmul %568, %569, %cst_151 {dimension_numbers = #tpu.dot_dimension_numbers<[1], [0], [0], [1], [0, 0, 1, 1], [], []>} : vector<56x16xf32>, vector<16x128xf32>, vector<56x128xf32> -> vector<56x128xf32>
    %c0_152 = arith.constant 0 : index
    %c0_153 = arith.constant 0 : index
    %571 = vector.load %arg15[%c0_152, %c0_153] : memref<1x128xf32, #tpu.memory_space<vmem>>, vector<1x128xf32>
    %572 = vector.broadcast %571 : vector<1x128xf32> to vector<56x128xf32>
    %573 = arith.addf %570, %572 : vector<56x128xf32>
    %574 = vector.extract_strided_slice %573 {offsets = [0, 0], sizes = [8, 2], strides = [1, 1]} : vector<56x128xf32> to vector<8x2xf32>
    %575 = vector.extract_strided_slice %573 {offsets = [8, 0], sizes = [8, 2], strides = [1, 1]} : vector<56x128xf32> to vector<8x2xf32>
    %576 = vector.extract_strided_slice %573 {offsets = [16, 0], sizes = [8, 2], strides = [1, 1]} : vector<56x128xf32> to vector<8x2xf32>
    %577 = vector.extract_strided_slice %573 {offsets = [24, 0], sizes = [8, 2], strides = [1, 1]} : vector<56x128xf32> to vector<8x2xf32>
    %578 = vector.extract_strided_slice %573 {offsets = [32, 0], sizes = [8, 2], strides = [1, 1]} : vector<56x128xf32> to vector<8x2xf32>
    %579 = vector.extract_strided_slice %573 {offsets = [40, 0], sizes = [8, 2], strides = [1, 1]} : vector<56x128xf32> to vector<8x2xf32>
    %580 = vector.extract_strided_slice %573 {offsets = [48, 0], sizes = [8, 4], strides = [1, 1]} : vector<56x128xf32> to vector<8x4xf32>
    %581 = tpu.concatenate %574, %575, %576, %577, %578, %579, %580 in 1 : vector<8x2xf32>, vector<8x2xf32>, vector<8x2xf32>, vector<8x2xf32>, vector<8x2xf32>, vector<8x2xf32>, vector<8x4xf32> -> vector<8x16xf32>
    %cst_154 = arith.constant 0.000000e+00 : f32
    %582 = vector.broadcast %cst_154 : f32 to vector<8x112xf32>
    %583 = tpu.concatenate %581, %582 in 1 : vector<8x16xf32>, vector<8x112xf32> -> vector<8x128xf32>
    %c0_155 = arith.constant 0 : index
    %c0_156 = arith.constant 0 : index
    %584 = vector.load %arg16[%c0_155, %c0_156] : memref<8x128xf32, #tpu.memory_space<vmem>>, vector<8x128xf32>
    tpu.vector_store %arg16[%c0_155, %c0_156], %583 {strides = array<i32>} : memref<8x128xf32, #tpu.memory_space<vmem>>, vector<8x128xf32>,
    return
  }
}

</mosaic_0001>

<llo_original>
// kernel: _lambda_.1
$region0: #{_lambda_.1}
  #allocation0 [shape = 'u32[]', space=smem, size = 0x4, offset = 0x4, fixed_abs, tag = 'smem constant byte address 0x4 - core index']
  #allocation1 [shape = 'u32[144,128]{1,0:T(1,128)}', space=vmem, size = 0x12000, scoped, tag = 'internal scratch']
  #allocation2 [shape = 'f32[56,64]{1,0:T(8,128)}', space=vmem, size = 0x7000, scoped, tag = 'scratch operand']
  #allocation3 [shape = 'f32[56,32]{1,0:T(8,128)}', space=vmem, size = 0x7000, scoped, tag = 'scratch operand']
  #allocation4 [shape = 'f32[56,16]{1,0:T(8,128)}', space=vmem, size = 0x7000, scoped, tag = 'scratch operand']
  %s0 = inlined_call_operand.vmem [shape: f32[8,16], index: 0, kind: input, shape index: {}]
  %s1 = inlined_call_operand.hbm [shape: f32[56,8], index: 1, kind: input, shape index: {}]
  %s2 = inlined_call_operand.hbm [shape: f32[4,64], index: 2, kind: input, shape index: {}]
  %s3 = inlined_call_operand.hbm [shape: f32[16,64], index: 3, kind: input, shape index: {}]
  %s4 = inlined_call_operand.hbm [shape: f32[1,64], index: 4, kind: input, shape index: {}]
  %s5 = inlined_call_operand.hbm [shape: f32[16,32], index: 5, kind: input, shape index: {}]
  %s6 = inlined_call_operand.hbm [shape: f32[8,32], index: 6, kind: input, shape index: {}]
  %s7 = inlined_call_operand.hbm [shape: f32[1,32], index: 7, kind: input, shape index: {}]
  %s8 = inlined_call_operand.hbm [shape: f32[8,32], index: 8, kind: input, shape index: {}]
  %s9 = inlined_call_operand.hbm [shape: f32[8,32], index: 9, kind: input, shape index: {}]
  %s10 = inlined_call_operand.hbm [shape: f32[1,32], index: 10, kind: input, shape index: {}]
  %s11 = inlined_call_operand.hbm [shape: f32[8,64], index: 11, kind: input, shape index: {}]
  %s12 = inlined_call_operand.vmem [shape: f32[16,64], index: 12, kind: input, shape index: {}]
  %s13 = inlined_call_operand.vmem [shape: f32[1,64], index: 13, kind: input, shape index: {}]
  %s14 = inlined_call_operand.vmem [shape: f32[16,128], index: 14, kind: input, shape index: {}]
  %s15 = inlined_call_operand.vmem [shape: f32[1,128], index: 15, kind: input, shape index: {}]
  %s16 = inlined_call_operand.vmem [shape: f32[8,128], index: 16, kind: output, shape index: {}]
  %s17 = sld [smem:[#allocation0]]
  $region118: #{_lambda_.1} parent=0
    _
  %s19 = ssub.s32 1, %s17
  %s20 = scalar_select 0, %s19, %s17
  $region1: #{_lambda_.1} parent=0
    #allocation5 [shape = 'u8[28672]{0}', space=vmem, size = 0x7000, scoped, tag = 'input window, operand 1, single buffered']
    #allocation6 [shape = 's32[1]{0}', space=sflag, size = 0x4, scoped, tag = 'scoped memory for _lambda_.1']
    #allocation7 [shape = 'u8[2048]{0}', space=vmem, size = 0x800, scoped, tag = 'input window, operand 2, single buffered']
    #allocation8 [shape = 's32[1]{0}', space=sflag, size = 0x4, scoped, tag = 'scoped memory for _lambda_.1']
    #allocation9 [shape = 'u8[8192]{0}', space=vmem, size = 0x2000, scoped, tag = 'input window, operand 3, single buffered']
    #allocation10 [shape = 'u8[512]{0}', space=vmem, size = 0x400, scoped, tag = 'input window, operand 4, single buffered']
    #allocation11 [shape = 's32[1]{0}', space=sflag, size = 0x4, scoped, tag = 'scoped memory for _lambda_.1']
    #allocation12 [shape = 'u8[8192]{0}', space=vmem, size = 0x2000, scoped, tag = 'input window, operand 5, single buffered']
    #allocation13 [shape = 'u8[4096]{0}', space=vmem, size = 0x1000, scoped, tag = 'input window, operand 6, single buffered']
    #allocation14 [shape = 's32[1]{0}', space=sflag, size = 0x4, scoped, tag = 'scoped memory for _lambda_.1']
    #allocation15 [shape = 'u8[512]{0}', space=vmem, size = 0x400, scoped, tag = 'input window, operand 7, single buffered']
    #allocation16 [shape = 'u8[4096]{0}', space=vmem, size = 0x1000, scoped, tag = 'input window, operand 8, single buffered']
    #allocation17 [shape = 's32[1]{0}', space=sflag, size = 0x4, scoped, tag = 'scoped memory for _lambda_.1']
    #allocation18 [shape = 'u8[4096]{0}', space=vmem, size = 0x1000, scoped, tag = 'input window, operand 9, single buffered']
    #allocation19 [shape = 'u8[512]{0}', space=vmem, size = 0x400, scoped, tag = 'input window, operand 10, single buffered']
    #allocation20 [shape = 's32[1]{0}', space=sflag, size = 0x4, scoped, tag = 'scoped memory for _lambda_.1']
    #allocation21 [shape = 'u8[4096]{0}', space=vmem, size = 0x1000, scoped, tag = 'input window, operand 11, single buffered']
    %21 = vsyncpa [#allocation6], 0
    %22 = vsyncpa [#allocation8], 0
    %23 = vsyncpa [#allocation11], 0
    %24 = vsyncpa [#allocation14], 0
    %25 = vsyncpa [#allocation17], 0
    %26 = vsyncpa [#allocation20], 0
    // Predicated region
    $region2: #{_lambda_.1} parent=1 // pred_check
      _
    $region3: #{_lambda_.1} parent=1 // pred_check_branch
      %28 = sbr.rel (0) target = $region5
    $region4: #{_lambda_.1} parent=1 // pred_region
      _
    $region5: #{_lambda_.1} parent=1 // pred_fallthru
      _
    // Predicated region
    $region6: #{_lambda_.1} parent=1 // pred_check
      _
    $region7: #{_lambda_.1} parent=1 // pred_check_branch
      %30 = sbr.rel (0) target = $region9
    $region8: #{_lambda_.1} parent=1 // pred_region
      %s32 = ssub.s32 896, 896
      %33 = vsyncadd [#allocation6], %s32
      %s34 = sshll.u32 [#allocation5], 4
      %s35 = int_to_ptr.vmem [resolvable:$true] %s34
      %40 = dma.hbm_to_vmem [thread:$0]  %s1, 896, %s35, [#allocation6], 128, 128, 8
    $region9: #{_lambda_.1} parent=1 // pred_fallthru
      _
    // Predicated region
    $region10: #{_lambda_.1} parent=1 // pred_check
      _
    $region11: #{_lambda_.1} parent=1 // pred_check_branch
      %42 = sbr.rel (0) target = $region13
    $region12: #{_lambda_.1} parent=1 // pred_region
      %s44 = ssub.s32 64, 64
      %45 = vsyncadd [#allocation8], %s44
      %s47 = sshll.u32 [#allocation7], 4
      %s48 = int_to_ptr.vmem [resolvable:$true] %s47
      %50 = dma.hbm_to_vmem [thread:$0]  %s2, 64, %s48, [#allocation8]
    $region13: #{_lambda_.1} parent=1 // pred_fallthru
      _
    // Predicated region
    $region14: #{_lambda_.1} parent=1 // pred_check
      _
    $region15: #{_lambda_.1} parent=1 // pred_check_branch
      %52 = sbr.rel (0) target = $region17
    $region16: #{_lambda_.1} parent=1 // pred_region
      %s54 = ssub.s32 256, 256
      %55 = vsyncadd [#allocation8], %s54
      %s56 = sshll.u32 [#allocation9], 4
      %s57 = int_to_ptr.vmem [resolvable:$true] %s56
      %62 = dma.hbm_to_vmem [thread:$0]  %s3, 256, %s57, [#allocation8], 128, 128, 8
    $region17: #{_lambda_.1} parent=1 // pred_fallthru
      _
    // Predicated region
    $region18: #{_lambda_.1} parent=1 // pred_check
      _
    $region19: #{_lambda_.1} parent=1 // pred_check_branch
      %64 = sbr.rel (0) target = $region21
    $region20: #{_lambda_.1} parent=1 // pred_region
      %s66 = ssub.s32 16, 16
      %67 = vsyncadd [#allocation11], %s66
      %s69 = sshll.u32 [#allocation10], 4
      %s70 = int_to_ptr.vmem [resolvable:$true] %s69
      %72 = dma.hbm_to_vmem [thread:$0]  %s4, 16, %s70, [#allocation11]
    $region21: #{_lambda_.1} parent=1 // pred_fallthru
      _
    // Predicated region
    $region22: #{_lambda_.1} parent=1 // pred_check
      _
    $region23: #{_lambda_.1} parent=1 // pred_check_branch
      %74 = sbr.rel (0) target = $region25
    $region24: #{_lambda_.1} parent=1 // pred_region
      %s76 = ssub.s32 256, 256
      %77 = vsyncadd [#allocation11], %s76
      %s78 = sshll.u32 [#allocation12], 4
      %s79 = int_to_ptr.vmem [resolvable:$true] %s78
      %84 = dma.hbm_to_vmem [thread:$0]  %s5, 256, %s79, [#allocation11], 128, 128, 8
    $region25: #{_lambda_.1} parent=1 // pred_fallthru
      _
    // Predicated region
    $region26: #{_lambda_.1} parent=1 // pred_check
      _
    $region27: #{_lambda_.1} parent=1 // pred_check_branch
      %86 = sbr.rel (0) target = $region29
    $region28: #{_lambda_.1} parent=1 // pred_region
      %s88 = ssub.s32 128, 128
      %89 = vsyncadd [#allocation14], %s88
      %s91 = sshll.u32 [#allocation13], 4
      %s92 = int_to_ptr.vmem [resolvable:$true] %s91
      %94 = dma.hbm_to_vmem [thread:$0]  %s6, 128, %s92, [#allocation14]
    $region29: #{_lambda_.1} parent=1 // pred_fallthru
      _
    // Predicated region
    $region30: #{_lambda_.1} parent=1 // pred_check
      _
    $region31: #{_lambda_.1} parent=1 // pred_check_branch
      %96 = sbr.rel (0) target = $region33
    $region32: #{_lambda_.1} parent=1 // pred_region
      %s98 = ssub.s32 16, 16
      %99 = vsyncadd [#allocation14], %s98
      %s101 = sshll.u32 [#allocation15], 4
      %s102 = int_to_ptr.vmem [resolvable:$true] %s101
      %104 = dma.hbm_to_vmem [thread:$0]  %s7, 16, %s102, [#allocation14]
    $region33: #{_lambda_.1} parent=1 // pred_fallthru
      _
    // Predicated region
    $region34: #{_lambda_.1} parent=1 // pred_check
      _
    $region35: #{_lambda_.1} parent=1 // pred_check_branch
      %106 = sbr.rel (0) target = $region37
    $region36: #{_lambda_.1} parent=1 // pred_region
      %s108 = ssub.s32 128, 128
      %109 = vsyncadd [#allocation17], %s108
      %s111 = sshll.u32 [#allocation16], 4
      %s112 = int_to_ptr.vmem [resolvable:$true] %s111
      %114 = dma.hbm_to_vmem [thread:$0]  %s8, 128, %s112, [#allocation17]
    $region37: #{_lambda_.1} parent=1 // pred_fallthru
      _
    // Predicated region
    $region38: #{_lambda_.1} parent=1 // pred_check
      _
    $region39: #{_lambda_.1} parent=1 // pred_check_branch
      %116 = sbr.rel (0) target = $region41
    $region40: #{_lambda_.1} parent=1 // pred_region
      %s118 = ssub.s32 128, 128
      %119 = vsyncadd [#allocation17], %s118
      %s121 = sshll.u32 [#allocation18], 4
      %s122 = int_to_ptr.vmem [resolvable:$true] %s121
      %124 = dma.hbm_to_vmem [thread:$0]  %s9, 128, %s122, [#allocation17]
    $region41: #{_lambda_.1} parent=1 // pred_fallthru
      _
    // Predicated region
    $region42: #{_lambda_.1} parent=1 // pred_check
      _
    $region43: #{_lambda_.1} parent=1 // pred_check_branch
      %126 = sbr.rel (0) target = $region45
    $region44: #{_lambda_.1} parent=1 // pred_region
      %s128 = ssub.s32 16, 16
      %129 = vsyncadd [#allocation20], %s128
      %s131 = sshll.u32 [#allocation19], 4
      %s132 = int_to_ptr.vmem [resolvable:$true] %s131
      %134 = dma.hbm_to_vmem [thread:$0]  %s10, 16, %s132, [#allocation20]
    $region45: #{_lambda_.1} parent=1 // pred_fallthru
      _
    // Predicated region
    $region46: #{_lambda_.1} parent=1 // pred_check
      _
    $region47: #{_lambda_.1} parent=1 // pred_check_branch
      %136 = sbr.rel (0) target = $region49
    $region48: #{_lambda_.1} parent=1 // pred_region
      %s138 = ssub.s32 128, 128
      %139 = vsyncadd [#allocation20], %s138
      %s141 = sshll.u32 [#allocation21], 4
      %s142 = int_to_ptr.vmem [resolvable:$true] %s141
      %144 = dma.hbm_to_vmem [thread:$0]  %s11, 128, %s142, [#allocation20]
    $region49: #{_lambda_.1} parent=1 // pred_fallthru
      _
    // Predicated region
    $region50: #{_lambda_.1} parent=1 // pred_check
      _
    $region51: #{_lambda_.1} parent=1 // pred_check_branch
      %146 = sbr.rel (0) target = $region53
    $region52: #{_lambda_.1} parent=1 // pred_region
      _
    $region53: #{_lambda_.1} parent=1 // pred_fallthru
      _
    // Predicated region
    $region54: #{_lambda_.1} parent=1 // pred_check
      _
    $region55: #{_lambda_.1} parent=1 // pred_check_branch
      %148 = sbr.rel (0) target = $region57
    $region56: #{_lambda_.1} parent=1 // pred_region
      _
    $region57: #{_lambda_.1} parent=1 // pred_fallthru
      _
    // Predicated region
    $region58: #{_lambda_.1} parent=1 // pred_check
      _
    $region59: #{_lambda_.1} parent=1 // pred_check_branch
      %150 = sbr.rel (0) target = $region61
    $region60: #{_lambda_.1} parent=1 // pred_region
      _
    $region61: #{_lambda_.1} parent=1 // pred_fallthru
      _
    // Predicated region
    $region62: #{_lambda_.1} parent=1 // pred_check
      _
    $region63: #{_lambda_.1} parent=1 // pred_check_branch
      %152 = sbr.rel (0) target = $region65
    $region64: #{_lambda_.1} parent=1 // pred_region
      _
    $region65: #{_lambda_.1} parent=1 // pred_fallthru
      _
    // Predicated region
    $region66: #{_lambda_.1} parent=1 // pred_check
      _
    $region67: #{_lambda_.1} parent=1 // pred_check_branch
      %154 = sbr.rel (0) target = $region69
    $region68: #{_lambda_.1} parent=1 // pred_region
      %155 = dma.done [#allocation6], 896
    $region69: #{_lambda_.1} parent=1 // pred_fallthru
      _
    // Predicated region
    $region70: #{_lambda_.1} parent=1 // pred_check
      _
    $region71: #{_lambda_.1} parent=1 // pred_check_branch
      %157 = sbr.rel (0) target = $region73
    $region72: #{_lambda_.1} parent=1 // pred_region
      %158 = dma.done [#allocation8], 64
    $region73: #{_lambda_.1} parent=1 // pred_fallthru
      _
    // Predicated region
    $region74: #{_lambda_.1} parent=1 // pred_check
      _
    $region75: #{_lambda_.1} parent=1 // pred_check_branch
      %160 = sbr.rel (0) target = $region77
    $region76: #{_lambda_.1} parent=1 // pred_region
      %161 = dma.done [#allocation8], 256
    $region77: #{_lambda_.1} parent=1 // pred_fallthru
      _
    // Predicated region
    $region78: #{_lambda_.1} parent=1 // pred_check
      _
    $region79: #{_lambda_.1} parent=1 // pred_check_branch
      %163 = sbr.rel (0) target = $region81
    $region80: #{_lambda_.1} parent=1 // pred_region
      %164 = dma.done [#allocation11], 16
    $region81: #{_lambda_.1} parent=1 // pred_fallthru
      _
    // Predicated region
    $region82: #{_lambda_.1} parent=1 // pred_check
      _
    $region83: #{_lambda_.1} parent=1 // pred_check_branch
      %166 = sbr.rel (0) target = $region85
    $region84: #{_lambda_.1} parent=1 // pred_region
      %167 = dma.done [#allocation11], 256
    $region85: #{_lambda_.1} parent=1 // pred_fallthru
      _
    // Predicated region
    $region86: #{_lambda_.1} parent=1 // pred_check
      _
    $region87: #{_lambda_.1} parent=1 // pred_check_branch
      %169 = sbr.rel (0) target = $region89
    $region88: #{_lambda_.1} parent=1 // pred_region
      %170 = dma.done [#allocation14], 128
    $region89: #{_lambda_.1} parent=1 // pred_fallthru
      _
    // Predicated region
    $region90: #{_lambda_.1} parent=1 // pred_check
      _
    $region91: #{_lambda_.1} parent=1 // pred_check_branch
      %172 = sbr.rel (0) target = $region93
    $region92: #{_lambda_.1} parent=1 // pred_region
      %173 = dma.done [#allocation14], 16
    $region93: #{_lambda_.1} parent=1 // pred_fallthru
      _
    // Predicated region
    $region94: #{_lambda_.1} parent=1 // pred_check
      _
    $region95: #{_lambda_.1} parent=1 // pred_check_branch
      %175 = sbr.rel (0) target = $region97
    $region96: #{_lambda_.1} parent=1 // pred_region
      %176 = dma.done [#allocation17], 128
    $region97: #{_lambda_.1} parent=1 // pred_fallthru
      _
    // Predicated region
    $region98: #{_lambda_.1} parent=1 // pred_check
      _
    $region99: #{_lambda_.1} parent=1 // pred_check_branch
      %178 = sbr.rel (0) target = $region101
    $region100: #{_lambda_.1} parent=1 // pred_region
      %179 = dma.done [#allocation17], 128
    $region101: #{_lambda_.1} parent=1 // pred_fallthru
      _
    // Predicated region
    $region102: #{_lambda_.1} parent=1 // pred_check
      _
    $region103: #{_lambda_.1} parent=1 // pred_check_branch
      %181 = sbr.rel (0) target = $region105
    $region104: #{_lambda_.1} parent=1 // pred_region
      %182 = dma.done [#allocation20], 16
    $region105: #{_lambda_.1} parent=1 // pred_fallthru
      _
    // Predicated region
    $region106: #{_lambda_.1} parent=1 // pred_check
      _
    $region107: #{_lambda_.1} parent=1 // pred_check_branch
      %184 = sbr.rel (0) target = $region109
    $region108: #{_lambda_.1} parent=1 // pred_region
      %185 = dma.done [#allocation20], 128
    $region109: #{_lambda_.1} parent=1 // pred_fallthru
      _
    %v186 = vld [vmem:[%s0] sm:$0xff]
    %188 = vrot.lane.b32.xlu0 %v186, 126
    %v189 = vpop.permute.xlu0 %188
    %190 = vrot.lane.b32.xlu0 %v186, 124
    %v191 = vpop.permute.xlu0 %190
    %192 = vrot.lane.b32.xlu0 %v186, 122
    %v193 = vpop.permute.xlu0 %192
    %194 = vrot.lane.b32.xlu0 %v186, 120
    %v195 = vpop.permute.xlu0 %194
    %196 = vrot.lane.b32.xlu0 %v186, 118
    %v197 = vpop.permute.xlu0 %196
    %198 = vrot.lane.b32.xlu0 %v186, 116
    %v199 = vpop.permute.xlu0 %198
    %v200 = vld [vmem:[#allocation7] sm:$0xf]
    %v201 = vld [vmem:[#allocation10] sm:$0x1]
    %v203 = vlaneseq
    %v204 = vshrl.u32 %v203, 7
    %v205 = vsub.s32 0, %v204
    %v206 = vrot.slane %v201, %v205
    %vm208 = vcmask 31744
    %v209 = vsel %vm208, %v186, 0
    %v211 = vsel %vm208, %v189, 0
    %v213 = vsel %vm208, %v191, 0
    %v215 = vsel %vm208, %v193, 0
    %v217 = vsel %vm208, %v195, 0
    %v219 = vsel %vm208, %v197, 0
    %v221 = vsel %vm208, %v199, 0
    %vm223 = vcmask 1043456
    %v225 = vsel %vm223, %v200, 0
    %227 = vmatprep.subr.mxu0 0.0
    %228 = vmatpush1.msra.mxu0 0.0
    %229 = vmatprep.subr.mxu0 0.0
    %230 = vmatpush1.msra.mxu0 0.0
    %231 = vmatprep.subr.mxu0 0.0
    %232 = vmatpush1.msra.mxu0 0.0
    %233 = vmatprep.subr.mxu0 0.0
    %234 = vmatpush1.msra.mxu0 0.0
    %235 = vmatprep.subr.mxu0 0.0
    %236 = vmatpush1.msra.mxu0 0.0
    %237 = vmatprep.subr.mxu0 0.0
    %238 = vmatpush1.msra.mxu0 0.0
    %239 = vmatprep.subr.mxu0 0.0
    %240 = vmatpush1.msra.mxu0 0.0
    %241 = vmatprep.subr.mxu0 0.0
    %242 = vmatpush1.msra.mxu0 0.0
    %243 = vmatprep.subr.mxu0 0.0
    %244 = vmatpush1.msra.mxu0 0.0
    %245 = vmatprep.subr.mxu0 0.0
    %246 = vmatpush1.msra.mxu0 0.0
    %247 = vmatprep.subr.mxu0 0.0
    %248 = vmatpush1.msra.mxu0 0.0
    %249 = vmatprep.subr.mxu0 0.0
    %250 = vmatpush1.msra.mxu0 0.0
    %251 = vmatprep.subr.mxu0 0.0
    %252 = vmatpush1.msra.mxu0 0.0
    %253 = vmatprep.subr.mxu0 0.0
    %254 = vmatpush1.msra.mxu0 0.0
    %255 = vmatprep.subr.mxu0 0.0
    %256 = vmatpush1.msra.mxu0 0.0
    %257 = vmatprep.subr.mxu0 0.0
    %258 = vmatpush1.msra.mxu0 %v225
    %259 = vmatprep.subr.mxu0 0.0
    %260 = vmatpush2.msra.mxu0 0.0
    %261 = vmatprep.subr.mxu0 0.0
    %262 = vmatpush2.msra.mxu0 0.0
    %263 = vmatprep.subr.mxu0 0.0
    %264 = vmatpush2.msra.mxu0 0.0
    %265 = vmatprep.subr.mxu0 0.0
    %266 = vmatpush2.msra.mxu0 0.0
    %267 = vmatprep.subr.mxu0 0.0
    %268 = vmatpush2.msra.mxu0 0.0
    %269 = vmatprep.subr.mxu0 0.0
    %270 = vmatpush2.msra.mxu0 0.0
    %271 = vmatprep.subr.mxu0 0.0
    %272 = vmatpush2.msra.mxu0 0.0
    %273 = vmatprep.subr.mxu0 0.0
    %274 = vmatpush2.msra.mxu0 0.0
    %275 = vmatprep.subr.mxu0 0.0
    %276 = vmatpush2.msra.mxu0 0.0
    %277 = vmatprep.subr.mxu0 0.0
    %278 = vmatpush2.msra.mxu0 0.0
    %279 = vmatprep.subr.mxu0 0.0
    %280 = vmatpush2.msra.mxu0 0.0
    %281 = vmatprep.subr.mxu0 0.0
    %282 = vmatpush2.msra.mxu0 0.0
    %283 = vmatprep.subr.mxu0 0.0
    %284 = vmatpush2.msra.mxu0 0.0
    %285 = vmatprep.subr.mxu0 0.0
    %286 = vmatpush2.msra.mxu0 0.0
    %287 = vmatprep.subr.mxu0 0.0
    %288 = vmatpush2.msra.mxu0 0.0
    %289 = vmatprep.subr.mxu0 0.0
    %290 = vmatpush2.msra.mxu0 0.0
    %291 = vmatprep.mubr.f32.mxu0 0.0
    %292 = vmatmul.mubr.f32.gmra.mxu0 %v209
    %v293 = vpop.f32.mrf.mxu0
    %v294 = vadd.f32 %v206, %v293
    %v295 = vpop.f32.mrf.mxu0
    %296 = vmatprep.mubr.f32.mxu0 0.0
    %297 = vmatmul.mubr.f32.gmra.mxu0 %v211
    %v298 = vpop.f32.mrf.mxu0
    %v299 = vadd.f32 %v206, %v298
    %v300 = vpop.f32.mrf.mxu0
    %301 = vmatprep.mubr.f32.mxu0 0.0
    %302 = vmatmul.mubr.f32.gmra.mxu0 %v213
    %v303 = vpop.f32.mrf.mxu0
    %v304 = vadd.f32 %v206, %v303
    %v305 = vpop.f32.mrf.mxu0
    %306 = vmatprep.mubr.f32.mxu0 0.0
    %307 = vmatmul.mubr.f32.gmra.mxu0 %v215
    %v308 = vpop.f32.mrf.mxu0
    %v309 = vadd.f32 %v206, %v308
    %v310 = vpop.f32.mrf.mxu0
    %311 = vmatprep.mubr.f32.mxu0 0.0
    %312 = vmatmul.mubr.f32.gmra.mxu0 %v217
    %v313 = vpop.f32.mrf.mxu0
    %v314 = vadd.f32 %v206, %v313
    %v315 = vpop.f32.mrf.mxu0
    %316 = vmatprep.mubr.f32.mxu0 0.0
    %317 = vmatmul.mubr.f32.gmra.mxu0 %v219
    %v318 = vpop.f32.mrf.mxu0
    %v319 = vadd.f32 %v206, %v318
    %v320 = vpop.f32.mrf.mxu0
    %321 = vmatprep.mubr.f32.mxu0 0.0
    %322 = vmatmul.mubr.f32.gmra.mxu0 %v221
    %v323 = vpop.f32.mrf.mxu0
    %v324 = vadd.f32 %v206, %v323
    %v325 = vpop.f32.mrf.mxu0
    %326 = vdwg.mxu0
    %vm327 = vcmask 523264
    %328 = vst.msk [vmem:[#allocation2] sm:$0xff] %vm327, %v294
    %329 = vst.msk [vmem:[#allocation2 + $0x8] sm:$0xff] %vm327, %v299
    %330 = vst.msk [vmem:[#allocation2 + $0x10] sm:$0xff] %vm327, %v304
    %331 = vst.msk [vmem:[#allocation2 + $0x18] sm:$0xff] %vm327, %v309
    %332 = vst.msk [vmem:[#allocation2 + $0x20] sm:$0xff] %vm327, %v314
    %333 = vst.msk [vmem:[#allocation2 + $0x28] sm:$0xff] %vm327, %v319
    %334 = vst.msk [vmem:[#allocation2 + $0x30] sm:$0xff] %vm327, %v324
    %v335 = vld [vmem:[#allocation9] sm:$0xff]
    %v336 = vld [vmem:[#allocation9 + $0x8] sm:$0xff]
    %v337 = vld [vmem:[#allocation12] sm:$0xff]
    %v338 = vld [vmem:[#allocation12 + $0x8] sm:$0xff]
    %v339 = vld [vmem:[#allocation13] sm:$0xff]
    %v340 = vld [vmem:[#allocation15] sm:$0x1]
    %v342 = vlaneseq
    %v343 = vshrl.u32 %v342, 7
    %v344 = vsub.s32 0, %v343
    %v345 = vrot.slane %v340, %v344
    %v347 = vld [vmem:[#allocation18] sm:$0xff]
    %v348 = vld [vmem:[#allocation21] sm:$0xff]
    %v349 = vld [vmem:[%s12] sm:$0xff]
    %v350 = vld [vmem:[%s12 + $0x8] sm:$0xff]
    %v351 = vld [vmem:[%s13] sm:$0x1]
    %v353 = vlaneseq
    %v354 = vshrl.u32 %v353, 7
    %v355 = vsub.s32 0, %v354
    %v356 = vrot.slane %v351, %v355
    %v358 = vld [vmem:[#allocation2] sm:$0xff]
    %vm359 = vcmask 130048
    %v361 = vsel %vm359, 0.0, 0
    %363 = vmatprep.subr.mxu0 0.0
    %364 = vmatpush1.msra.mxu0 0.0
    %365 = vmatprep.subr.mxu0 0.0
    %366 = vmatpush1.msra.mxu0 0.0
    %367 = vmatprep.subr.mxu0 0.0
    %368 = vmatpush1.msra.mxu0 0.0
    %369 = vmatprep.subr.mxu0 0.0
    %370 = vmatpush1.msra.mxu0 0.0
    %371 = vmatprep.subr.mxu0 0.0
    %372 = vmatpush1.msra.mxu0 0.0
    %373 = vmatprep.subr.mxu0 0.0
    %374 = vmatpush1.msra.mxu0 0.0
    %375 = vmatprep.subr.mxu0 0.0
    %376 = vmatpush1.msra.mxu0 0.0
    %377 = vmatprep.subr.mxu0 0.0
    %378 = vmatpush1.msra.mxu0 0.0
    %379 = vmatprep.subr.mxu0 0.0
    %380 = vmatpush1.msra.mxu0 0.0
    %381 = vmatprep.subr.mxu0 0.0
    %382 = vmatpush1.msra.mxu0 0.0
    %383 = vmatprep.subr.mxu0 0.0
    %384 = vmatpush1.msra.mxu0 0.0
    %385 = vmatprep.subr.mxu0 0.0
    %386 = vmatpush1.msra.mxu0 0.0
    %387 = vmatprep.subr.mxu0 0.0
    %388 = vmatpush1.msra.mxu0 0.0
    %389 = vmatprep.subr.mxu0 0.0
    %390 = vmatpush1.msra.mxu0 0.0
    %391 = vmatprep.subr.mxu0 0.0
    %392 = vmatpush1.msra.mxu0 %v336
    %393 = vmatprep.subr.mxu0 0.0
    %394 = vmatpush1.msra.mxu0 %v335
    %395 = vmatprep.subr.mxu0 0.0
    %396 = vmatpush2.msra.mxu0 0.0
    %397 = vmatprep.subr.mxu0 0.0
    %398 = vmatpush2.msra.mxu0 0.0
    %399 = vmatprep.subr.mxu0 0.0
    %400 = vmatpush2.msra.mxu0 0.0
    %401 = vmatprep.subr.mxu0 0.0
    %402 = vmatpush2.msra.mxu0 0.0
    %403 = vmatprep.subr.mxu0 0.0
    %404 = vmatpush2.msra.mxu0 0.0
    %405 = vmatprep.subr.mxu0 0.0
    %406 = vmatpush2.msra.mxu0 0.0
    %407 = vmatprep.subr.mxu0 0.0
    %408 = vmatpush2.msra.mxu0 0.0
    %409 = vmatprep.subr.mxu0 0.0
    %410 = vmatpush2.msra.mxu0 0.0
    %411 = vmatprep.subr.mxu0 0.0
    %412 = vmatpush2.msra.mxu0 0.0
    %413 = vmatprep.subr.mxu0 0.0
    %414 = vmatpush2.msra.mxu0 0.0
    %415 = vmatprep.subr.mxu0 0.0
    %416 = vmatpush2.msra.mxu0 0.0
    %417 = vmatprep.subr.mxu0 0.0
    %418 = vmatpush2.msra.mxu0 0.0
    %419 = vmatprep.subr.mxu0 0.0
    %420 = vmatpush2.msra.mxu0 0.0
    %421 = vmatprep.subr.mxu0 0.0
    %422 = vmatpush2.msra.mxu0 0.0
    %423 = vmatprep.subr.mxu0 0.0
    %424 = vmatpush2.msra.mxu0 0.0
    %425 = vmatprep.subr.mxu0 0.0
    %426 = vmatpush2.msra.mxu0 0.0
    %427 = vmatprep.mubr.f32.mxu0 0.0
    %428 = vmatmul.mubr.f32.gmra.mxu0 %v361
    %v429 = vpop.f32.mrf.mxu0
    %v430 = vadd.f32 0.0, %v429
    %v431 = vpop.f32.mrf.mxu0
    %432 = vdwg.mxu0
    %v433 = vadd.f32 %v358, %v430
    %v434 = vxor.u32 %v433, 2147483648
    %v435 = vmul.f32 %v434, 1.442695
    %v436 = vpow.pop %v435
    %v437 = vadd.f32 %v436, 1.0
    %v438 = vrcp.pop %v437
    %v439 = vmul.f32 1.0, %v438
    %v440 = vtanh.pop %v433
    %v441 = vmul.f32 %v439, 0.0
    %443 = vrot.lane.b32.xlu0 %v440, 96
    %v444 = vpop.permute.xlu0 %443
    %v446 = vmul.f32 %v439, %v444
    %448 = vrot.lane.b32.xlu0 %v446, 16
    %v449 = vpop.permute.xlu0 %448
    %v451 = vadd.f32 %v441, %v449
    %v452 = vtanh.pop %v451
    %454 = vrot.lane.b32.xlu0 %v452, 32
    %v455 = vpop.permute.xlu0 %454
    %v457 = vmul.f32 %v439, %v455
    %vm458 = vcmask 64512
    %v459 = vsel %vm458, 0.0, 0
    %461 = vmatprep.subr.mxu0 0.0
    %462 = vmatpush1.msra.mxu0 0.0
    %463 = vmatprep.subr.mxu0 0.0
    %464 = vmatpush1.msra.mxu0 0.0
    %465 = vmatprep.subr.mxu0 0.0
    %466 = vmatpush1.msra.mxu0 0.0
    %467 = vmatprep.subr.mxu0 0.0
    %468 = vmatpush1.msra.mxu0 0.0
    %469 = vmatprep.subr.mxu0 0.0
    %470 = vmatpush1.msra.mxu0 0.0
    %471 = vmatprep.subr.mxu0 0.0
    %472 = vmatpush1.msra.mxu0 0.0
    %473 = vmatprep.subr.mxu0 0.0
    %474 = vmatpush1.msra.mxu0 0.0
    %475 = vmatprep.subr.mxu0 0.0
    %476 = vmatpush1.msra.mxu0 0.0
    %477 = vmatprep.subr.mxu0 0.0
    %478 = vmatpush1.msra.mxu0 0.0
    %479 = vmatprep.subr.mxu0 0.0
    %480 = vmatpush1.msra.mxu0 0.0
    %481 = vmatprep.subr.mxu0 0.0
    %482 = vmatpush1.msra.mxu0 0.0
    %483 = vmatprep.subr.mxu0 0.0
    %484 = vmatpush1.msra.mxu0 0.0
    %485 = vmatprep.subr.mxu0 0.0
    %486 = vmatpush1.msra.mxu0 0.0
    %487 = vmatprep.subr.mxu0 0.0
    %488 = vmatpush1.msra.mxu0 0.0
    %489 = vmatprep.subr.mxu0 0.0
    %490 = vmatpush1.msra.mxu0 0.0
    %491 = vmatprep.subr.mxu0 0.0
    %492 = vmatpush1.msra.mxu0 %v339
    %493 = vmatprep.subr.mxu0 0.0
    %494 = vmatpush2.msra.mxu0 0.0
    %495 = vmatprep.subr.mxu0 0.0
    %496 = vmatpush2.msra.mxu0 0.0
    %497 = vmatprep.subr.mxu0 0.0
    %498 = vmatpush2.msra.mxu0 0.0
    %499 = vmatprep.subr.mxu0 0.0
    %500 = vmatpush2.msra.mxu0 0.0
    %501 = vmatprep.subr.mxu0 0.0
    %502 = vmatpush2.msra.mxu0 0.0
    %503 = vmatprep.subr.mxu0 0.0
    %504 = vmatpush2.msra.mxu0 0.0
    %505 = vmatprep.subr.mxu0 0.0
    %506 = vmatpush2.msra.mxu0 0.0
    %507 = vmatprep.subr.mxu0 0.0
    %508 = vmatpush2.msra.mxu0 0.0
    %509 = vmatprep.subr.mxu0 0.0
    %510 = vmatpush2.msra.mxu0 0.0
    %511 = vmatprep.subr.mxu0 0.0
    %512 = vmatpush2.msra.mxu0 0.0
    %513 = vmatprep.subr.mxu0 0.0
    %514 = vmatpush2.msra.mxu0 0.0
    %515 = vmatprep.subr.mxu0 0.0
    %516 = vmatpush2.msra.mxu0 0.0
    %517 = vmatprep.subr.mxu0 0.0
    %518 = vmatpush2.msra.mxu0 0.0
    %519 = vmatprep.subr.mxu0 0.0
    %520 = vmatpush2.msra.mxu0 0.0
    %521 = vmatprep.subr.mxu0 0.0
    %522 = vmatpush2.msra.mxu0 0.0
    %523 = vmatprep.subr.mxu0 0.0
    %524 = vmatpush2.msra.mxu0 0.0
    %525 = vmatprep.mubr.f32.mxu0 0.0
    %526 = vmatmul.mubr.f32.gmra.mxu0 %v459
    %v527 = vpop.f32.mrf.mxu0
    %v528 = vadd.f32 0.0, %v527
    %v529 = vpop.f32.mrf.mxu0
    %530 = vdwg.mxu0
    %532 = vrot.lane.b32.xlu0 %v457, 80
    %v533 = vpop.permute.xlu0 %532
    %v534 = vsel %vm359, %v533, 0
    %536 = vmatprep.subr.mxu0 0.0
    %537 = vmatpush1.msra.mxu0 0.0
    %538 = vmatprep.subr.mxu0 0.0
    %539 = vmatpush1.msra.mxu0 0.0
    %540 = vmatprep.subr.mxu0 0.0
    %541 = vmatpush1.msra.mxu0 0.0
    %542 = vmatprep.subr.mxu0 0.0
    %543 = vmatpush1.msra.mxu0 0.0
    %544 = vmatprep.subr.mxu0 0.0
    %545 = vmatpush1.msra.mxu0 0.0
    %546 = vmatprep.subr.mxu0 0.0
    %547 = vmatpush1.msra.mxu0 0.0
    %548 = vmatprep.subr.mxu0 0.0
    %549 = vmatpush1.msra.mxu0 0.0
    %550 = vmatprep.subr.mxu0 0.0
    %551 = vmatpush1.msra.mxu0 0.0
    %552 = vmatprep.subr.mxu0 0.0
    %553 = vmatpush1.msra.mxu0 0.0
    %554 = vmatprep.subr.mxu0 0.0
    %555 = vmatpush1.msra.mxu0 0.0
    %556 = vmatprep.subr.mxu0 0.0
    %557 = vmatpush1.msra.mxu0 0.0
    %558 = vmatprep.subr.mxu0 0.0
    %559 = vmatpush1.msra.mxu0 0.0
    %560 = vmatprep.subr.mxu0 0.0
    %561 = vmatpush1.msra.mxu0 0.0
    %562 = vmatprep.subr.mxu0 0.0
    %563 = vmatpush1.msra.mxu0 0.0
    %564 = vmatprep.subr.mxu0 0.0
    %565 = vmatpush1.msra.mxu0 %v338
    %566 = vmatprep.subr.mxu0 0.0
    %567 = vmatpush1.msra.mxu0 %v337
    %568 = vmatprep.subr.mxu0 0.0
    %569 = vmatpush2.msra.mxu0 0.0
    %570 = vmatprep.subr.mxu0 0.0
    %571 = vmatpush2.msra.mxu0 0.0
    %572 = vmatprep.subr.mxu0 0.0
    %573 = vmatpush2.msra.mxu0 0.0
    %574 = vmatprep.subr.mxu0 0.0
    %575 = vmatpush2.msra.mxu0 0.0
    %576 = vmatprep.subr.mxu0 0.0
    %577 = vmatpush2.msra.mxu0 0.0
    %578 = vmatprep.subr.mxu0 0.0
    %579 = vmatpush2.msra.mxu0 0.0
    %580 = vmatprep.subr.mxu0 0.0
    %581 = vmatpush2.msra.mxu0 0.0
    %582 = vmatprep.subr.mxu0 0.0
    %583 = vmatpush2.msra.mxu0 0.0
    %584 = vmatprep.subr.mxu0 0.0
    %585 = vmatpush2.msra.mxu0 0.0
    %586 = vmatprep.subr.mxu0 0.0
    %587 = vmatpush2.msra.mxu0 0.0
    %588 = vmatprep.subr.mxu0 0.0
    %589 = vmatpush2.msra.mxu0 0.0
    %590 = vmatprep.subr.mxu0 0.0
    %591 = vmatpush2.msra.mxu0 0.0
    %592 = vmatprep.subr.mxu0 0.0
    %593 = vmatpush2.msra.mxu0 0.0
    %594 = vmatprep.subr.mxu0 0.0
    %595 = vmatpush2.msra.mxu0 0.0
    %596 = vmatprep.subr.mxu0 0.0
    %597 = vmatpush2.msra.mxu0 0.0
    %598 = vmatprep.subr.mxu0 0.0
    %599 = vmatpush2.msra.mxu0 0.0
    %600 = vmatprep.mubr.f32.mxu0 0.0
    %601 = vmatmul.mubr.f32.gmra.mxu0 %v534
    %v602 = vpop.f32.mrf.mxu0
    %v603 = vadd.f32 %v528, %v602
    %v604 = vpop.f32.mrf.mxu0
    %605 = vdwg.mxu0
    %v606 = vadd.f32 %v603, %v345
    %v607 = vxor.u32 %v606, 2147483648
    %v608 = vmul.f32 %v607, 1.442695
    %v609 = vpow.pop %v608
    %v610 = vadd.f32 %v609, 1.0
    %v611 = vrcp.pop %v610
    %v612 = vmul.f32 1.0, %v611
    %v613 = vtanh.pop %v606
    %v614 = vmul.f32 %v612, 0.0
    %616 = vrot.lane.b32.xlu0 %v613, 112
    %v617 = vpop.permute.xlu0 %616
    %v619 = vmul.f32 %v612, %v617
    %621 = vrot.lane.b32.xlu0 %v619, 8
    %v622 = vpop.permute.xlu0 %621
    %v624 = vadd.f32 %v614, %v622
    %v625 = vtanh.pop %v624
    %627 = vrot.lane.b32.xlu0 %v625, 16
    %v628 = vpop.permute.xlu0 %627
    %v630 = vmul.f32 %v612, %v628
    %v631 = vld [vmem:[#allocation2 + $0x8] sm:$0xff]
    %632 = vmatprep.subr.mxu0 0.0
    %633 = vmatpush1.msra.mxu0 0.0
    %634 = vmatprep.subr.mxu0 0.0
    %635 = vmatpush1.msra.mxu0 0.0
    %636 = vmatprep.subr.mxu0 0.0
    %637 = vmatpush1.msra.mxu0 0.0
    %638 = vmatprep.subr.mxu0 0.0
    %639 = vmatpush1.msra.mxu0 0.0
    %640 = vmatprep.subr.mxu0 0.0
    %641 = vmatpush1.msra.mxu0 0.0
    %642 = vmatprep.subr.mxu0 0.0
    %643 = vmatpush1.msra.mxu0 0.0
    %644 = vmatprep.subr.mxu0 0.0
    %645 = vmatpush1.msra.mxu0 0.0
    %646 = vmatprep.subr.mxu0 0.0
    %647 = vmatpush1.msra.mxu0 0.0
    %648 = vmatprep.subr.mxu0 0.0
    %649 = vmatpush1.msra.mxu0 0.0
    %650 = vmatprep.subr.mxu0 0.0
    %651 = vmatpush1.msra.mxu0 0.0
    %652 = vmatprep.subr.mxu0 0.0
    %653 = vmatpush1.msra.mxu0 0.0
    %654 = vmatprep.subr.mxu0 0.0
    %655 = vmatpush1.msra.mxu0 0.0
    %656 = vmatprep.subr.mxu0 0.0
    %657 = vmatpush1.msra.mxu0 0.0
    %658 = vmatprep.subr.mxu0 0.0
    %659 = vmatpush1.msra.mxu0 0.0
    %660 = vmatprep.subr.mxu0 0.0
    %661 = vmatpush1.msra.mxu0 %v336
    %662 = vmatprep.subr.mxu0 0.0
    %663 = vmatpush1.msra.mxu0 %v335
    %664 = vmatprep.subr.mxu0 0.0
    %665 = vmatpush2.msra.mxu0 0.0
    %666 = vmatprep.subr.mxu0 0.0
    %667 = vmatpush2.msra.mxu0 0.0
    %668 = vmatprep.subr.mxu0 0.0
    %669 = vmatpush2.msra.mxu0 0.0
    %670 = vmatprep.subr.mxu0 0.0
    %671 = vmatpush2.msra.mxu0 0.0
    %672 = vmatprep.subr.mxu0 0.0
    %673 = vmatpush2.msra.mxu0 0.0
    %674 = vmatprep.subr.mxu0 0.0
    %675 = vmatpush2.msra.mxu0 0.0
    %676 = vmatprep.subr.mxu0 0.0
    %677 = vmatpush2.msra.mxu0 0.0
    %678 = vmatprep.subr.mxu0 0.0
    %679 = vmatpush2.msra.mxu0 0.0
    %680 = vmatprep.subr.mxu0 0.0
    %681 = vmatpush2.msra.mxu0 0.0
    %682 = vmatprep.subr.mxu0 0.0
    %683 = vmatpush2.msra.mxu0 0.0
    %684 = vmatprep.subr.mxu0 0.0
    %685 = vmatpush2.msra.mxu0 0.0
    %686 = vmatprep.subr.mxu0 0.0
    %687 = vmatpush2.msra.mxu0 0.0
    %688 = vmatprep.subr.mxu0 0.0
    %689 = vmatpush2.msra.mxu0 0.0
    %690 = vmatprep.subr.mxu0 0.0
    %691 = vmatpush2.msra.mxu0 0.0
    %692 = vmatprep.subr.mxu0 0.0
    %693 = vmatpush2.msra.mxu0 0.0
    %694 = vmatprep.subr.mxu0 0.0
    %695 = vmatpush2.msra.mxu0 0.0
    %696 = vmatprep.mubr.f32.mxu0 0.0
    %697 = vmatmul.mubr.f32.gmra.mxu0 %v534
    %v698 = vpop.f32.mrf.mxu0
    %v699 = vadd.f32 0.0, %v698
    %v700 = vpop.f32.mrf.mxu0
    %701 = vdwg.mxu0
    %v702 = vadd.f32 %v631, %v699
    %v703 = vxor.u32 %v702, 2147483648
    %v704 = vmul.f32 %v703, 1.442695
    %v705 = vpow.pop %v704
    %v706 = vadd.f32 %v705, 1.0
    %v707 = vrcp.pop %v706
    %v708 = vmul.f32 1.0, %v707
    %v709 = vtanh.pop %v702
    %v710 = vmul.f32 %v708, %v451
    %712 = vrot.lane.b32.xlu0 %v709, 96
    %v713 = vpop.permute.xlu0 %712
    %v715 = vmul.f32 %v708, %v713
    %717 = vrot.lane.b32.xlu0 %v715, 16
    %v718 = vpop.permute.xlu0 %717
    %v720 = vadd.f32 %v710, %v718
    %v721 = vtanh.pop %v720
    %723 = vrot.lane.b32.xlu0 %v721, 32
    %v724 = vpop.permute.xlu0 %723
    %v726 = vmul.f32 %v708, %v724
    %728 = vrot.lane.b32.xlu0 %v630, 104
    %v729 = vpop.permute.xlu0 %728
    %v730 = vsel %vm458, %v729, 0
    %732 = vmatprep.subr.mxu0 0.0
    %733 = vmatpush1.msra.mxu0 0.0
    %734 = vmatprep.subr.mxu0 0.0
    %735 = vmatpush1.msra.mxu0 0.0
    %736 = vmatprep.subr.mxu0 0.0
    %737 = vmatpush1.msra.mxu0 0.0
    %738 = vmatprep.subr.mxu0 0.0
    %739 = vmatpush1.msra.mxu0 0.0
    %740 = vmatprep.subr.mxu0 0.0
    %741 = vmatpush1.msra.mxu0 0.0
    %742 = vmatprep.subr.mxu0 0.0
    %743 = vmatpush1.msra.mxu0 0.0
    %744 = vmatprep.subr.mxu0 0.0
    %745 = vmatpush1.msra.mxu0 0.0
    %746 = vmatprep.subr.mxu0 0.0
    %747 = vmatpush1.msra.mxu0 0.0
    %748 = vmatprep.subr.mxu0 0.0
    %749 = vmatpush1.msra.mxu0 0.0
    %750 = vmatprep.subr.mxu0 0.0
    %751 = vmatpush1.msra.mxu0 0.0
    %752 = vmatprep.subr.mxu0 0.0
    %753 = vmatpush1.msra.mxu0 0.0
    %754 = vmatprep.subr.mxu0 0.0
    %755 = vmatpush1.msra.mxu0 0.0
    %756 = vmatprep.subr.mxu0 0.0
    %757 = vmatpush1.msra.mxu0 0.0
    %758 = vmatprep.subr.mxu0 0.0
    %759 = vmatpush1.msra.mxu0 0.0
    %760 = vmatprep.subr.mxu0 0.0
    %761 = vmatpush1.msra.mxu0 0.0
    %762 = vmatprep.subr.mxu0 0.0
    %763 = vmatpush1.msra.mxu0 %v339
    %764 = vmatprep.subr.mxu0 0.0
    %765 = vmatpush2.msra.mxu0 0.0
    %766 = vmatprep.subr.mxu0 0.0
    %767 = vmatpush2.msra.mxu0 0.0
    %768 = vmatprep.subr.mxu0 0.0
    %769 = vmatpush2.msra.mxu0 0.0
    %770 = vmatprep.subr.mxu0 0.0
    %771 = vmatpush2.msra.mxu0 0.0
    %772 = vmatprep.subr.mxu0 0.0
    %773 = vmatpush2.msra.mxu0 0.0
    %774 = vmatprep.subr.mxu0 0.0
    %775 = vmatpush2.msra.mxu0 0.0
    %776 = vmatprep.subr.mxu0 0.0
    %777 = vmatpush2.msra.mxu0 0.0
    %778 = vmatprep.subr.mxu0 0.0
    %779 = vmatpush2.msra.mxu0 0.0
    %780 = vmatprep.subr.mxu0 0.0
    %781 = vmatpush2.msra.mxu0 0.0
    %782 = vmatprep.subr.mxu0 0.0
    %783 = vmatpush2.msra.mxu0 0.0
    %784 = vmatprep.subr.mxu0 0.0
    %785 = vmatpush2.msra.mxu0 0.0
    %786 = vmatprep.subr.mxu0 0.0
    %787 = vmatpush2.msra.mxu0 0.0
    %788 = vmatprep.subr.mxu0 0.0
    %789 = vmatpush2.msra.mxu0 0.0
    %790 = vmatprep.subr.mxu0 0.0
    %791 = vmatpush2.msra.mxu0 0.0
    %792 = vmatprep.subr.mxu0 0.0
    %793 = vmatpush2.msra.mxu0 0.0
    %794 = vmatprep.subr.mxu0 0.0
    %795 = vmatpush2.msra.mxu0 0.0
    %796 = vmatprep.mubr.f32.mxu0 0.0
    %797 = vmatmul.mubr.f32.gmra.mxu0 %v730
    %v798 = vpop.f32.mrf.mxu0
    %v799 = vadd.f32 0.0, %v798
    %v800 = vpop.f32.mrf.mxu0
    %801 = vdwg.mxu0
    %803 = vrot.lane.b32.xlu0 %v726, 80
    %v804 = vpop.permute.xlu0 %803
    %v805 = vsel %vm359, %v804, 0
    %807 = vmatprep.subr.mxu0 0.0
    %808 = vmatpush1.msra.mxu0 0.0
    %809 = vmatprep.subr.mxu0 0.0
    %810 = vmatpush1.msra.mxu0 0.0
    %811 = vmatprep.subr.mxu0 0.0
    %812 = vmatpush1.msra.mxu0 0.0
    %813 = vmatprep.subr.mxu0 0.0
    %814 = vmatpush1.msra.mxu0 0.0
    %815 = vmatprep.subr.mxu0 0.0
    %816 = vmatpush1.msra.mxu0 0.0
    %817 = vmatprep.subr.mxu0 0.0
    %818 = vmatpush1.msra.mxu0 0.0
    %819 = vmatprep.subr.mxu0 0.0
    %820 = vmatpush1.msra.mxu0 0.0
    %821 = vmatprep.subr.mxu0 0.0
    %822 = vmatpush1.msra.mxu0 0.0
    %823 = vmatprep.subr.mxu0 0.0
    %824 = vmatpush1.msra.mxu0 0.0
    %825 = vmatprep.subr.mxu0 0.0
    %826 = vmatpush1.msra.mxu0 0.0
    %827 = vmatprep.subr.mxu0 0.0
    %828 = vmatpush1.msra.mxu0 0.0
    %829 = vmatprep.subr.mxu0 0.0
    %830 = vmatpush1.msra.mxu0 0.0
    %831 = vmatprep.subr.mxu0 0.0
    %832 = vmatpush1.msra.mxu0 0.0
    %833 = vmatprep.subr.mxu0 0.0
    %834 = vmatpush1.msra.mxu0 0.0
    %835 = vmatprep.subr.mxu0 0.0
    %836 = vmatpush1.msra.mxu0 %v338
    %837 = vmatprep.subr.mxu0 0.0
    %838 = vmatpush1.msra.mxu0 %v337
    %839 = vmatprep.subr.mxu0 0.0
    %840 = vmatpush2.msra.mxu0 0.0
    %841 = vmatprep.subr.mxu0 0.0
    %842 = vmatpush2.msra.mxu0 0.0
    %843 = vmatprep.subr.mxu0 0.0
    %844 = vmatpush2.msra.mxu0 0.0
    %845 = vmatprep.subr.mxu0 0.0
    %846 = vmatpush2.msra.mxu0 0.0
    %847 = vmatprep.subr.mxu0 0.0
    %848 = vmatpush2.msra.mxu0 0.0
    %849 = vmatprep.subr.mxu0 0.0
    %850 = vmatpush2.msra.mxu0 0.0
    %851 = vmatprep.subr.mxu0 0.0
    %852 = vmatpush2.msra.mxu0 0.0
    %853 = vmatprep.subr.mxu0 0.0
    %854 = vmatpush2.msra.mxu0 0.0
    %855 = vmatprep.subr.mxu0 0.0
    %856 = vmatpush2.msra.mxu0 0.0
    %857 = vmatprep.subr.mxu0 0.0
    %858 = vmatpush2.msra.mxu0 0.0
    %859 = vmatprep.subr.mxu0 0.0
    %860 = vmatpush2.msra.mxu0 0.0
    %861 = vmatprep.subr.mxu0 0.0
    %862 = vmatpush2.msra.mxu0 0.0
    %863 = vmatprep.subr.mxu0 0.0
    %864 = vmatpush2.msra.mxu0 0.0
    %865 = vmatprep.subr.mxu0 0.0
    %866 = vmatpush2.msra.mxu0 0.0
    %867 = vmatprep.subr.mxu0 0.0
    %868 = vmatpush2.msra.mxu0 0.0
    %869 = vmatprep.subr.mxu0 0.0
    %870 = vmatpush2.msra.mxu0 0.0
    %871 = vmatprep.mubr.f32.mxu0 0.0
    %872 = vmatmul.mubr.f32.gmra.mxu0 %v805
    %v873 = vpop.f32.mrf.mxu0
    %v874 = vadd.f32 %v799, %v873
    %v875 = vpop.f32.mrf.mxu0
    %876 = vdwg.mxu0
    %v877 = vadd.f32 %v874, %v345
    %v878 = vxor.u32 %v877, 2147483648
    %v879 = vmul.f32 %v878, 1.442695
    %v880 = vpow.pop %v879
    %v881 = vadd.f32 %v880, 1.0
    %v882 = vrcp.pop %v881
    %v883 = vmul.f32 1.0, %v882
    %v884 = vtanh.pop %v877
    %v885 = vmul.f32 %v883, %v624
    %887 = vrot.lane.b32.xlu0 %v884, 112
    %v888 = vpop.permute.xlu0 %887
    %v890 = vmul.f32 %v883, %v888
    %892 = vrot.lane.b32.xlu0 %v890, 8
    %v893 = vpop.permute.xlu0 %892
    %v895 = vadd.f32 %v885, %v893
    %v896 = vtanh.pop %v895
    %898 = vrot.lane.b32.xlu0 %v896, 16
    %v899 = vpop.permute.xlu0 %898
    %v901 = vmul.f32 %v883, %v899
    %v902 = vld [vmem:[#allocation2 + $0x10] sm:$0xff]
    %903 = vmatprep.subr.mxu0 0.0
    %904 = vmatpush1.msra.mxu0 0.0
    %905 = vmatprep.subr.mxu0 0.0
    %906 = vmatpush1.msra.mxu0 0.0
    %907 = vmatprep.subr.mxu0 0.0
    %908 = vmatpush1.msra.mxu0 0.0
    %909 = vmatprep.subr.mxu0 0.0
    %910 = vmatpush1.msra.mxu0 0.0
    %911 = vmatprep.subr.mxu0 0.0
    %912 = vmatpush1.msra.mxu0 0.0
    %913 = vmatprep.subr.mxu0 0.0
    %914 = vmatpush1.msra.mxu0 0.0
    %915 = vmatprep.subr.mxu0 0.0
    %916 = vmatpush1.msra.mxu0 0.0
    %917 = vmatprep.subr.mxu0 0.0
    %918 = vmatpush1.msra.mxu0 0.0
    %919 = vmatprep.subr.mxu0 0.0
    %920 = vmatpush1.msra.mxu0 0.0
    %921 = vmatprep.subr.mxu0 0.0
    %922 = vmatpush1.msra.mxu0 0.0
    %923 = vmatprep.subr.mxu0 0.0
    %924 = vmatpush1.msra.mxu0 0.0
    %925 = vmatprep.subr.mxu0 0.0
    %926 = vmatpush1.msra.mxu0 0.0
    %927 = vmatprep.subr.mxu0 0.0
    %928 = vmatpush1.msra.mxu0 0.0
    %929 = vmatprep.subr.mxu0 0.0
    %930 = vmatpush1.msra.mxu0 0.0
    %931 = vmatprep.subr.mxu0 0.0
    %932 = vmatpush1.msra.mxu0 %v336
    %933 = vmatprep.subr.mxu0 0.0
    %934 = vmatpush1.msra.mxu0 %v335
    %935 = vmatprep.subr.mxu0 0.0
    %936 = vmatpush2.msra.mxu0 0.0
    %937 = vmatprep.subr.mxu0 0.0
    %938 = vmatpush2.msra.mxu0 0.0
    %939 = vmatprep.subr.mxu0 0.0
    %940 = vmatpush2.msra.mxu0 0.0
    %941 = vmatprep.subr.mxu0 0.0
    %942 = vmatpush2.msra.mxu0 0.0
    %943 = vmatprep.subr.mxu0 0.0
    %944 = vmatpush2.msra.mxu0 0.0
    %945 = vmatprep.subr.mxu0 0.0
    %946 = vmatpush2.msra.mxu0 0.0
    %947 = vmatprep.subr.mxu0 0.0
    %948 = vmatpush2.msra.mxu0 0.0
    %949 = vmatprep.subr.mxu0 0.0
    %950 = vmatpush2.msra.mxu0 0.0
    %951 = vmatprep.subr.mxu0 0.0
    %952 = vmatpush2.msra.mxu0 0.0
    %953 = vmatprep.subr.mxu0 0.0
    %954 = vmatpush2.msra.mxu0 0.0
    %955 = vmatprep.subr.mxu0 0.0
    %956 = vmatpush2.msra.mxu0 0.0
    %957 = vmatprep.subr.mxu0 0.0
    %958 = vmatpush2.msra.mxu0 0.0
    %959 = vmatprep.subr.mxu0 0.0
    %960 = vmatpush2.msra.mxu0 0.0
    %961 = vmatprep.subr.mxu0 0.0
    %962 = vmatpush2.msra.mxu0 0.0
    %963 = vmatprep.subr.mxu0 0.0
    %964 = vmatpush2.msra.mxu0 0.0
    %965 = vmatprep.subr.mxu0 0.0
    %966 = vmatpush2.msra.mxu0 0.0
    %967 = vmatprep.mubr.f32.mxu0 0.0
    %968 = vmatmul.mubr.f32.gmra.mxu0 %v805
    %v969 = vpop.f32.mrf.mxu0
    %v970 = vadd.f32 0.0, %v969
    %v971 = vpop.f32.mrf.mxu0
    %972 = vdwg.mxu0
    %v973 = vadd.f32 %v902, %v970
    %v974 = vxor.u32 %v973, 2147483648
    %v975 = vmul.f32 %v974, 1.442695
    %v976 = vpow.pop %v975
    %v977 = vadd.f32 %v976, 1.0
    %v978 = vrcp.pop %v977
    %v979 = vmul.f32 1.0, %v978
    %v980 = vtanh.pop %v973
    %v981 = vmul.f32 %v979, %v720
    %983 = vrot.lane.b32.xlu0 %v980, 96
    %v984 = vpop.permute.xlu0 %983
    %v986 = vmul.f32 %v979, %v984
    %988 = vrot.lane.b32.xlu0 %v986, 16
    %v989 = vpop.permute.xlu0 %988
    %v991 = vadd.f32 %v981, %v989
    %v992 = vtanh.pop %v991
    %994 = vrot.lane.b32.xlu0 %v992, 32
    %v995 = vpop.permute.xlu0 %994
    %v997 = vmul.f32 %v979, %v995
    %999 = vrot.lane.b32.xlu0 %v901, 104
    %v1000 = vpop.permute.xlu0 %999
    %v1001 = vsel %vm458, %v1000, 0
    %1003 = vmatprep.subr.mxu0 0.0
    %1004 = vmatpush1.msra.mxu0 0.0
    %1005 = vmatprep.subr.mxu0 0.0
    %1006 = vmatpush1.msra.mxu0 0.0
    %1007 = vmatprep.subr.mxu0 0.0
    %1008 = vmatpush1.msra.mxu0 0.0
    %1009 = vmatprep.subr.mxu0 0.0
    %1010 = vmatpush1.msra.mxu0 0.0
    %1011 = vmatprep.subr.mxu0 0.0
    %1012 = vmatpush1.msra.mxu0 0.0
    %1013 = vmatprep.subr.mxu0 0.0
    %1014 = vmatpush1.msra.mxu0 0.0
    %1015 = vmatprep.subr.mxu0 0.0
    %1016 = vmatpush1.msra.mxu0 0.0
    %1017 = vmatprep.subr.mxu0 0.0
    %1018 = vmatpush1.msra.mxu0 0.0
    %1019 = vmatprep.subr.mxu0 0.0
    %1020 = vmatpush1.msra.mxu0 0.0
    %1021 = vmatprep.subr.mxu0 0.0
    %1022 = vmatpush1.msra.mxu0 0.0
    %1023 = vmatprep.subr.mxu0 0.0
    %1024 = vmatpush1.msra.mxu0 0.0
    %1025 = vmatprep.subr.mxu0 0.0
    %1026 = vmatpush1.msra.mxu0 0.0
    %1027 = vmatprep.subr.mxu0 0.0
    %1028 = vmatpush1.msra.mxu0 0.0
    %1029 = vmatprep.subr.mxu0 0.0
    %1030 = vmatpush1.msra.mxu0 0.0
    %1031 = vmatprep.subr.mxu0 0.0
    %1032 = vmatpush1.msra.mxu0 0.0
    %1033 = vmatprep.subr.mxu0 0.0
    %1034 = vmatpush1.msra.mxu0 %v339
    %1035 = vmatprep.subr.mxu0 0.0
    %1036 = vmatpush2.msra.mxu0 0.0
    %1037 = vmatprep.subr.mxu0 0.0
    %1038 = vmatpush2.msra.mxu0 0.0
    %1039 = vmatprep.subr.mxu0 0.0
    %1040 = vmatpush2.msra.mxu0 0.0
    %1041 = vmatprep.subr.mxu0 0.0
    %1042 = vmatpush2.msra.mxu0 0.0
    %1043 = vmatprep.subr.mxu0 0.0
    %1044 = vmatpush2.msra.mxu0 0.0
    %1045 = vmatprep.subr.mxu0 0.0
    %1046 = vmatpush2.msra.mxu0 0.0
    %1047 = vmatprep.subr.mxu0 0.0
    %1048 = vmatpush2.msra.mxu0 0.0
    %1049 = vmatprep.subr.mxu0 0.0
    %1050 = vmatpush2.msra.mxu0 0.0
    %1051 = vmatprep.subr.mxu0 0.0
    %1052 = vmatpush2.msra.mxu0 0.0
    %1053 = vmatprep.subr.mxu0 0.0
    %1054 = vmatpush2.msra.mxu0 0.0
    %1055 = vmatprep.subr.mxu0 0.0
    %1056 = vmatpush2.msra.mxu0 0.0
    %1057 = vmatprep.subr.mxu0 0.0
    %1058 = vmatpush2.msra.mxu0 0.0
    %1059 = vmatprep.subr.mxu0 0.0
    %1060 = vmatpush2.msra.mxu0 0.0
    %1061 = vmatprep.subr.mxu0 0.0
    %1062 = vmatpush2.msra.mxu0 0.0
    %1063 = vmatprep.subr.mxu0 0.0
    %1064 = vmatpush2.msra.mxu0 0.0
    %1065 = vmatprep.subr.mxu0 0.0
    %1066 = vmatpush2.msra.mxu0 0.0
    %1067 = vmatprep.mubr.f32.mxu0 0.0
    %1068 = vmatmul.mubr.f32.gmra.mxu0 %v1001
    %v1069 = vpop.f32.mrf.mxu0
    %v1070 = vadd.f32 0.0, %v1069
    %v1071 = vpop.f32.mrf.mxu0
    %1072 = vdwg.mxu0
    %1074 = vrot.lane.b32.xlu0 %v997, 80
    %v1075 = vpop.permute.xlu0 %1074
    %v1076 = vsel %vm359, %v1075, 0
    %1078 = vmatprep.subr.mxu0 0.0
    %1079 = vmatpush1.msra.mxu0 0.0
    %1080 = vmatprep.subr.mxu0 0.0
    %1081 = vmatpush1.msra.mxu0 0.0
    %1082 = vmatprep.subr.mxu0 0.0
    %1083 = vmatpush1.msra.mxu0 0.0
    %1084 = vmatprep.subr.mxu0 0.0
    %1085 = vmatpush1.msra.mxu0 0.0
    %1086 = vmatprep.subr.mxu0 0.0
    %1087 = vmatpush1.msra.mxu0 0.0
    %1088 = vmatprep.subr.mxu0 0.0
    %1089 = vmatpush1.msra.mxu0 0.0
    %1090 = vmatprep.subr.mxu0 0.0
    %1091 = vmatpush1.msra.mxu0 0.0
    %1092 = vmatprep.subr.mxu0 0.0
    %1093 = vmatpush1.msra.mxu0 0.0
    %1094 = vmatprep.subr.mxu0 0.0
    %1095 = vmatpush1.msra.mxu0 0.0
    %1096 = vmatprep.subr.mxu0 0.0
    %1097 = vmatpush1.msra.mxu0 0.0
    %1098 = vmatprep.subr.mxu0 0.0
    %1099 = vmatpush1.msra.mxu0 0.0
    %1100 = vmatprep.subr.mxu0 0.0
    %1101 = vmatpush1.msra.mxu0 0.0
    %1102 = vmatprep.subr.mxu0 0.0
    %1103 = vmatpush1.msra.mxu0 0.0
    %1104 = vmatprep.subr.mxu0 0.0
    %1105 = vmatpush1.msra.mxu0 0.0
    %1106 = vmatprep.subr.mxu0 0.0
    %1107 = vmatpush1.msra.mxu0 %v338
    %1108 = vmatprep.subr.mxu0 0.0
    %1109 = vmatpush1.msra.mxu0 %v337
    %1110 = vmatprep.subr.mxu0 0.0
    %1111 = vmatpush2.msra.mxu0 0.0
    %1112 = vmatprep.subr.mxu0 0.0
    %1113 = vmatpush2.msra.mxu0 0.0
    %1114 = vmatprep.subr.mxu0 0.0
    %1115 = vmatpush2.msra.mxu0 0.0
    %1116 = vmatprep.subr.mxu0 0.0
    %1117 = vmatpush2.msra.mxu0 0.0
    %1118 = vmatprep.subr.mxu0 0.0
    %1119 = vmatpush2.msra.mxu0 0.0
    %1120 = vmatprep.subr.mxu0 0.0
    %1121 = vmatpush2.msra.mxu0 0.0
    %1122 = vmatprep.subr.mxu0 0.0
    %1123 = vmatpush2.msra.mxu0 0.0
    %1124 = vmatprep.subr.mxu0 0.0
    %1125 = vmatpush2.msra.mxu0 0.0
    %1126 = vmatprep.subr.mxu0 0.0
    %1127 = vmatpush2.msra.mxu0 0.0
    %1128 = vmatprep.subr.mxu0 0.0
    %1129 = vmatpush2.msra.mxu0 0.0
    %1130 = vmatprep.subr.mxu0 0.0
    %1131 = vmatpush2.msra.mxu0 0.0
    %1132 = vmatprep.subr.mxu0 0.0
    %1133 = vmatpush2.msra.mxu0 0.0
    %1134 = vmatprep.subr.mxu0 0.0
    %1135 = vmatpush2.msra.mxu0 0.0
    %1136 = vmatprep.subr.mxu0 0.0
    %1137 = vmatpush2.msra.mxu0 0.0
    %1138 = vmatprep.subr.mxu0 0.0
    %1139 = vmatpush2.msra.mxu0 0.0
    %1140 = vmatprep.subr.mxu0 0.0
    %1141 = vmatpush2.msra.mxu0 0.0
    %1142 = vmatprep.mubr.f32.mxu0 0.0
    %1143 = vmatmul.mubr.f32.gmra.mxu0 %v1076
    %v1144 = vpop.f32.mrf.mxu0
    %v1145 = vadd.f32 %v1070, %v1144
    %v1146 = vpop.f32.mrf.mxu0
    %1147 = vdwg.mxu0
    %v1148 = vadd.f32 %v1145, %v345
    %v1149 = vxor.u32 %v1148, 2147483648
    %v1150 = vmul.f32 %v1149, 1.442695
    %v1151 = vpow.pop %v1150
    %v1152 = vadd.f32 %v1151, 1.0
    %v1153 = vrcp.pop %v1152
    %v1154 = vmul.f32 1.0, %v1153
    %v1155 = vtanh.pop %v1148
    %v1156 = vmul.f32 %v1154, %v895
    %1158 = vrot.lane.b32.xlu0 %v1155, 112
    %v1159 = vpop.permute.xlu0 %1158
    %v1161 = vmul.f32 %v1154, %v1159
    %1163 = vrot.lane.b32.xlu0 %v1161, 8
    %v1164 = vpop.permute.xlu0 %1163
    %v1166 = vadd.f32 %v1156, %v1164
    %v1167 = vtanh.pop %v1166
    %1169 = vrot.lane.b32.xlu0 %v1167, 16
    %v1170 = vpop.permute.xlu0 %1169
    %v1172 = vmul.f32 %v1154, %v1170
    %v1173 = vld [vmem:[#allocation2 + $0x18] sm:$0xff]
    %1174 = vmatprep.subr.mxu0 0.0
    %1175 = vmatpush1.msra.mxu0 0.0
    %1176 = vmatprep.subr.mxu0 0.0
    %1177 = vmatpush1.msra.mxu0 0.0
    %1178 = vmatprep.subr.mxu0 0.0
    %1179 = vmatpush1.msra.mxu0 0.0
    %1180 = vmatprep.subr.mxu0 0.0
    %1181 = vmatpush1.msra.mxu0 0.0
    %1182 = vmatprep.subr.mxu0 0.0
    %1183 = vmatpush1.msra.mxu0 0.0
    %1184 = vmatprep.subr.mxu0 0.0
    %1185 = vmatpush1.msra.mxu0 0.0
    %1186 = vmatprep.subr.mxu0 0.0
    %1187 = vmatpush1.msra.mxu0 0.0
    %1188 = vmatprep.subr.mxu0 0.0
    %1189 = vmatpush1.msra.mxu0 0.0
    %1190 = vmatprep.subr.mxu0 0.0
    %1191 = vmatpush1.msra.mxu0 0.0
    %1192 = vmatprep.subr.mxu0 0.0
    %1193 = vmatpush1.msra.mxu0 0.0
    %1194 = vmatprep.subr.mxu0 0.0
    %1195 = vmatpush1.msra.mxu0 0.0
    %1196 = vmatprep.subr.mxu0 0.0
    %1197 = vmatpush1.msra.mxu0 0.0
    %1198 = vmatprep.subr.mxu0 0.0
    %1199 = vmatpush1.msra.mxu0 0.0
    %1200 = vmatprep.subr.mxu0 0.0
    %1201 = vmatpush1.msra.mxu0 0.0
    %1202 = vmatprep.subr.mxu0 0.0
    %1203 = vmatpush1.msra.mxu0 %v336
    %1204 = vmatprep.subr.mxu0 0.0
    %1205 = vmatpush1.msra.mxu0 %v335
    %1206 = vmatprep.subr.mxu0 0.0
    %1207 = vmatpush2.msra.mxu0 0.0
    %1208 = vmatprep.subr.mxu0 0.0
    %1209 = vmatpush2.msra.mxu0 0.0
    %1210 = vmatprep.subr.mxu0 0.0
    %1211 = vmatpush2.msra.mxu0 0.0
    %1212 = vmatprep.subr.mxu0 0.0
    %1213 = vmatpush2.msra.mxu0 0.0
    %1214 = vmatprep.subr.mxu0 0.0
    %1215 = vmatpush2.msra.mxu0 0.0
    %1216 = vmatprep.subr.mxu0 0.0
    %1217 = vmatpush2.msra.mxu0 0.0
    %1218 = vmatprep.subr.mxu0 0.0
    %1219 = vmatpush2.msra.mxu0 0.0
    %1220 = vmatprep.subr.mxu0 0.0
    %1221 = vmatpush2.msra.mxu0 0.0
    %1222 = vmatprep.subr.mxu0 0.0
    %1223 = vmatpush2.msra.mxu0 0.0
    %1224 = vmatprep.subr.mxu0 0.0
    %1225 = vmatpush2.msra.mxu0 0.0
    %1226 = vmatprep.subr.mxu0 0.0
    %1227 = vmatpush2.msra.mxu0 0.0
    %1228 = vmatprep.subr.mxu0 0.0
    %1229 = vmatpush2.msra.mxu0 0.0
    %1230 = vmatprep.subr.mxu0 0.0
    %1231 = vmatpush2.msra.mxu0 0.0
    %1232 = vmatprep.subr.mxu0 0.0
    %1233 = vmatpush2.msra.mxu0 0.0
    %1234 = vmatprep.subr.mxu0 0.0
    %1235 = vmatpush2.msra.mxu0 0.0
    %1236 = vmatprep.subr.mxu0 0.0
    %1237 = vmatpush2.msra.mxu0 0.0
    %1238 = vmatprep.mubr.f32.mxu0 0.0
    %1239 = vmatmul.mubr.f32.gmra.mxu0 %v1076
    %v1240 = vpop.f32.mrf.mxu0
    %v1241 = vadd.f32 0.0, %v1240
    %v1242 = vpop.f32.mrf.mxu0
    %1243 = vdwg.mxu0
    %v1244 = vadd.f32 %v1173, %v1241
    %v1245 = vxor.u32 %v1244, 2147483648
    %v1246 = vmul.f32 %v1245, 1.442695
    %v1247 = vpow.pop %v1246
    %v1248 = vadd.f32 %v1247, 1.0
    %v1249 = vrcp.pop %v1248
    %v1250 = vmul.f32 1.0, %v1249
    %v1251 = vtanh.pop %v1244
    %v1252 = vmul.f32 %v1250, %v991
    %1254 = vrot.lane.b32.xlu0 %v1251, 96
    %v1255 = vpop.permute.xlu0 %1254
    %v1257 = vmul.f32 %v1250, %v1255
    %1259 = vrot.lane.b32.xlu0 %v1257, 16
    %v1260 = vpop.permute.xlu0 %1259
    %v1262 = vadd.f32 %v1252, %v1260
    %v1263 = vtanh.pop %v1262
    %1265 = vrot.lane.b32.xlu0 %v1263, 32
    %v1266 = vpop.permute.xlu0 %1265
    %v1268 = vmul.f32 %v1250, %v1266
    %1270 = vrot.lane.b32.xlu0 %v1172, 104
    %v1271 = vpop.permute.xlu0 %1270
    %v1272 = vsel %vm458, %v1271, 0
    %1274 = vmatprep.subr.mxu0 0.0
    %1275 = vmatpush1.msra.mxu0 0.0
    %1276 = vmatprep.subr.mxu0 0.0
    %1277 = vmatpush1.msra.mxu0 0.0
    %1278 = vmatprep.subr.mxu0 0.0
    %1279 = vmatpush1.msra.mxu0 0.0
    %1280 = vmatprep.subr.mxu0 0.0
    %1281 = vmatpush1.msra.mxu0 0.0
    %1282 = vmatprep.subr.mxu0 0.0
    %1283 = vmatpush1.msra.mxu0 0.0
    %1284 = vmatprep.subr.mxu0 0.0
    %1285 = vmatpush1.msra.mxu0 0.0
    %1286 = vmatprep.subr.mxu0 0.0
    %1287 = vmatpush1.msra.mxu0 0.0
    %1288 = vmatprep.subr.mxu0 0.0
    %1289 = vmatpush1.msra.mxu0 0.0
    %1290 = vmatprep.subr.mxu0 0.0
    %1291 = vmatpush1.msra.mxu0 0.0
    %1292 = vmatprep.subr.mxu0 0.0
    %1293 = vmatpush1.msra.mxu0 0.0
    %1294 = vmatprep.subr.mxu0 0.0
    %1295 = vmatpush1.msra.mxu0 0.0
    %1296 = vmatprep.subr.mxu0 0.0
    %1297 = vmatpush1.msra.mxu0 0.0
    %1298 = vmatprep.subr.mxu0 0.0
    %1299 = vmatpush1.msra.mxu0 0.0
    %1300 = vmatprep.subr.mxu0 0.0
    %1301 = vmatpush1.msra.mxu0 0.0
    %1302 = vmatprep.subr.mxu0 0.0
    %1303 = vmatpush1.msra.mxu0 0.0
    %1304 = vmatprep.subr.mxu0 0.0
    %1305 = vmatpush1.msra.mxu0 %v339
    %1306 = vmatprep.subr.mxu0 0.0
    %1307 = vmatpush2.msra.mxu0 0.0
    %1308 = vmatprep.subr.mxu0 0.0
    %1309 = vmatpush2.msra.mxu0 0.0
    %1310 = vmatprep.subr.mxu0 0.0
    %1311 = vmatpush2.msra.mxu0 0.0
    %1312 = vmatprep.subr.mxu0 0.0
    %1313 = vmatpush2.msra.mxu0 0.0
    %1314 = vmatprep.subr.mxu0 0.0
    %1315 = vmatpush2.msra.mxu0 0.0
    %1316 = vmatprep.subr.mxu0 0.0
    %1317 = vmatpush2.msra.mxu0 0.0
    %1318 = vmatprep.subr.mxu0 0.0
    %1319 = vmatpush2.msra.mxu0 0.0
    %1320 = vmatprep.subr.mxu0 0.0
    %1321 = vmatpush2.msra.mxu0 0.0
    %1322 = vmatprep.subr.mxu0 0.0
    %1323 = vmatpush2.msra.mxu0 0.0
    %1324 = vmatprep.subr.mxu0 0.0
    %1325 = vmatpush2.msra.mxu0 0.0
    %1326 = vmatprep.subr.mxu0 0.0
    %1327 = vmatpush2.msra.mxu0 0.0
    %1328 = vmatprep.subr.mxu0 0.0
    %1329 = vmatpush2.msra.mxu0 0.0
    %1330 = vmatprep.subr.mxu0 0.0
    %1331 = vmatpush2.msra.mxu0 0.0
    %1332 = vmatprep.subr.mxu0 0.0
    %1333 = vmatpush2.msra.mxu0 0.0
    %1334 = vmatprep.subr.mxu0 0.0
    %1335 = vmatpush2.msra.mxu0 0.0
    %1336 = vmatprep.subr.mxu0 0.0
    %1337 = vmatpush2.msra.mxu0 0.0
    %1338 = vmatprep.mubr.f32.mxu0 0.0
    %1339 = vmatmul.mubr.f32.gmra.mxu0 %v1272
    %v1340 = vpop.f32.mrf.mxu0
    %v1341 = vadd.f32 0.0, %v1340
    %v1342 = vpop.f32.mrf.mxu0
    %1343 = vdwg.mxu0
    %1345 = vrot.lane.b32.xlu0 %v1268, 80
    %v1346 = vpop.permute.xlu0 %1345
    %v1347 = vsel %vm359, %v1346, 0
    %1349 = vmatprep.subr.mxu0 0.0
    %1350 = vmatpush1.msra.mxu0 0.0
    %1351 = vmatprep.subr.mxu0 0.0
    %1352 = vmatpush1.msra.mxu0 0.0
    %1353 = vmatprep.subr.mxu0 0.0
    %1354 = vmatpush1.msra.mxu0 0.0
    %1355 = vmatprep.subr.mxu0 0.0
    %1356 = vmatpush1.msra.mxu0 0.0
    %1357 = vmatprep.subr.mxu0 0.0
    %1358 = vmatpush1.msra.mxu0 0.0
    %1359 = vmatprep.subr.mxu0 0.0
    %1360 = vmatpush1.msra.mxu0 0.0
    %1361 = vmatprep.subr.mxu0 0.0
    %1362 = vmatpush1.msra.mxu0 0.0
    %1363 = vmatprep.subr.mxu0 0.0
    %1364 = vmatpush1.msra.mxu0 0.0
    %1365 = vmatprep.subr.mxu0 0.0
    %1366 = vmatpush1.msra.mxu0 0.0
    %1367 = vmatprep.subr.mxu0 0.0
    %1368 = vmatpush1.msra.mxu0 0.0
    %1369 = vmatprep.subr.mxu0 0.0
    %1370 = vmatpush1.msra.mxu0 0.0
    %1371 = vmatprep.subr.mxu0 0.0
    %1372 = vmatpush1.msra.mxu0 0.0
    %1373 = vmatprep.subr.mxu0 0.0
    %1374 = vmatpush1.msra.mxu0 0.0
    %1375 = vmatprep.subr.mxu0 0.0
    %1376 = vmatpush1.msra.mxu0 0.0
    %1377 = vmatprep.subr.mxu0 0.0
    %1378 = vmatpush1.msra.mxu0 %v338
    %1379 = vmatprep.subr.mxu0 0.0
    %1380 = vmatpush1.msra.mxu0 %v337
    %1381 = vmatprep.subr.mxu0 0.0
    %1382 = vmatpush2.msra.mxu0 0.0
    %1383 = vmatprep.subr.mxu0 0.0
    %1384 = vmatpush2.msra.mxu0 0.0
    %1385 = vmatprep.subr.mxu0 0.0
    %1386 = vmatpush2.msra.mxu0 0.0
    %1387 = vmatprep.subr.mxu0 0.0
    %1388 = vmatpush2.msra.mxu0 0.0
    %1389 = vmatprep.subr.mxu0 0.0
    %1390 = vmatpush2.msra.mxu0 0.0
    %1391 = vmatprep.subr.mxu0 0.0
    %1392 = vmatpush2.msra.mxu0 0.0
    %1393 = vmatprep.subr.mxu0 0.0
    %1394 = vmatpush2.msra.mxu0 0.0
    %1395 = vmatprep.subr.mxu0 0.0
    %1396 = vmatpush2.msra.mxu0 0.0
    %1397 = vmatprep.subr.mxu0 0.0
    %1398 = vmatpush2.msra.mxu0 0.0
    %1399 = vmatprep.subr.mxu0 0.0
    %1400 = vmatpush2.msra.mxu0 0.0
    %1401 = vmatprep.subr.mxu0 0.0
    %1402 = vmatpush2.msra.mxu0 0.0
    %1403 = vmatprep.subr.mxu0 0.0
    %1404 = vmatpush2.msra.mxu0 0.0
    %1405 = vmatprep.subr.mxu0 0.0
    %1406 = vmatpush2.msra.mxu0 0.0
    %1407 = vmatprep.subr.mxu0 0.0
    %1408 = vmatpush2.msra.mxu0 0.0
    %1409 = vmatprep.subr.mxu0 0.0
    %1410 = vmatpush2.msra.mxu0 0.0
    %1411 = vmatprep.subr.mxu0 0.0
    %1412 = vmatpush2.msra.mxu0 0.0
    %1413 = vmatprep.mubr.f32.mxu0 0.0
    %1414 = vmatmul.mubr.f32.gmra.mxu0 %v1347
    %v1415 = vpop.f32.mrf.mxu0
    %v1416 = vadd.f32 %v1341, %v1415
    %v1417 = vpop.f32.mrf.mxu0
    %1418 = vdwg.mxu0
    %v1419 = vadd.f32 %v1416, %v345
    %v1420 = vxor.u32 %v1419, 2147483648
    %v1421 = vmul.f32 %v1420, 1.442695
    %v1422 = vpow.pop %v1421
    %v1423 = vadd.f32 %v1422, 1.0
    %v1424 = vrcp.pop %v1423
    %v1425 = vmul.f32 1.0, %v1424
    %v1426 = vtanh.pop %v1419
    %v1427 = vmul.f32 %v1425, %v1166
    %1429 = vrot.lane.b32.xlu0 %v1426, 112
    %v1430 = vpop.permute.xlu0 %1429
    %v1432 = vmul.f32 %v1425, %v1430
    %1434 = vrot.lane.b32.xlu0 %v1432, 8
    %v1435 = vpop.permute.xlu0 %1434
    %v1437 = vadd.f32 %v1427, %v1435
    %v1438 = vtanh.pop %v1437
    %1440 = vrot.lane.b32.xlu0 %v1438, 16
    %v1441 = vpop.permute.xlu0 %1440
    %v1443 = vmul.f32 %v1425, %v1441
    %v1444 = vld [vmem:[#allocation2 + $0x20] sm:$0xff]
    %1445 = vmatprep.subr.mxu0 0.0
    %1446 = vmatpush1.msra.mxu0 0.0
    %1447 = vmatprep.subr.mxu0 0.0
    %1448 = vmatpush1.msra.mxu0 0.0
    %1449 = vmatprep.subr.mxu0 0.0
    %1450 = vmatpush1.msra.mxu0 0.0
    %1451 = vmatprep.subr.mxu0 0.0
    %1452 = vmatpush1.msra.mxu0 0.0
    %1453 = vmatprep.subr.mxu0 0.0
    %1454 = vmatpush1.msra.mxu0 0.0
    %1455 = vmatprep.subr.mxu0 0.0
    %1456 = vmatpush1.msra.mxu0 0.0
    %1457 = vmatprep.subr.mxu0 0.0
    %1458 = vmatpush1.msra.mxu0 0.0
    %1459 = vmatprep.subr.mxu0 0.0
    %1460 = vmatpush1.msra.mxu0 0.0
    %1461 = vmatprep.subr.mxu0 0.0
    %1462 = vmatpush1.msra.mxu0 0.0
    %1463 = vmatprep.subr.mxu0 0.0
    %1464 = vmatpush1.msra.mxu0 0.0
    %1465 = vmatprep.subr.mxu0 0.0
    %1466 = vmatpush1.msra.mxu0 0.0
    %1467 = vmatprep.subr.mxu0 0.0
    %1468 = vmatpush1.msra.mxu0 0.0
    %1469 = vmatprep.subr.mxu0 0.0
    %1470 = vmatpush1.msra.mxu0 0.0
    %1471 = vmatprep.subr.mxu0 0.0
    %1472 = vmatpush1.msra.mxu0 0.0
    %1473 = vmatprep.subr.mxu0 0.0
    %1474 = vmatpush1.msra.mxu0 %v336
    %1475 = vmatprep.subr.mxu0 0.0
    %1476 = vmatpush1.msra.mxu0 %v335
    %1477 = vmatprep.subr.mxu0 0.0
    %1478 = vmatpush2.msra.mxu0 0.0
    %1479 = vmatprep.subr.mxu0 0.0
    %1480 = vmatpush2.msra.mxu0 0.0
    %1481 = vmatprep.subr.mxu0 0.0
    %1482 = vmatpush2.msra.mxu0 0.0
    %1483 = vmatprep.subr.mxu0 0.0
    %1484 = vmatpush2.msra.mxu0 0.0
    %1485 = vmatprep.subr.mxu0 0.0
    %1486 = vmatpush2.msra.mxu0 0.0
    %1487 = vmatprep.subr.mxu0 0.0
    %1488 = vmatpush2.msra.mxu0 0.0
    %1489 = vmatprep.subr.mxu0 0.0
    %1490 = vmatpush2.msra.mxu0 0.0
    %1491 = vmatprep.subr.mxu0 0.0
    %1492 = vmatpush2.msra.mxu0 0.0
    %1493 = vmatprep.subr.mxu0 0.0
    %1494 = vmatpush2.msra.mxu0 0.0
    %1495 = vmatprep.subr.mxu0 0.0
    %1496 = vmatpush2.msra.mxu0 0.0
    %1497 = vmatprep.subr.mxu0 0.0
    %1498 = vmatpush2.msra.mxu0 0.0
    %1499 = vmatprep.subr.mxu0 0.0
    %1500 = vmatpush2.msra.mxu0 0.0
    %1501 = vmatprep.subr.mxu0 0.0
    %1502 = vmatpush2.msra.mxu0 0.0
    %1503 = vmatprep.subr.mxu0 0.0
    %1504 = vmatpush2.msra.mxu0 0.0
    %1505 = vmatprep.subr.mxu0 0.0
    %1506 = vmatpush2.msra.mxu0 0.0
    %1507 = vmatprep.subr.mxu0 0.0
    %1508 = vmatpush2.msra.mxu0 0.0
    %1509 = vmatprep.mubr.f32.mxu0 0.0
    %1510 = vmatmul.mubr.f32.gmra.mxu0 %v1347
    %v1511 = vpop.f32.mrf.mxu0
    %v1512 = vadd.f32 0.0, %v1511
    %v1513 = vpop.f32.mrf.mxu0
    %1514 = vdwg.mxu0
    %v1515 = vadd.f32 %v1444, %v1512
    %v1516 = vxor.u32 %v1515, 2147483648
    %v1517 = vmul.f32 %v1516, 1.442695
    %v1518 = vpow.pop %v1517
    %v1519 = vadd.f32 %v1518, 1.0
    %v1520 = vrcp.pop %v1519
    %v1521 = vmul.f32 1.0, %v1520
    %v1522 = vtanh.pop %v1515
    %v1523 = vmul.f32 %v1521, %v1262
    %1525 = vrot.lane.b32.xlu0 %v1522, 96
    %v1526 = vpop.permute.xlu0 %1525
    %v1528 = vmul.f32 %v1521, %v1526
    %1530 = vrot.lane.b32.xlu0 %v1528, 16
    %v1531 = vpop.permute.xlu0 %1530
    %v1533 = vadd.f32 %v1523, %v1531
    %v1534 = vtanh.pop %v1533
    %1536 = vrot.lane.b32.xlu0 %v1534, 32
    %v1537 = vpop.permute.xlu0 %1536
    %v1539 = vmul.f32 %v1521, %v1537
    %1541 = vrot.lane.b32.xlu0 %v1443, 104
    %v1542 = vpop.permute.xlu0 %1541
    %v1543 = vsel %vm458, %v1542, 0
    %1545 = vmatprep.subr.mxu0 0.0
    %1546 = vmatpush1.msra.mxu0 0.0
    %1547 = vmatprep.subr.mxu0 0.0
    %1548 = vmatpush1.msra.mxu0 0.0
    %1549 = vmatprep.subr.mxu0 0.0
    %1550 = vmatpush1.msra.mxu0 0.0
    %1551 = vmatprep.subr.mxu0 0.0
    %1552 = vmatpush1.msra.mxu0 0.0
    %1553 = vmatprep.subr.mxu0 0.0
    %1554 = vmatpush1.msra.mxu0 0.0
    %1555 = vmatprep.subr.mxu0 0.0
    %1556 = vmatpush1.msra.mxu0 0.0
    %1557 = vmatprep.subr.mxu0 0.0
    %1558 = vmatpush1.msra.mxu0 0.0
    %1559 = vmatprep.subr.mxu0 0.0
    %1560 = vmatpush1.msra.mxu0 0.0
    %1561 = vmatprep.subr.mxu0 0.0
    %1562 = vmatpush1.msra.mxu0 0.0
    %1563 = vmatprep.subr.mxu0 0.0
    %1564 = vmatpush1.msra.mxu0 0.0
    %1565 = vmatprep.subr.mxu0 0.0
    %1566 = vmatpush1.msra.mxu0 0.0
    %1567 = vmatprep.subr.mxu0 0.0
    %1568 = vmatpush1.msra.mxu0 0.0
    %1569 = vmatprep.subr.mxu0 0.0
    %1570 = vmatpush1.msra.mxu0 0.0
    %1571 = vmatprep.subr.mxu0 0.0
    %1572 = vmatpush1.msra.mxu0 0.0
    %1573 = vmatprep.subr.mxu0 0.0
    %1574 = vmatpush1.msra.mxu0 0.0
    %1575 = vmatprep.subr.mxu0 0.0
    %1576 = vmatpush1.msra.mxu0 %v339
    %1577 = vmatprep.subr.mxu0 0.0
    %1578 = vmatpush2.msra.mxu0 0.0
    %1579 = vmatprep.subr.mxu0 0.0
    %1580 = vmatpush2.msra.mxu0 0.0
    %1581 = vmatprep.subr.mxu0 0.0
    %1582 = vmatpush2.msra.mxu0 0.0
    %1583 = vmatprep.subr.mxu0 0.0
    %1584 = vmatpush2.msra.mxu0 0.0
    %1585 = vmatprep.subr.mxu0 0.0
    %1586 = vmatpush2.msra.mxu0 0.0
    %1587 = vmatprep.subr.mxu0 0.0
    %1588 = vmatpush2.msra.mxu0 0.0
    %1589 = vmatprep.subr.mxu0 0.0
    %1590 = vmatpush2.msra.mxu0 0.0
    %1591 = vmatprep.subr.mxu0 0.0
    %1592 = vmatpush2.msra.mxu0 0.0
    %1593 = vmatprep.subr.mxu0 0.0
    %1594 = vmatpush2.msra.mxu0 0.0
    %1595 = vmatprep.subr.mxu0 0.0
    %1596 = vmatpush2.msra.mxu0 0.0
    %1597 = vmatprep.subr.mxu0 0.0
    %1598 = vmatpush2.msra.mxu0 0.0
    %1599 = vmatprep.subr.mxu0 0.0
    %1600 = vmatpush2.msra.mxu0 0.0
    %1601 = vmatprep.subr.mxu0 0.0
    %1602 = vmatpush2.msra.mxu0 0.0
    %1603 = vmatprep.subr.mxu0 0.0
    %1604 = vmatpush2.msra.mxu0 0.0
    %1605 = vmatprep.subr.mxu0 0.0
    %1606 = vmatpush2.msra.mxu0 0.0
    %1607 = vmatprep.subr.mxu0 0.0
    %1608 = vmatpush2.msra.mxu0 0.0
    %1609 = vmatprep.mubr.f32.mxu0 0.0
    %1610 = vmatmul.mubr.f32.gmra.mxu0 %v1543
    %v1611 = vpop.f32.mrf.mxu0
    %v1612 = vadd.f32 0.0, %v1611
    %v1613 = vpop.f32.mrf.mxu0
    %1614 = vdwg.mxu0
    %1616 = vrot.lane.b32.xlu0 %v1539, 80
    %v1617 = vpop.permute.xlu0 %1616
    %v1618 = vsel %vm359, %v1617, 0
    %1620 = vmatprep.subr.mxu0 0.0
    %1621 = vmatpush1.msra.mxu0 0.0
    %1622 = vmatprep.subr.mxu0 0.0
    %1623 = vmatpush1.msra.mxu0 0.0
    %1624 = vmatprep.subr.mxu0 0.0
    %1625 = vmatpush1.msra.mxu0 0.0
    %1626 = vmatprep.subr.mxu0 0.0
    %1627 = vmatpush1.msra.mxu0 0.0
    %1628 = vmatprep.subr.mxu0 0.0
    %1629 = vmatpush1.msra.mxu0 0.0
    %1630 = vmatprep.subr.mxu0 0.0
    %1631 = vmatpush1.msra.mxu0 0.0
    %1632 = vmatprep.subr.mxu0 0.0
    %1633 = vmatpush1.msra.mxu0 0.0
    %1634 = vmatprep.subr.mxu0 0.0
    %1635 = vmatpush1.msra.mxu0 0.0
    %1636 = vmatprep.subr.mxu0 0.0
    %1637 = vmatpush1.msra.mxu0 0.0
    %1638 = vmatprep.subr.mxu0 0.0
    %1639 = vmatpush1.msra.mxu0 0.0
    %1640 = vmatprep.subr.mxu0 0.0
    %1641 = vmatpush1.msra.mxu0 0.0
    %1642 = vmatprep.subr.mxu0 0.0
    %1643 = vmatpush1.msra.mxu0 0.0
    %1644 = vmatprep.subr.mxu0 0.0
    %1645 = vmatpush1.msra.mxu0 0.0
    %1646 = vmatprep.subr.mxu0 0.0
    %1647 = vmatpush1.msra.mxu0 0.0
    %1648 = vmatprep.subr.mxu0 0.0
    %1649 = vmatpush1.msra.mxu0 %v338
    %1650 = vmatprep.subr.mxu0 0.0
    %1651 = vmatpush1.msra.mxu0 %v337
    %1652 = vmatprep.subr.mxu0 0.0
    %1653 = vmatpush2.msra.mxu0 0.0
    %1654 = vmatprep.subr.mxu0 0.0
    %1655 = vmatpush2.msra.mxu0 0.0
    %1656 = vmatprep.subr.mxu0 0.0
    %1657 = vmatpush2.msra.mxu0 0.0
    %1658 = vmatprep.subr.mxu0 0.0
    %1659 = vmatpush2.msra.mxu0 0.0
    %1660 = vmatprep.subr.mxu0 0.0
    %1661 = vmatpush2.msra.mxu0 0.0
    %1662 = vmatprep.subr.mxu0 0.0
    %1663 = vmatpush2.msra.mxu0 0.0
    %1664 = vmatprep.subr.mxu0 0.0
    %1665 = vmatpush2.msra.mxu0 0.0
    %1666 = vmatprep.subr.mxu0 0.0
    %1667 = vmatpush2.msra.mxu0 0.0
    %1668 = vmatprep.subr.mxu0 0.0
    %1669 = vmatpush2.msra.mxu0 0.0
    %1670 = vmatprep.subr.mxu0 0.0
    %1671 = vmatpush2.msra.mxu0 0.0
    %1672 = vmatprep.subr.mxu0 0.0
    %1673 = vmatpush2.msra.mxu0 0.0
    %1674 = vmatprep.subr.mxu0 0.0
    %1675 = vmatpush2.msra.mxu0 0.0
    %1676 = vmatprep.subr.mxu0 0.0
    %1677 = vmatpush2.msra.mxu0 0.0
    %1678 = vmatprep.subr.mxu0 0.0
    %1679 = vmatpush2.msra.mxu0 0.0
    %1680 = vmatprep.subr.mxu0 0.0
    %1681 = vmatpush2.msra.mxu0 0.0
    %1682 = vmatprep.subr.mxu0 0.0
    %1683 = vmatpush2.msra.mxu0 0.0
    %1684 = vmatprep.mubr.f32.mxu0 0.0
    %1685 = vmatmul.mubr.f32.gmra.mxu0 %v1618
    %v1686 = vpop.f32.mrf.mxu0
    %v1687 = vadd.f32 %v1612, %v1686
    %v1688 = vpop.f32.mrf.mxu0
    %1689 = vdwg.mxu0
    %v1690 = vadd.f32 %v1687, %v345
    %v1691 = vxor.u32 %v1690, 2147483648
    %v1692 = vmul.f32 %v1691, 1.442695
    %v1693 = vpow.pop %v1692
    %v1694 = vadd.f32 %v1693, 1.0
    %v1695 = vrcp.pop %v1694
    %v1696 = vmul.f32 1.0, %v1695
    %v1697 = vtanh.pop %v1690
    %v1698 = vmul.f32 %v1696, %v1437
    %1700 = vrot.lane.b32.xlu0 %v1697, 112
    %v1701 = vpop.permute.xlu0 %1700
    %v1703 = vmul.f32 %v1696, %v1701
    %1705 = vrot.lane.b32.xlu0 %v1703, 8
    %v1706 = vpop.permute.xlu0 %1705
    %v1708 = vadd.f32 %v1698, %v1706
    %v1709 = vtanh.pop %v1708
    %1711 = vrot.lane.b32.xlu0 %v1709, 16
    %v1712 = vpop.permute.xlu0 %1711
    %v1714 = vmul.f32 %v1696, %v1712
    %v1715 = vld [vmem:[#allocation2 + $0x28] sm:$0xff]
    %1716 = vmatprep.subr.mxu0 0.0
    %1717 = vmatpush1.msra.mxu0 0.0
    %1718 = vmatprep.subr.mxu0 0.0
    %1719 = vmatpush1.msra.mxu0 0.0
    %1720 = vmatprep.subr.mxu0 0.0
    %1721 = vmatpush1.msra.mxu0 0.0
    %1722 = vmatprep.subr.mxu0 0.0
    %1723 = vmatpush1.msra.mxu0 0.0
    %1724 = vmatprep.subr.mxu0 0.0
    %1725 = vmatpush1.msra.mxu0 0.0
    %1726 = vmatprep.subr.mxu0 0.0
    %1727 = vmatpush1.msra.mxu0 0.0
    %1728 = vmatprep.subr.mxu0 0.0
    %1729 = vmatpush1.msra.mxu0 0.0
    %1730 = vmatprep.subr.mxu0 0.0
    %1731 = vmatpush1.msra.mxu0 0.0
    %1732 = vmatprep.subr.mxu0 0.0
    %1733 = vmatpush1.msra.mxu0 0.0
    %1734 = vmatprep.subr.mxu0 0.0
    %1735 = vmatpush1.msra.mxu0 0.0
    %1736 = vmatprep.subr.mxu0 0.0
    %1737 = vmatpush1.msra.mxu0 0.0
    %1738 = vmatprep.subr.mxu0 0.0
    %1739 = vmatpush1.msra.mxu0 0.0
    %1740 = vmatprep.subr.mxu0 0.0
    %1741 = vmatpush1.msra.mxu0 0.0
    %1742 = vmatprep.subr.mxu0 0.0
    %1743 = vmatpush1.msra.mxu0 0.0
    %1744 = vmatprep.subr.mxu0 0.0
    %1745 = vmatpush1.msra.mxu0 %v336
    %1746 = vmatprep.subr.mxu0 0.0
    %1747 = vmatpush1.msra.mxu0 %v335
    %1748 = vmatprep.subr.mxu0 0.0
    %1749 = vmatpush2.msra.mxu0 0.0
    %1750 = vmatprep.subr.mxu0 0.0
    %1751 = vmatpush2.msra.mxu0 0.0
    %1752 = vmatprep.subr.mxu0 0.0
    %1753 = vmatpush2.msra.mxu0 0.0
    %1754 = vmatprep.subr.mxu0 0.0
    %1755 = vmatpush2.msra.mxu0 0.0
    %1756 = vmatprep.subr.mxu0 0.0
    %1757 = vmatpush2.msra.mxu0 0.0
    %1758 = vmatprep.subr.mxu0 0.0
    %1759 = vmatpush2.msra.mxu0 0.0
    %1760 = vmatprep.subr.mxu0 0.0
    %1761 = vmatpush2.msra.mxu0 0.0
    %1762 = vmatprep.subr.mxu0 0.0
    %1763 = vmatpush2.msra.mxu0 0.0
    %1764 = vmatprep.subr.mxu0 0.0
    %1765 = vmatpush2.msra.mxu0 0.0
    %1766 = vmatprep.subr.mxu0 0.0
    %1767 = vmatpush2.msra.mxu0 0.0
    %1768 = vmatprep.subr.mxu0 0.0
    %1769 = vmatpush2.msra.mxu0 0.0
    %1770 = vmatprep.subr.mxu0 0.0
    %1771 = vmatpush2.msra.mxu0 0.0
    %1772 = vmatprep.subr.mxu0 0.0
    %1773 = vmatpush2.msra.mxu0 0.0
    %1774 = vmatprep.subr.mxu0 0.0
    %1775 = vmatpush2.msra.mxu0 0.0
    %1776 = vmatprep.subr.mxu0 0.0
    %1777 = vmatpush2.msra.mxu0 0.0
    %1778 = vmatprep.subr.mxu0 0.0
    %1779 = vmatpush2.msra.mxu0 0.0
    %1780 = vmatprep.mubr.f32.mxu0 0.0
    %1781 = vmatmul.mubr.f32.gmra.mxu0 %v1618
    %v1782 = vpop.f32.mrf.mxu0
    %v1783 = vadd.f32 0.0, %v1782
    %v1784 = vpop.f32.mrf.mxu0
    %1785 = vdwg.mxu0
    %v1786 = vadd.f32 %v1715, %v1783
    %v1787 = vxor.u32 %v1786, 2147483648
    %v1788 = vmul.f32 %v1787, 1.442695
    %v1789 = vpow.pop %v1788
    %v1790 = vadd.f32 %v1789, 1.0
    %v1791 = vrcp.pop %v1790
    %v1792 = vmul.f32 1.0, %v1791
    %v1793 = vtanh.pop %v1786
    %v1794 = vmul.f32 %v1792, %v1533
    %1796 = vrot.lane.b32.xlu0 %v1793, 96
    %v1797 = vpop.permute.xlu0 %1796
    %v1799 = vmul.f32 %v1792, %v1797
    %1801 = vrot.lane.b32.xlu0 %v1799, 16
    %v1802 = vpop.permute.xlu0 %1801
    %v1804 = vadd.f32 %v1794, %v1802
    %v1805 = vtanh.pop %v1804
    %1807 = vrot.lane.b32.xlu0 %v1805, 32
    %v1808 = vpop.permute.xlu0 %1807
    %v1810 = vmul.f32 %v1792, %v1808
    %1812 = vrot.lane.b32.xlu0 %v1714, 104
    %v1813 = vpop.permute.xlu0 %1812
    %v1814 = vsel %vm458, %v1813, 0
    %1816 = vmatprep.subr.mxu0 0.0
    %1817 = vmatpush1.msra.mxu0 0.0
    %1818 = vmatprep.subr.mxu0 0.0
    %1819 = vmatpush1.msra.mxu0 0.0
    %1820 = vmatprep.subr.mxu0 0.0
    %1821 = vmatpush1.msra.mxu0 0.0
    %1822 = vmatprep.subr.mxu0 0.0
    %1823 = vmatpush1.msra.mxu0 0.0
    %1824 = vmatprep.subr.mxu0 0.0
    %1825 = vmatpush1.msra.mxu0 0.0
    %1826 = vmatprep.subr.mxu0 0.0
    %1827 = vmatpush1.msra.mxu0 0.0
    %1828 = vmatprep.subr.mxu0 0.0
    %1829 = vmatpush1.msra.mxu0 0.0
    %1830 = vmatprep.subr.mxu0 0.0
    %1831 = vmatpush1.msra.mxu0 0.0
    %1832 = vmatprep.subr.mxu0 0.0
    %1833 = vmatpush1.msra.mxu0 0.0
    %1834 = vmatprep.subr.mxu0 0.0
    %1835 = vmatpush1.msra.mxu0 0.0
    %1836 = vmatprep.subr.mxu0 0.0
    %1837 = vmatpush1.msra.mxu0 0.0
    %1838 = vmatprep.subr.mxu0 0.0
    %1839 = vmatpush1.msra.mxu0 0.0
    %1840 = vmatprep.subr.mxu0 0.0
    %1841 = vmatpush1.msra.mxu0 0.0
    %1842 = vmatprep.subr.mxu0 0.0
    %1843 = vmatpush1.msra.mxu0 0.0
    %1844 = vmatprep.subr.mxu0 0.0
    %1845 = vmatpush1.msra.mxu0 0.0
    %1846 = vmatprep.subr.mxu0 0.0
    %1847 = vmatpush1.msra.mxu0 %v339
    %1848 = vmatprep.subr.mxu0 0.0
    %1849 = vmatpush2.msra.mxu0 0.0
    %1850 = vmatprep.subr.mxu0 0.0
    %1851 = vmatpush2.msra.mxu0 0.0
    %1852 = vmatprep.subr.mxu0 0.0
    %1853 = vmatpush2.msra.mxu0 0.0
    %1854 = vmatprep.subr.mxu0 0.0
    %1855 = vmatpush2.msra.mxu0 0.0
    %1856 = vmatprep.subr.mxu0 0.0
    %1857 = vmatpush2.msra.mxu0 0.0
    %1858 = vmatprep.subr.mxu0 0.0
    %1859 = vmatpush2.msra.mxu0 0.0
    %1860 = vmatprep.subr.mxu0 0.0
    %1861 = vmatpush2.msra.mxu0 0.0
    %1862 = vmatprep.subr.mxu0 0.0
    %1863 = vmatpush2.msra.mxu0 0.0
    %1864 = vmatprep.subr.mxu0 0.0
    %1865 = vmatpush2.msra.mxu0 0.0
    %1866 = vmatprep.subr.mxu0 0.0
    %1867 = vmatpush2.msra.mxu0 0.0
    %1868 = vmatprep.subr.mxu0 0.0
    %1869 = vmatpush2.msra.mxu0 0.0
    %1870 = vmatprep.subr.mxu0 0.0
    %1871 = vmatpush2.msra.mxu0 0.0
    %1872 = vmatprep.subr.mxu0 0.0
    %1873 = vmatpush2.msra.mxu0 0.0
    %1874 = vmatprep.subr.mxu0 0.0
    %1875 = vmatpush2.msra.mxu0 0.0
    %1876 = vmatprep.subr.mxu0 0.0
    %1877 = vmatpush2.msra.mxu0 0.0
    %1878 = vmatprep.subr.mxu0 0.0
    %1879 = vmatpush2.msra.mxu0 0.0
    %1880 = vmatprep.mubr.f32.mxu0 0.0
    %1881 = vmatmul.mubr.f32.gmra.mxu0 %v1814
    %v1882 = vpop.f32.mrf.mxu0
    %v1883 = vadd.f32 0.0, %v1882
    %v1884 = vpop.f32.mrf.mxu0
    %1885 = vdwg.mxu0
    %1887 = vrot.lane.b32.xlu0 %v1810, 80
    %v1888 = vpop.permute.xlu0 %1887
    %v1889 = vsel %vm359, %v1888, 0
    %1891 = vmatprep.subr.mxu0 0.0
    %1892 = vmatpush1.msra.mxu0 0.0
    %1893 = vmatprep.subr.mxu0 0.0
    %1894 = vmatpush1.msra.mxu0 0.0
    %1895 = vmatprep.subr.mxu0 0.0
    %1896 = vmatpush1.msra.mxu0 0.0
    %1897 = vmatprep.subr.mxu0 0.0
    %1898 = vmatpush1.msra.mxu0 0.0
    %1899 = vmatprep.subr.mxu0 0.0
    %1900 = vmatpush1.msra.mxu0 0.0
    %1901 = vmatprep.subr.mxu0 0.0
    %1902 = vmatpush1.msra.mxu0 0.0
    %1903 = vmatprep.subr.mxu0 0.0
    %1904 = vmatpush1.msra.mxu0 0.0
    %1905 = vmatprep.subr.mxu0 0.0
    %1906 = vmatpush1.msra.mxu0 0.0
    %1907 = vmatprep.subr.mxu0 0.0
    %1908 = vmatpush1.msra.mxu0 0.0
    %1909 = vmatprep.subr.mxu0 0.0
    %1910 = vmatpush1.msra.mxu0 0.0
    %1911 = vmatprep.subr.mxu0 0.0
    %1912 = vmatpush1.msra.mxu0 0.0
    %1913 = vmatprep.subr.mxu0 0.0
    %1914 = vmatpush1.msra.mxu0 0.0
    %1915 = vmatprep.subr.mxu0 0.0
    %1916 = vmatpush1.msra.mxu0 0.0
    %1917 = vmatprep.subr.mxu0 0.0
    %1918 = vmatpush1.msra.mxu0 0.0
    %1919 = vmatprep.subr.mxu0 0.0
    %1920 = vmatpush1.msra.mxu0 %v338
    %1921 = vmatprep.subr.mxu0 0.0
    %1922 = vmatpush1.msra.mxu0 %v337
    %1923 = vmatprep.subr.mxu0 0.0
    %1924 = vmatpush2.msra.mxu0 0.0
    %1925 = vmatprep.subr.mxu0 0.0
    %1926 = vmatpush2.msra.mxu0 0.0
    %1927 = vmatprep.subr.mxu0 0.0
    %1928 = vmatpush2.msra.mxu0 0.0
    %1929 = vmatprep.subr.mxu0 0.0
    %1930 = vmatpush2.msra.mxu0 0.0
    %1931 = vmatprep.subr.mxu0 0.0
    %1932 = vmatpush2.msra.mxu0 0.0
    %1933 = vmatprep.subr.mxu0 0.0
    %1934 = vmatpush2.msra.mxu0 0.0
    %1935 = vmatprep.subr.mxu0 0.0
    %1936 = vmatpush2.msra.mxu0 0.0
    %1937 = vmatprep.subr.mxu0 0.0
    %1938 = vmatpush2.msra.mxu0 0.0
    %1939 = vmatprep.subr.mxu0 0.0
    %1940 = vmatpush2.msra.mxu0 0.0
    %1941 = vmatprep.subr.mxu0 0.0
    %1942 = vmatpush2.msra.mxu0 0.0
    %1943 = vmatprep.subr.mxu0 0.0
    %1944 = vmatpush2.msra.mxu0 0.0
    %1945 = vmatprep.subr.mxu0 0.0
    %1946 = vmatpush2.msra.mxu0 0.0
    %1947 = vmatprep.subr.mxu0 0.0
    %1948 = vmatpush2.msra.mxu0 0.0
    %1949 = vmatprep.subr.mxu0 0.0
    %1950 = vmatpush2.msra.mxu0 0.0
    %1951 = vmatprep.subr.mxu0 0.0
    %1952 = vmatpush2.msra.mxu0 0.0
    %1953 = vmatprep.subr.mxu0 0.0
    %1954 = vmatpush2.msra.mxu0 0.0
    %1955 = vmatprep.mubr.f32.mxu0 0.0
    %1956 = vmatmul.mubr.f32.gmra.mxu0 %v1889
    %v1957 = vpop.f32.mrf.mxu0
    %v1958 = vadd.f32 %v1883, %v1957
    %v1959 = vpop.f32.mrf.mxu0
    %1960 = vdwg.mxu0
    %v1961 = vadd.f32 %v1958, %v345
    %v1962 = vxor.u32 %v1961, 2147483648
    %v1963 = vmul.f32 %v1962, 1.442695
    %v1964 = vpow.pop %v1963
    %v1965 = vadd.f32 %v1964, 1.0
    %v1966 = vrcp.pop %v1965
    %v1967 = vmul.f32 1.0, %v1966
    %v1968 = vtanh.pop %v1961
    %v1969 = vmul.f32 %v1967, %v1708
    %1971 = vrot.lane.b32.xlu0 %v1968, 112
    %v1972 = vpop.permute.xlu0 %1971
    %v1974 = vmul.f32 %v1967, %v1972
    %1976 = vrot.lane.b32.xlu0 %v1974, 8
    %v1977 = vpop.permute.xlu0 %1976
    %v1979 = vadd.f32 %v1969, %v1977
    %v1980 = vtanh.pop %v1979
    %1982 = vrot.lane.b32.xlu0 %v1980, 16
    %v1983 = vpop.permute.xlu0 %1982
    %v1985 = vmul.f32 %v1967, %v1983
    %v1986 = vld [vmem:[#allocation2 + $0x30] sm:$0xff]
    %1987 = vmatprep.subr.mxu0 0.0
    %1988 = vmatpush1.msra.mxu0 0.0
    %1989 = vmatprep.subr.mxu0 0.0
    %1990 = vmatpush1.msra.mxu0 0.0
    %1991 = vmatprep.subr.mxu0 0.0
    %1992 = vmatpush1.msra.mxu0 0.0
    %1993 = vmatprep.subr.mxu0 0.0
    %1994 = vmatpush1.msra.mxu0 0.0
    %1995 = vmatprep.subr.mxu0 0.0
    %1996 = vmatpush1.msra.mxu0 0.0
    %1997 = vmatprep.subr.mxu0 0.0
    %1998 = vmatpush1.msra.mxu0 0.0
    %1999 = vmatprep.subr.mxu0 0.0
    %2000 = vmatpush1.msra.mxu0 0.0
    %2001 = vmatprep.subr.mxu0 0.0
    %2002 = vmatpush1.msra.mxu0 0.0
    %2003 = vmatprep.subr.mxu0 0.0
    %2004 = vmatpush1.msra.mxu0 0.0
    %2005 = vmatprep.subr.mxu0 0.0
    %2006 = vmatpush1.msra.mxu0 0.0
    %2007 = vmatprep.subr.mxu0 0.0
    %2008 = vmatpush1.msra.mxu0 0.0
    %2009 = vmatprep.subr.mxu0 0.0
    %2010 = vmatpush1.msra.mxu0 0.0
    %2011 = vmatprep.subr.mxu0 0.0
    %2012 = vmatpush1.msra.mxu0 0.0
    %2013 = vmatprep.subr.mxu0 0.0
    %2014 = vmatpush1.msra.mxu0 0.0
    %2015 = vmatprep.subr.mxu0 0.0
    %2016 = vmatpush1.msra.mxu0 %v336
    %2017 = vmatprep.subr.mxu0 0.0
    %2018 = vmatpush1.msra.mxu0 %v335
    %2019 = vmatprep.subr.mxu0 0.0
    %2020 = vmatpush2.msra.mxu0 0.0
    %2021 = vmatprep.subr.mxu0 0.0
    %2022 = vmatpush2.msra.mxu0 0.0
    %2023 = vmatprep.subr.mxu0 0.0
    %2024 = vmatpush2.msra.mxu0 0.0
    %2025 = vmatprep.subr.mxu0 0.0
    %2026 = vmatpush2.msra.mxu0 0.0
    %2027 = vmatprep.subr.mxu0 0.0
    %2028 = vmatpush2.msra.mxu0 0.0
    %2029 = vmatprep.subr.mxu0 0.0
    %2030 = vmatpush2.msra.mxu0 0.0
    %2031 = vmatprep.subr.mxu0 0.0
    %2032 = vmatpush2.msra.mxu0 0.0
    %2033 = vmatprep.subr.mxu0 0.0
    %2034 = vmatpush2.msra.mxu0 0.0
    %2035 = vmatprep.subr.mxu0 0.0
    %2036 = vmatpush2.msra.mxu0 0.0
    %2037 = vmatprep.subr.mxu0 0.0
    %2038 = vmatpush2.msra.mxu0 0.0
    %2039 = vmatprep.subr.mxu0 0.0
    %2040 = vmatpush2.msra.mxu0 0.0
    %2041 = vmatprep.subr.mxu0 0.0
    %2042 = vmatpush2.msra.mxu0 0.0
    %2043 = vmatprep.subr.mxu0 0.0
    %2044 = vmatpush2.msra.mxu0 0.0
    %2045 = vmatprep.subr.mxu0 0.0
    %2046 = vmatpush2.msra.mxu0 0.0
    %2047 = vmatprep.subr.mxu0 0.0
    %2048 = vmatpush2.msra.mxu0 0.0
    %2049 = vmatprep.subr.mxu0 0.0
    %2050 = vmatpush2.msra.mxu0 0.0
    %2051 = vmatprep.mubr.f32.mxu0 0.0
    %2052 = vmatmul.mubr.f32.gmra.mxu0 %v1889
    %v2053 = vpop.f32.mrf.mxu0
    %v2054 = vadd.f32 0.0, %v2053
    %v2055 = vpop.f32.mrf.mxu0
    %2056 = vdwg.mxu0
    %v2057 = vadd.f32 %v1986, %v2054
    %v2058 = vxor.u32 %v2057, 2147483648
    %v2059 = vmul.f32 %v2058, 1.442695
    %v2060 = vpow.pop %v2059
    %v2061 = vadd.f32 %v2060, 1.0
    %v2062 = vrcp.pop %v2061
    %v2063 = vmul.f32 1.0, %v2062
    %v2064 = vtanh.pop %v2057
    %v2065 = vmul.f32 %v2063, %v1804
    %2067 = vrot.lane.b32.xlu0 %v2064, 96
    %v2068 = vpop.permute.xlu0 %2067
    %v2070 = vmul.f32 %v2063, %v2068
    %2072 = vrot.lane.b32.xlu0 %v2070, 16
    %v2073 = vpop.permute.xlu0 %2072
    %v2075 = vadd.f32 %v2065, %v2073
    %v2076 = vtanh.pop %v2075
    %2078 = vrot.lane.b32.xlu0 %v2076, 32
    %v2079 = vpop.permute.xlu0 %2078
    %v2081 = vmul.f32 %v2063, %v2079
    %2083 = vrot.lane.b32.xlu0 %v1985, 104
    %v2084 = vpop.permute.xlu0 %2083
    %v2085 = vsel %vm458, %v2084, 0
    %2087 = vmatprep.subr.mxu0 0.0
    %2088 = vmatpush1.msra.mxu0 0.0
    %2089 = vmatprep.subr.mxu0 0.0
    %2090 = vmatpush1.msra.mxu0 0.0
    %2091 = vmatprep.subr.mxu0 0.0
    %2092 = vmatpush1.msra.mxu0 0.0
    %2093 = vmatprep.subr.mxu0 0.0
    %2094 = vmatpush1.msra.mxu0 0.0
    %2095 = vmatprep.subr.mxu0 0.0
    %2096 = vmatpush1.msra.mxu0 0.0
    %2097 = vmatprep.subr.mxu0 0.0
    %2098 = vmatpush1.msra.mxu0 0.0
    %2099 = vmatprep.subr.mxu0 0.0
    %2100 = vmatpush1.msra.mxu0 0.0
    %2101 = vmatprep.subr.mxu0 0.0
    %2102 = vmatpush1.msra.mxu0 0.0
    %2103 = vmatprep.subr.mxu0 0.0
    %2104 = vmatpush1.msra.mxu0 0.0
    %2105 = vmatprep.subr.mxu0 0.0
    %2106 = vmatpush1.msra.mxu0 0.0
    %2107 = vmatprep.subr.mxu0 0.0
    %2108 = vmatpush1.msra.mxu0 0.0
    %2109 = vmatprep.subr.mxu0 0.0
    %2110 = vmatpush1.msra.mxu0 0.0
    %2111 = vmatprep.subr.mxu0 0.0
    %2112 = vmatpush1.msra.mxu0 0.0
    %2113 = vmatprep.subr.mxu0 0.0
    %2114 = vmatpush1.msra.mxu0 0.0
    %2115 = vmatprep.subr.mxu0 0.0
    %2116 = vmatpush1.msra.mxu0 0.0
    %2117 = vmatprep.subr.mxu0 0.0
    %2118 = vmatpush1.msra.mxu0 %v339
    %2119 = vmatprep.subr.mxu0 0.0
    %2120 = vmatpush2.msra.mxu0 0.0
    %2121 = vmatprep.subr.mxu0 0.0
    %2122 = vmatpush2.msra.mxu0 0.0
    %2123 = vmatprep.subr.mxu0 0.0
    %2124 = vmatpush2.msra.mxu0 0.0
    %2125 = vmatprep.subr.mxu0 0.0
    %2126 = vmatpush2.msra.mxu0 0.0
    %2127 = vmatprep.subr.mxu0 0.0
    %2128 = vmatpush2.msra.mxu0 0.0
    %2129 = vmatprep.subr.mxu0 0.0
    %2130 = vmatpush2.msra.mxu0 0.0
    %2131 = vmatprep.subr.mxu0 0.0
    %2132 = vmatpush2.msra.mxu0 0.0
    %2133 = vmatprep.subr.mxu0 0.0
    %2134 = vmatpush2.msra.mxu0 0.0
    %2135 = vmatprep.subr.mxu0 0.0
    %2136 = vmatpush2.msra.mxu0 0.0
    %2137 = vmatprep.subr.mxu0 0.0
    %2138 = vmatpush2.msra.mxu0 0.0
    %2139 = vmatprep.subr.mxu0 0.0
    %2140 = vmatpush2.msra.mxu0 0.0
    %2141 = vmatprep.subr.mxu0 0.0
    %2142 = vmatpush2.msra.mxu0 0.0
    %2143 = vmatprep.subr.mxu0 0.0
    %2144 = vmatpush2.msra.mxu0 0.0
    %2145 = vmatprep.subr.mxu0 0.0
    %2146 = vmatpush2.msra.mxu0 0.0
    %2147 = vmatprep.subr.mxu0 0.0
    %2148 = vmatpush2.msra.mxu0 0.0
    %2149 = vmatprep.subr.mxu0 0.0
    %2150 = vmatpush2.msra.mxu0 0.0
    %2151 = vmatprep.mubr.f32.mxu0 0.0
    %2152 = vmatmul.mubr.f32.gmra.mxu0 %v2085
    %v2153 = vpop.f32.mrf.mxu0
    %v2154 = vadd.f32 0.0, %v2153
    %v2155 = vpop.f32.mrf.mxu0
    %2156 = vdwg.mxu0
    %2158 = vrot.lane.b32.xlu0 %v2081, 80
    %v2159 = vpop.permute.xlu0 %2158
    %v2160 = vsel %vm359, %v2159, 0
    %2162 = vmatprep.subr.mxu0 0.0
    %2163 = vmatpush1.msra.mxu0 0.0
    %2164 = vmatprep.subr.mxu0 0.0
    %2165 = vmatpush1.msra.mxu0 0.0
    %2166 = vmatprep.subr.mxu0 0.0
    %2167 = vmatpush1.msra.mxu0 0.0
    %2168 = vmatprep.subr.mxu0 0.0
    %2169 = vmatpush1.msra.mxu0 0.0
    %2170 = vmatprep.subr.mxu0 0.0
    %2171 = vmatpush1.msra.mxu0 0.0
    %2172 = vmatprep.subr.mxu0 0.0
    %2173 = vmatpush1.msra.mxu0 0.0
    %2174 = vmatprep.subr.mxu0 0.0
    %2175 = vmatpush1.msra.mxu0 0.0
    %2176 = vmatprep.subr.mxu0 0.0
    %2177 = vmatpush1.msra.mxu0 0.0
    %2178 = vmatprep.subr.mxu0 0.0
    %2179 = vmatpush1.msra.mxu0 0.0
    %2180 = vmatprep.subr.mxu0 0.0
    %2181 = vmatpush1.msra.mxu0 0.0
    %2182 = vmatprep.subr.mxu0 0.0
    %2183 = vmatpush1.msra.mxu0 0.0
    %2184 = vmatprep.subr.mxu0 0.0
    %2185 = vmatpush1.msra.mxu0 0.0
    %2186 = vmatprep.subr.mxu0 0.0
    %2187 = vmatpush1.msra.mxu0 0.0
    %2188 = vmatprep.subr.mxu0 0.0
    %2189 = vmatpush1.msra.mxu0 0.0
    %2190 = vmatprep.subr.mxu0 0.0
    %2191 = vmatpush1.msra.mxu0 %v338
    %2192 = vmatprep.subr.mxu0 0.0
    %2193 = vmatpush1.msra.mxu0 %v337
    %2194 = vmatprep.subr.mxu0 0.0
    %2195 = vmatpush2.msra.mxu0 0.0
    %2196 = vmatprep.subr.mxu0 0.0
    %2197 = vmatpush2.msra.mxu0 0.0
    %2198 = vmatprep.subr.mxu0 0.0
    %2199 = vmatpush2.msra.mxu0 0.0
    %2200 = vmatprep.subr.mxu0 0.0
    %2201 = vmatpush2.msra.mxu0 0.0
    %2202 = vmatprep.subr.mxu0 0.0
    %2203 = vmatpush2.msra.mxu0 0.0
    %2204 = vmatprep.subr.mxu0 0.0
    %2205 = vmatpush2.msra.mxu0 0.0
    %2206 = vmatprep.subr.mxu0 0.0
    %2207 = vmatpush2.msra.mxu0 0.0
    %2208 = vmatprep.subr.mxu0 0.0
    %2209 = vmatpush2.msra.mxu0 0.0
    %2210 = vmatprep.subr.mxu0 0.0
    %2211 = vmatpush2.msra.mxu0 0.0
    %2212 = vmatprep.subr.mxu0 0.0
    %2213 = vmatpush2.msra.mxu0 0.0
    %2214 = vmatprep.subr.mxu0 0.0
    %2215 = vmatpush2.msra.mxu0 0.0
    %2216 = vmatprep.subr.mxu0 0.0
    %2217 = vmatpush2.msra.mxu0 0.0
    %2218 = vmatprep.subr.mxu0 0.0
    %2219 = vmatpush2.msra.mxu0 0.0
    %2220 = vmatprep.subr.mxu0 0.0
    %2221 = vmatpush2.msra.mxu0 0.0
    %2222 = vmatprep.subr.mxu0 0.0
    %2223 = vmatpush2.msra.mxu0 0.0
    %2224 = vmatprep.subr.mxu0 0.0
    %2225 = vmatpush2.msra.mxu0 0.0
    %2226 = vmatprep.mubr.f32.mxu0 0.0
    %2227 = vmatmul.mubr.f32.gmra.mxu0 %v2160
    %v2228 = vpop.f32.mrf.mxu0
    %v2229 = vadd.f32 %v2154, %v2228
    %v2230 = vpop.f32.mrf.mxu0
    %2231 = vdwg.mxu0
    %v2232 = vadd.f32 %v2229, %v345
    %v2233 = vxor.u32 %v2232, 2147483648
    %v2234 = vmul.f32 %v2233, 1.442695
    %v2235 = vpow.pop %v2234
    %v2236 = vadd.f32 %v2235, 1.0
    %v2237 = vrcp.pop %v2236
    %v2238 = vmul.f32 1.0, %v2237
    %v2239 = vtanh.pop %v2232
    %v2240 = vmul.f32 %v2238, %v1979
    %2242 = vrot.lane.b32.xlu0 %v2239, 112
    %v2243 = vpop.permute.xlu0 %2242
    %v2245 = vmul.f32 %v2238, %v2243
    %2247 = vrot.lane.b32.xlu0 %v2245, 8
    %v2248 = vpop.permute.xlu0 %2247
    %v2250 = vadd.f32 %v2240, %v2248
    %v2251 = vtanh.pop %v2250
    %2253 = vrot.lane.b32.xlu0 %v2251, 16
    %v2254 = vpop.permute.xlu0 %2253
    %v2256 = vmul.f32 %v2238, %v2254
    %v2257 = vld [vmem:[#allocation16] sm:$0xff]
    %v2258 = vld [vmem:[#allocation19] sm:$0x1]
    %v2260 = vlaneseq
    %v2261 = vshrl.u32 %v2260, 7
    %v2262 = vsub.s32 0, %v2261
    %v2263 = vrot.slane %v2258, %v2262
    %2266 = vrot.lane.b32.xlu0 %v2256, 104
    %v2267 = vpop.permute.xlu0 %2266
    %v2268 = vsel %vm458, %v2267, 0
    %2270 = vmatprep.subr.mxu0 0.0
    %2271 = vmatpush1.msra.mxu0 0.0
    %2272 = vmatprep.subr.mxu0 0.0
    %2273 = vmatpush1.msra.mxu0 0.0
    %2274 = vmatprep.subr.mxu0 0.0
    %2275 = vmatpush1.msra.mxu0 0.0
    %2276 = vmatprep.subr.mxu0 0.0
    %2277 = vmatpush1.msra.mxu0 0.0
    %2278 = vmatprep.subr.mxu0 0.0
    %2279 = vmatpush1.msra.mxu0 0.0
    %2280 = vmatprep.subr.mxu0 0.0
    %2281 = vmatpush1.msra.mxu0 0.0
    %2282 = vmatprep.subr.mxu0 0.0
    %2283 = vmatpush1.msra.mxu0 0.0
    %2284 = vmatprep.subr.mxu0 0.0
    %2285 = vmatpush1.msra.mxu0 0.0
    %2286 = vmatprep.subr.mxu0 0.0
    %2287 = vmatpush1.msra.mxu0 0.0
    %2288 = vmatprep.subr.mxu0 0.0
    %2289 = vmatpush1.msra.mxu0 0.0
    %2290 = vmatprep.subr.mxu0 0.0
    %2291 = vmatpush1.msra.mxu0 0.0
    %2292 = vmatprep.subr.mxu0 0.0
    %2293 = vmatpush1.msra.mxu0 0.0
    %2294 = vmatprep.subr.mxu0 0.0
    %2295 = vmatpush1.msra.mxu0 0.0
    %2296 = vmatprep.subr.mxu0 0.0
    %2297 = vmatpush1.msra.mxu0 0.0
    %2298 = vmatprep.subr.mxu0 0.0
    %2299 = vmatpush1.msra.mxu0 0.0
    %2300 = vmatprep.subr.mxu0 0.0
    %2301 = vmatpush1.msra.mxu0 %v2257
    %2302 = vmatprep.subr.mxu0 0.0
    %2303 = vmatpush2.msra.mxu0 0.0
    %2304 = vmatprep.subr.mxu0 0.0
    %2305 = vmatpush2.msra.mxu0 0.0
    %2306 = vmatprep.subr.mxu0 0.0
    %2307 = vmatpush2.msra.mxu0 0.0
    %2308 = vmatprep.subr.mxu0 0.0
    %2309 = vmatpush2.msra.mxu0 0.0
    %2310 = vmatprep.subr.mxu0 0.0
    %2311 = vmatpush2.msra.mxu0 0.0
    %2312 = vmatprep.subr.mxu0 0.0
    %2313 = vmatpush2.msra.mxu0 0.0
    %2314 = vmatprep.subr.mxu0 0.0
    %2315 = vmatpush2.msra.mxu0 0.0
    %2316 = vmatprep.subr.mxu0 0.0
    %2317 = vmatpush2.msra.mxu0 0.0
    %2318 = vmatprep.subr.mxu0 0.0
    %2319 = vmatpush2.msra.mxu0 0.0
    %2320 = vmatprep.subr.mxu0 0.0
    %2321 = vmatpush2.msra.mxu0 0.0
    %2322 = vmatprep.subr.mxu0 0.0
    %2323 = vmatpush2.msra.mxu0 0.0
    %2324 = vmatprep.subr.mxu0 0.0
    %2325 = vmatpush2.msra.mxu0 0.0
    %2326 = vmatprep.subr.mxu0 0.0
    %2327 = vmatpush2.msra.mxu0 0.0
    %2328 = vmatprep.subr.mxu0 0.0
    %2329 = vmatpush2.msra.mxu0 0.0
    %2330 = vmatprep.subr.mxu0 0.0
    %2331 = vmatpush2.msra.mxu0 0.0
    %2332 = vmatprep.subr.mxu0 0.0
    %2333 = vmatpush2.msra.mxu0 0.0
    %2334 = vmatprep.mubr.f32.mxu0 0.0
    %2335 = vmatmul.mubr.f32.gmra.mxu0 %v2268
    %v2336 = vpop.f32.mrf.mxu0
    %v2337 = vadd.f32 %v2263, %v2336
    %v2338 = vpop.f32.mrf.mxu0
    %2339 = vdwg.mxu0
    %v2340 = vld [vmem:[#allocation5] sm:$0xff]
    %v2341 = vld [vmem:[#allocation5 + $0x8] sm:$0xff]
    %v2342 = vld [vmem:[#allocation5 + $0x10] sm:$0xff]
    %v2343 = vld [vmem:[#allocation5 + $0x18] sm:$0xff]
    %v2344 = vld [vmem:[#allocation5 + $0x20] sm:$0xff]
    %v2345 = vld [vmem:[#allocation5 + $0x28] sm:$0xff]
    %v2346 = vld [vmem:[#allocation5 + $0x30] sm:$0xff]
    %v2348 = vsel %vm458, %v2340, 0
    %v2351 = vsel %vm458, %v2341, 0
    %v2354 = vsel %vm458, %v2342, 0
    %v2357 = vsel %vm458, %v2343, 0
    %v2360 = vsel %vm458, %v2344, 0
    %v2363 = vsel %vm458, %v2345, 0
    %v2366 = vsel %vm458, %v2346, 0
    %2368 = vmatprep.subr.mxu0 0.0
    %2369 = vmatpush1.msra.mxu0 0.0
    %2370 = vmatprep.subr.mxu0 0.0
    %2371 = vmatpush1.msra.mxu0 0.0
    %2372 = vmatprep.subr.mxu0 0.0
    %2373 = vmatpush1.msra.mxu0 0.0
    %2374 = vmatprep.subr.mxu0 0.0
    %2375 = vmatpush1.msra.mxu0 0.0
    %2376 = vmatprep.subr.mxu0 0.0
    %2377 = vmatpush1.msra.mxu0 0.0
    %2378 = vmatprep.subr.mxu0 0.0
    %2379 = vmatpush1.msra.mxu0 0.0
    %2380 = vmatprep.subr.mxu0 0.0
    %2381 = vmatpush1.msra.mxu0 0.0
    %2382 = vmatprep.subr.mxu0 0.0
    %2383 = vmatpush1.msra.mxu0 0.0
    %2384 = vmatprep.subr.mxu0 0.0
    %2385 = vmatpush1.msra.mxu0 0.0
    %2386 = vmatprep.subr.mxu0 0.0
    %2387 = vmatpush1.msra.mxu0 0.0
    %2388 = vmatprep.subr.mxu0 0.0
    %2389 = vmatpush1.msra.mxu0 0.0
    %2390 = vmatprep.subr.mxu0 0.0
    %2391 = vmatpush1.msra.mxu0 0.0
    %2392 = vmatprep.subr.mxu0 0.0
    %2393 = vmatpush1.msra.mxu0 0.0
    %2394 = vmatprep.subr.mxu0 0.0
    %2395 = vmatpush1.msra.mxu0 0.0
    %2396 = vmatprep.subr.mxu0 0.0
    %2397 = vmatpush1.msra.mxu0 0.0
    %2398 = vmatprep.subr.mxu0 0.0
    %2399 = vmatpush1.msra.mxu0 %v2337
    %2400 = vmatprep.subr.mxu0 0.0
    %2401 = vmatpush2.msra.mxu0 0.0
    %2402 = vmatprep.subr.mxu0 0.0
    %2403 = vmatpush2.msra.mxu0 0.0
    %2404 = vmatprep.subr.mxu0 0.0
    %2405 = vmatpush2.msra.mxu0 0.0
    %2406 = vmatprep.subr.mxu0 0.0
    %2407 = vmatpush2.msra.mxu0 0.0
    %2408 = vmatprep.subr.mxu0 0.0
    %2409 = vmatpush2.msra.mxu0 0.0
    %2410 = vmatprep.subr.mxu0 0.0
    %2411 = vmatpush2.msra.mxu0 0.0
    %2412 = vmatprep.subr.mxu0 0.0
    %2413 = vmatpush2.msra.mxu0 0.0
    %2414 = vmatprep.subr.mxu0 0.0
    %2415 = vmatpush2.msra.mxu0 0.0
    %2416 = vmatprep.subr.mxu0 0.0
    %2417 = vmatpush2.msra.mxu0 0.0
    %2418 = vmatprep.subr.mxu0 0.0
    %2419 = vmatpush2.msra.mxu0 0.0
    %2420 = vmatprep.subr.mxu0 0.0
    %2421 = vmatpush2.msra.mxu0 0.0
    %2422 = vmatprep.subr.mxu0 0.0
    %2423 = vmatpush2.msra.mxu0 0.0
    %2424 = vmatprep.subr.mxu0 0.0
    %2425 = vmatpush2.msra.mxu0 0.0
    %2426 = vmatprep.subr.mxu0 0.0
    %2427 = vmatpush2.msra.mxu0 0.0
    %2428 = vmatprep.subr.mxu0 0.0
    %2429 = vmatpush2.msra.mxu0 0.0
    %2430 = vmatprep.subr.mxu0 0.0
    %2431 = vmatpush2.msra.mxu0 0.0
    %2432 = vmatprep.mubr.f32.mxu0 0.0
    %2433 = vmatmul.mubr.f32.gmra.mxu0 %v2348
    %v2434 = vpop.f32.mrf.mxu0
    %v2435 = vadd.f32 0.0, %v2434
    %v2436 = vpop.f32.mrf.mxu0
    %2437 = vmatprep.mubr.f32.mxu0 0.0
    %2438 = vmatmul.mubr.f32.gmra.mxu0 %v2351
    %v2439 = vpop.f32.mrf.mxu0
    %v2440 = vadd.f32 0.0, %v2439
    %v2441 = vpop.f32.mrf.mxu0
    %2442 = vmatprep.mubr.f32.mxu0 0.0
    %2443 = vmatmul.mubr.f32.gmra.mxu0 %v2354
    %v2444 = vpop.f32.mrf.mxu0
    %v2445 = vadd.f32 0.0, %v2444
    %v2446 = vpop.f32.mrf.mxu0
    %2447 = vmatprep.mubr.f32.mxu0 0.0
    %2448 = vmatmul.mubr.f32.gmra.mxu0 %v2357
    %v2449 = vpop.f32.mrf.mxu0
    %v2450 = vadd.f32 0.0, %v2449
    %v2451 = vpop.f32.mrf.mxu0
    %2452 = vmatprep.mubr.f32.mxu0 0.0
    %2453 = vmatmul.mubr.f32.gmra.mxu0 %v2360
    %v2454 = vpop.f32.mrf.mxu0
    %v2455 = vadd.f32 0.0, %v2454
    %v2456 = vpop.f32.mrf.mxu0
    %2457 = vmatprep.mubr.f32.mxu0 0.0
    %2458 = vmatmul.mubr.f32.gmra.mxu0 %v2363
    %v2459 = vpop.f32.mrf.mxu0
    %v2460 = vadd.f32 0.0, %v2459
    %v2461 = vpop.f32.mrf.mxu0
    %2462 = vmatprep.mubr.f32.mxu0 0.0
    %2463 = vmatmul.mubr.f32.gmra.mxu0 %v2366
    %v2464 = vpop.f32.mrf.mxu0
    %v2465 = vadd.f32 0.0, %v2464
    %v2466 = vpop.f32.mrf.mxu0
    %2467 = vdwg.mxu0
    %vm2468 = vcmask 261120
    %2469 = vst.msk [vmem:[#allocation3] sm:$0xff] %vm2468, %v2435
    %2470 = vst.msk [vmem:[#allocation3 + $0x8] sm:$0xff] %vm2468, %v2440
    %2471 = vst.msk [vmem:[#allocation3 + $0x10] sm:$0xff] %vm2468, %v2445
    %2472 = vst.msk [vmem:[#allocation3 + $0x18] sm:$0xff] %vm2468, %v2450
    %2473 = vst.msk [vmem:[#allocation3 + $0x20] sm:$0xff] %vm2468, %v2455
    %2474 = vst.msk [vmem:[#allocation3 + $0x28] sm:$0xff] %vm2468, %v2460
    %2475 = vst.msk [vmem:[#allocation3 + $0x30] sm:$0xff] %vm2468, %v2465
    %v2476 = vld [vmem:[#allocation3] sm:$0xff]
    %2477 = vmatprep.subr.mxu0 0.0
    %2478 = vmatpush1.msra.mxu0 0.0
    %2479 = vmatprep.subr.mxu0 0.0
    %2480 = vmatpush1.msra.mxu0 0.0
    %2481 = vmatprep.subr.mxu0 0.0
    %2482 = vmatpush1.msra.mxu0 0.0
    %2483 = vmatprep.subr.mxu0 0.0
    %2484 = vmatpush1.msra.mxu0 0.0
    %2485 = vmatprep.subr.mxu0 0.0
    %2486 = vmatpush1.msra.mxu0 0.0
    %2487 = vmatprep.subr.mxu0 0.0
    %2488 = vmatpush1.msra.mxu0 0.0
    %2489 = vmatprep.subr.mxu0 0.0
    %2490 = vmatpush1.msra.mxu0 0.0
    %2491 = vmatprep.subr.mxu0 0.0
    %2492 = vmatpush1.msra.mxu0 0.0
    %2493 = vmatprep.subr.mxu0 0.0
    %2494 = vmatpush1.msra.mxu0 0.0
    %2495 = vmatprep.subr.mxu0 0.0
    %2496 = vmatpush1.msra.mxu0 0.0
    %2497 = vmatprep.subr.mxu0 0.0
    %2498 = vmatpush1.msra.mxu0 0.0
    %2499 = vmatprep.subr.mxu0 0.0
    %2500 = vmatpush1.msra.mxu0 0.0
    %2501 = vmatprep.subr.mxu0 0.0
    %2502 = vmatpush1.msra.mxu0 0.0
    %2503 = vmatprep.subr.mxu0 0.0
    %2504 = vmatpush1.msra.mxu0 0.0
    %2505 = vmatprep.subr.mxu0 0.0
    %2506 = vmatpush1.msra.mxu0 0.0
    %2507 = vmatprep.subr.mxu0 0.0
    %2508 = vmatpush1.msra.mxu0 %v347
    %2509 = vmatprep.subr.mxu0 0.0
    %2510 = vmatpush2.msra.mxu0 0.0
    %2511 = vmatprep.subr.mxu0 0.0
    %2512 = vmatpush2.msra.mxu0 0.0
    %2513 = vmatprep.subr.mxu0 0.0
    %2514 = vmatpush2.msra.mxu0 0.0
    %2515 = vmatprep.subr.mxu0 0.0
    %2516 = vmatpush2.msra.mxu0 0.0
    %2517 = vmatprep.subr.mxu0 0.0
    %2518 = vmatpush2.msra.mxu0 0.0
    %2519 = vmatprep.subr.mxu0 0.0
    %2520 = vmatpush2.msra.mxu0 0.0
    %2521 = vmatprep.subr.mxu0 0.0
    %2522 = vmatpush2.msra.mxu0 0.0
    %2523 = vmatprep.subr.mxu0 0.0
    %2524 = vmatpush2.msra.mxu0 0.0
    %2525 = vmatprep.subr.mxu0 0.0
    %2526 = vmatpush2.msra.mxu0 0.0
    %2527 = vmatprep.subr.mxu0 0.0
    %2528 = vmatpush2.msra.mxu0 0.0
    %2529 = vmatprep.subr.mxu0 0.0
    %2530 = vmatpush2.msra.mxu0 0.0
    %2531 = vmatprep.subr.mxu0 0.0
    %2532 = vmatpush2.msra.mxu0 0.0
    %2533 = vmatprep.subr.mxu0 0.0
    %2534 = vmatpush2.msra.mxu0 0.0
    %2535 = vmatprep.subr.mxu0 0.0
    %2536 = vmatpush2.msra.mxu0 0.0
    %2537 = vmatprep.subr.mxu0 0.0
    %2538 = vmatpush2.msra.mxu0 0.0
    %2539 = vmatprep.subr.mxu0 0.0
    %2540 = vmatpush2.msra.mxu0 0.0
    %2541 = vmatprep.mubr.f32.mxu0 0.0
    %2542 = vmatmul.mubr.f32.gmra.mxu0 %v459
    %v2543 = vpop.f32.mrf.mxu0
    %v2544 = vadd.f32 0.0, %v2543
    %v2545 = vpop.f32.mrf.mxu0
    %2546 = vdwg.mxu0
    %v2547 = vadd.f32 %v2476, %v2544
    %v2548 = vxor.u32 %v2547, 2147483648
    %v2549 = vmul.f32 %v2548, 1.442695
    %v2550 = vpow.pop %v2549
    %v2551 = vadd.f32 %v2550, 1.0
    %v2552 = vrcp.pop %v2551
    %v2553 = vmul.f32 1.0, %v2552
    %v2554 = vtanh.pop %v2547
    %v2555 = vmul.f32 %v2553, 0.0
    %2557 = vrot.lane.b32.xlu0 %v2554, 112
    %v2558 = vpop.permute.xlu0 %2557
    %v2560 = vmul.f32 %v2553, %v2558
    %2562 = vrot.lane.b32.xlu0 %v2560, 8
    %v2563 = vpop.permute.xlu0 %2562
    %v2565 = vadd.f32 %v2555, %v2563
    %v2566 = vtanh.pop %v2565
    %2568 = vrot.lane.b32.xlu0 %v2566, 16
    %v2569 = vpop.permute.xlu0 %2568
    %v2571 = vmul.f32 %v2553, %v2569
    %2572 = vmatprep.subr.mxu0 0.0
    %2573 = vmatpush1.msra.mxu0 0.0
    %2574 = vmatprep.subr.mxu0 0.0
    %2575 = vmatpush1.msra.mxu0 0.0
    %2576 = vmatprep.subr.mxu0 0.0
    %2577 = vmatpush1.msra.mxu0 0.0
    %2578 = vmatprep.subr.mxu0 0.0
    %2579 = vmatpush1.msra.mxu0 0.0
    %2580 = vmatprep.subr.mxu0 0.0
    %2581 = vmatpush1.msra.mxu0 0.0
    %2582 = vmatprep.subr.mxu0 0.0
    %2583 = vmatpush1.msra.mxu0 0.0
    %2584 = vmatprep.subr.mxu0 0.0
    %2585 = vmatpush1.msra.mxu0 0.0
    %2586 = vmatprep.subr.mxu0 0.0
    %2587 = vmatpush1.msra.mxu0 0.0
    %2588 = vmatprep.subr.mxu0 0.0
    %2589 = vmatpush1.msra.mxu0 0.0
    %2590 = vmatprep.subr.mxu0 0.0
    %2591 = vmatpush1.msra.mxu0 0.0
    %2592 = vmatprep.subr.mxu0 0.0
    %2593 = vmatpush1.msra.mxu0 0.0
    %2594 = vmatprep.subr.mxu0 0.0
    %2595 = vmatpush1.msra.mxu0 0.0
    %2596 = vmatprep.subr.mxu0 0.0
    %2597 = vmatpush1.msra.mxu0 0.0
    %2598 = vmatprep.subr.mxu0 0.0
    %2599 = vmatpush1.msra.mxu0 0.0
    %2600 = vmatprep.subr.mxu0 0.0
    %2601 = vmatpush1.msra.mxu0 %v350
    %2602 = vmatprep.subr.mxu0 0.0
    %2603 = vmatpush1.msra.mxu0 %v349
    %2604 = vmatprep.subr.mxu0 0.0
    %2605 = vmatpush2.msra.mxu0 0.0
    %2606 = vmatprep.subr.mxu0 0.0
    %2607 = vmatpush2.msra.mxu0 0.0
    %2608 = vmatprep.subr.mxu0 0.0
    %2609 = vmatpush2.msra.mxu0 0.0
    %2610 = vmatprep.subr.mxu0 0.0
    %2611 = vmatpush2.msra.mxu0 0.0
    %2612 = vmatprep.subr.mxu0 0.0
    %2613 = vmatpush2.msra.mxu0 0.0
    %2614 = vmatprep.subr.mxu0 0.0
    %2615 = vmatpush2.msra.mxu0 0.0
    %2616 = vmatprep.subr.mxu0 0.0
    %2617 = vmatpush2.msra.mxu0 0.0
    %2618 = vmatprep.subr.mxu0 0.0
    %2619 = vmatpush2.msra.mxu0 0.0
    %2620 = vmatprep.subr.mxu0 0.0
    %2621 = vmatpush2.msra.mxu0 0.0
    %2622 = vmatprep.subr.mxu0 0.0
    %2623 = vmatpush2.msra.mxu0 0.0
    %2624 = vmatprep.subr.mxu0 0.0
    %2625 = vmatpush2.msra.mxu0 0.0
    %2626 = vmatprep.subr.mxu0 0.0
    %2627 = vmatpush2.msra.mxu0 0.0
    %2628 = vmatprep.subr.mxu0 0.0
    %2629 = vmatpush2.msra.mxu0 0.0
    %2630 = vmatprep.subr.mxu0 0.0
    %2631 = vmatpush2.msra.mxu0 0.0
    %2632 = vmatprep.subr.mxu0 0.0
    %2633 = vmatpush2.msra.mxu0 0.0
    %2634 = vmatprep.subr.mxu0 0.0
    %2635 = vmatpush2.msra.mxu0 0.0
    %2636 = vmatprep.mubr.f32.mxu0 0.0
    %2637 = vmatmul.mubr.f32.gmra.mxu0 %v361
    %v2638 = vpop.f32.mrf.mxu0
    %v2639 = vadd.f32 0.0, %v2638
    %v2640 = vpop.f32.mrf.mxu0
    %2641 = vdwg.mxu0
    %2643 = vrot.lane.b32.xlu0 %v2571, 104
    %v2644 = vpop.permute.xlu0 %2643
    %v2645 = vsel %vm458, %v2644, 0
    %2647 = vmatprep.subr.mxu0 0.0
    %2648 = vmatpush1.msra.mxu0 0.0
    %2649 = vmatprep.subr.mxu0 0.0
    %2650 = vmatpush1.msra.mxu0 0.0
    %2651 = vmatprep.subr.mxu0 0.0
    %2652 = vmatpush1.msra.mxu0 0.0
    %2653 = vmatprep.subr.mxu0 0.0
    %2654 = vmatpush1.msra.mxu0 0.0
    %2655 = vmatprep.subr.mxu0 0.0
    %2656 = vmatpush1.msra.mxu0 0.0
    %2657 = vmatprep.subr.mxu0 0.0
    %2658 = vmatpush1.msra.mxu0 0.0
    %2659 = vmatprep.subr.mxu0 0.0
    %2660 = vmatpush1.msra.mxu0 0.0
    %2661 = vmatprep.subr.mxu0 0.0
    %2662 = vmatpush1.msra.mxu0 0.0
    %2663 = vmatprep.subr.mxu0 0.0
    %2664 = vmatpush1.msra.mxu0 0.0
    %2665 = vmatprep.subr.mxu0 0.0
    %2666 = vmatpush1.msra.mxu0 0.0
    %2667 = vmatprep.subr.mxu0 0.0
    %2668 = vmatpush1.msra.mxu0 0.0
    %2669 = vmatprep.subr.mxu0 0.0
    %2670 = vmatpush1.msra.mxu0 0.0
    %2671 = vmatprep.subr.mxu0 0.0
    %2672 = vmatpush1.msra.mxu0 0.0
    %2673 = vmatprep.subr.mxu0 0.0
    %2674 = vmatpush1.msra.mxu0 0.0
    %2675 = vmatprep.subr.mxu0 0.0
    %2676 = vmatpush1.msra.mxu0 0.0
    %2677 = vmatprep.subr.mxu0 0.0
    %2678 = vmatpush1.msra.mxu0 %v348
    %2679 = vmatprep.subr.mxu0 0.0
    %2680 = vmatpush2.msra.mxu0 0.0
    %2681 = vmatprep.subr.mxu0 0.0
    %2682 = vmatpush2.msra.mxu0 0.0
    %2683 = vmatprep.subr.mxu0 0.0
    %2684 = vmatpush2.msra.mxu0 0.0
    %2685 = vmatprep.subr.mxu0 0.0
    %2686 = vmatpush2.msra.mxu0 0.0
    %2687 = vmatprep.subr.mxu0 0.0
    %2688 = vmatpush2.msra.mxu0 0.0
    %2689 = vmatprep.subr.mxu0 0.0
    %2690 = vmatpush2.msra.mxu0 0.0
    %2691 = vmatprep.subr.mxu0 0.0
    %2692 = vmatpush2.msra.mxu0 0.0
    %2693 = vmatprep.subr.mxu0 0.0
    %2694 = vmatpush2.msra.mxu0 0.0
    %2695 = vmatprep.subr.mxu0 0.0
    %2696 = vmatpush2.msra.mxu0 0.0
    %2697 = vmatprep.subr.mxu0 0.0
    %2698 = vmatpush2.msra.mxu0 0.0
    %2699 = vmatprep.subr.mxu0 0.0
    %2700 = vmatpush2.msra.mxu0 0.0
    %2701 = vmatprep.subr.mxu0 0.0
    %2702 = vmatpush2.msra.mxu0 0.0
    %2703 = vmatprep.subr.mxu0 0.0
    %2704 = vmatpush2.msra.mxu0 0.0
    %2705 = vmatprep.subr.mxu0 0.0
    %2706 = vmatpush2.msra.mxu0 0.0
    %2707 = vmatprep.subr.mxu0 0.0
    %2708 = vmatpush2.msra.mxu0 0.0
    %2709 = vmatprep.subr.mxu0 0.0
    %2710 = vmatpush2.msra.mxu0 0.0
    %2711 = vmatprep.mubr.f32.mxu0 0.0
    %2712 = vmatmul.mubr.f32.gmra.mxu0 %v2645
    %v2713 = vpop.f32.mrf.mxu0
    %v2714 = vadd.f32 %v2639, %v2713
    %v2715 = vpop.f32.mrf.mxu0
    %2716 = vdwg.mxu0
    %v2717 = vadd.f32 %v2714, %v356
    %v2718 = vxor.u32 %v2717, 2147483648
    %v2719 = vmul.f32 %v2718, 1.442695
    %v2720 = vpow.pop %v2719
    %v2721 = vadd.f32 %v2720, 1.0
    %v2722 = vrcp.pop %v2721
    %v2723 = vmul.f32 1.0, %v2722
    %v2724 = vtanh.pop %v2717
    %v2725 = vmul.f32 %v2723, 0.0
    %2727 = vrot.lane.b32.xlu0 %v2724, 96
    %v2728 = vpop.permute.xlu0 %2727
    %v2730 = vmul.f32 %v2723, %v2728
    %2732 = vrot.lane.b32.xlu0 %v2730, 16
    %v2733 = vpop.permute.xlu0 %2732
    %v2735 = vadd.f32 %v2725, %v2733
    %v2736 = vtanh.pop %v2735
    %2738 = vrot.lane.b32.xlu0 %v2736, 32
    %v2739 = vpop.permute.xlu0 %2738
    %v2741 = vmul.f32 %v2723, %v2739
    %2743 = vrot.lane.b32.xlu0 %v2741, 80
    %v2744 = vpop.permute.xlu0 %2743
    %2746 = vst.msk [vmem:[#allocation4] sm:$0xff] %vm359, %v2744
    %v2747 = vld [vmem:[#allocation3 + $0x8] sm:$0xff]
    %2748 = vmatprep.subr.mxu0 0.0
    %2749 = vmatpush1.msra.mxu0 0.0
    %2750 = vmatprep.subr.mxu0 0.0
    %2751 = vmatpush1.msra.mxu0 0.0
    %2752 = vmatprep.subr.mxu0 0.0
    %2753 = vmatpush1.msra.mxu0 0.0
    %2754 = vmatprep.subr.mxu0 0.0
    %2755 = vmatpush1.msra.mxu0 0.0
    %2756 = vmatprep.subr.mxu0 0.0
    %2757 = vmatpush1.msra.mxu0 0.0
    %2758 = vmatprep.subr.mxu0 0.0
    %2759 = vmatpush1.msra.mxu0 0.0
    %2760 = vmatprep.subr.mxu0 0.0
    %2761 = vmatpush1.msra.mxu0 0.0
    %2762 = vmatprep.subr.mxu0 0.0
    %2763 = vmatpush1.msra.mxu0 0.0
    %2764 = vmatprep.subr.mxu0 0.0
    %2765 = vmatpush1.msra.mxu0 0.0
    %2766 = vmatprep.subr.mxu0 0.0
    %2767 = vmatpush1.msra.mxu0 0.0
    %2768 = vmatprep.subr.mxu0 0.0
    %2769 = vmatpush1.msra.mxu0 0.0
    %2770 = vmatprep.subr.mxu0 0.0
    %2771 = vmatpush1.msra.mxu0 0.0
    %2772 = vmatprep.subr.mxu0 0.0
    %2773 = vmatpush1.msra.mxu0 0.0
    %2774 = vmatprep.subr.mxu0 0.0
    %2775 = vmatpush1.msra.mxu0 0.0
    %2776 = vmatprep.subr.mxu0 0.0
    %2777 = vmatpush1.msra.mxu0 0.0
    %2778 = vmatprep.subr.mxu0 0.0
    %2779 = vmatpush1.msra.mxu0 %v347
    %2780 = vmatprep.subr.mxu0 0.0
    %2781 = vmatpush2.msra.mxu0 0.0
    %2782 = vmatprep.subr.mxu0 0.0
    %2783 = vmatpush2.msra.mxu0 0.0
    %2784 = vmatprep.subr.mxu0 0.0
    %2785 = vmatpush2.msra.mxu0 0.0
    %2786 = vmatprep.subr.mxu0 0.0
    %2787 = vmatpush2.msra.mxu0 0.0
    %2788 = vmatprep.subr.mxu0 0.0
    %2789 = vmatpush2.msra.mxu0 0.0
    %2790 = vmatprep.subr.mxu0 0.0
    %2791 = vmatpush2.msra.mxu0 0.0
    %2792 = vmatprep.subr.mxu0 0.0
    %2793 = vmatpush2.msra.mxu0 0.0
    %2794 = vmatprep.subr.mxu0 0.0
    %2795 = vmatpush2.msra.mxu0 0.0
    %2796 = vmatprep.subr.mxu0 0.0
    %2797 = vmatpush2.msra.mxu0 0.0
    %2798 = vmatprep.subr.mxu0 0.0
    %2799 = vmatpush2.msra.mxu0 0.0
    %2800 = vmatprep.subr.mxu0 0.0
    %2801 = vmatpush2.msra.mxu0 0.0
    %2802 = vmatprep.subr.mxu0 0.0
    %2803 = vmatpush2.msra.mxu0 0.0
    %2804 = vmatprep.subr.mxu0 0.0
    %2805 = vmatpush2.msra.mxu0 0.0
    %2806 = vmatprep.subr.mxu0 0.0
    %2807 = vmatpush2.msra.mxu0 0.0
    %2808 = vmatprep.subr.mxu0 0.0
    %2809 = vmatpush2.msra.mxu0 0.0
    %2810 = vmatprep.subr.mxu0 0.0
    %2811 = vmatpush2.msra.mxu0 0.0
    %2812 = vmatprep.mubr.f32.mxu0 0.0
    %2813 = vmatmul.mubr.f32.gmra.mxu0 %v2645
    %v2814 = vpop.f32.mrf.mxu0
    %v2815 = vadd.f32 0.0, %v2814
    %v2816 = vpop.f32.mrf.mxu0
    %2817 = vdwg.mxu0
    %v2818 = vadd.f32 %v2747, %v2815
    %v2819 = vxor.u32 %v2818, 2147483648
    %v2820 = vmul.f32 %v2819, 1.442695
    %v2821 = vpow.pop %v2820
    %v2822 = vadd.f32 %v2821, 1.0
    %v2823 = vrcp.pop %v2822
    %v2824 = vmul.f32 1.0, %v2823
    %v2825 = vtanh.pop %v2818
    %v2826 = vmul.f32 %v2824, %v2565
    %2828 = vrot.lane.b32.xlu0 %v2825, 112
    %v2829 = vpop.permute.xlu0 %2828
    %v2831 = vmul.f32 %v2824, %v2829
    %2833 = vrot.lane.b32.xlu0 %v2831, 8
    %v2834 = vpop.permute.xlu0 %2833
    %v2836 = vadd.f32 %v2826, %v2834
    %v2837 = vtanh.pop %v2836
    %2839 = vrot.lane.b32.xlu0 %v2837, 16
    %v2840 = vpop.permute.xlu0 %2839
    %v2842 = vmul.f32 %v2824, %v2840
    %v2843 = vsel %vm359, %v2744, 0
    %2845 = vmatprep.subr.mxu0 0.0
    %2846 = vmatpush1.msra.mxu0 0.0
    %2847 = vmatprep.subr.mxu0 0.0
    %2848 = vmatpush1.msra.mxu0 0.0
    %2849 = vmatprep.subr.mxu0 0.0
    %2850 = vmatpush1.msra.mxu0 0.0
    %2851 = vmatprep.subr.mxu0 0.0
    %2852 = vmatpush1.msra.mxu0 0.0
    %2853 = vmatprep.subr.mxu0 0.0
    %2854 = vmatpush1.msra.mxu0 0.0
    %2855 = vmatprep.subr.mxu0 0.0
    %2856 = vmatpush1.msra.mxu0 0.0
    %2857 = vmatprep.subr.mxu0 0.0
    %2858 = vmatpush1.msra.mxu0 0.0
    %2859 = vmatprep.subr.mxu0 0.0
    %2860 = vmatpush1.msra.mxu0 0.0
    %2861 = vmatprep.subr.mxu0 0.0
    %2862 = vmatpush1.msra.mxu0 0.0
    %2863 = vmatprep.subr.mxu0 0.0
    %2864 = vmatpush1.msra.mxu0 0.0
    %2865 = vmatprep.subr.mxu0 0.0
    %2866 = vmatpush1.msra.mxu0 0.0
    %2867 = vmatprep.subr.mxu0 0.0
    %2868 = vmatpush1.msra.mxu0 0.0
    %2869 = vmatprep.subr.mxu0 0.0
    %2870 = vmatpush1.msra.mxu0 0.0
    %2871 = vmatprep.subr.mxu0 0.0
    %2872 = vmatpush1.msra.mxu0 0.0
    %2873 = vmatprep.subr.mxu0 0.0
    %2874 = vmatpush1.msra.mxu0 %v350
    %2875 = vmatprep.subr.mxu0 0.0
    %2876 = vmatpush1.msra.mxu0 %v349
    %2877 = vmatprep.subr.mxu0 0.0
    %2878 = vmatpush2.msra.mxu0 0.0
    %2879 = vmatprep.subr.mxu0 0.0
    %2880 = vmatpush2.msra.mxu0 0.0
    %2881 = vmatprep.subr.mxu0 0.0
    %2882 = vmatpush2.msra.mxu0 0.0
    %2883 = vmatprep.subr.mxu0 0.0
    %2884 = vmatpush2.msra.mxu0 0.0
    %2885 = vmatprep.subr.mxu0 0.0
    %2886 = vmatpush2.msra.mxu0 0.0
    %2887 = vmatprep.subr.mxu0 0.0
    %2888 = vmatpush2.msra.mxu0 0.0
    %2889 = vmatprep.subr.mxu0 0.0
    %2890 = vmatpush2.msra.mxu0 0.0
    %2891 = vmatprep.subr.mxu0 0.0
    %2892 = vmatpush2.msra.mxu0 0.0
    %2893 = vmatprep.subr.mxu0 0.0
    %2894 = vmatpush2.msra.mxu0 0.0
    %2895 = vmatprep.subr.mxu0 0.0
    %2896 = vmatpush2.msra.mxu0 0.0
    %2897 = vmatprep.subr.mxu0 0.0
    %2898 = vmatpush2.msra.mxu0 0.0
    %2899 = vmatprep.subr.mxu0 0.0
    %2900 = vmatpush2.msra.mxu0 0.0
    %2901 = vmatprep.subr.mxu0 0.0
    %2902 = vmatpush2.msra.mxu0 0.0
    %2903 = vmatprep.subr.mxu0 0.0
    %2904 = vmatpush2.msra.mxu0 0.0
    %2905 = vmatprep.subr.mxu0 0.0
    %2906 = vmatpush2.msra.mxu0 0.0
    %2907 = vmatprep.subr.mxu0 0.0
    %2908 = vmatpush2.msra.mxu0 0.0
    %2909 = vmatprep.mubr.f32.mxu0 0.0
    %2910 = vmatmul.mubr.f32.gmra.mxu0 %v2843
    %v2911 = vpop.f32.mrf.mxu0
    %v2912 = vadd.f32 0.0, %v2911
    %v2913 = vpop.f32.mrf.mxu0
    %2914 = vdwg.mxu0
    %2916 = vrot.lane.b32.xlu0 %v2842, 104
    %v2917 = vpop.permute.xlu0 %2916
    %v2918 = vsel %vm458, %v2917, 0
    %2920 = vmatprep.subr.mxu0 0.0
    %2921 = vmatpush1.msra.mxu0 0.0
    %2922 = vmatprep.subr.mxu0 0.0
    %2923 = vmatpush1.msra.mxu0 0.0
    %2924 = vmatprep.subr.mxu0 0.0
    %2925 = vmatpush1.msra.mxu0 0.0
    %2926 = vmatprep.subr.mxu0 0.0
    %2927 = vmatpush1.msra.mxu0 0.0
    %2928 = vmatprep.subr.mxu0 0.0
    %2929 = vmatpush1.msra.mxu0 0.0
    %2930 = vmatprep.subr.mxu0 0.0
    %2931 = vmatpush1.msra.mxu0 0.0
    %2932 = vmatprep.subr.mxu0 0.0
    %2933 = vmatpush1.msra.mxu0 0.0
    %2934 = vmatprep.subr.mxu0 0.0
    %2935 = vmatpush1.msra.mxu0 0.0
    %2936 = vmatprep.subr.mxu0 0.0
    %2937 = vmatpush1.msra.mxu0 0.0
    %2938 = vmatprep.subr.mxu0 0.0
    %2939 = vmatpush1.msra.mxu0 0.0
    %2940 = vmatprep.subr.mxu0 0.0
    %2941 = vmatpush1.msra.mxu0 0.0
    %2942 = vmatprep.subr.mxu0 0.0
    %2943 = vmatpush1.msra.mxu0 0.0
    %2944 = vmatprep.subr.mxu0 0.0
    %2945 = vmatpush1.msra.mxu0 0.0
    %2946 = vmatprep.subr.mxu0 0.0
    %2947 = vmatpush1.msra.mxu0 0.0
    %2948 = vmatprep.subr.mxu0 0.0
    %2949 = vmatpush1.msra.mxu0 0.0
    %2950 = vmatprep.subr.mxu0 0.0
    %2951 = vmatpush1.msra.mxu0 %v348
    %2952 = vmatprep.subr.mxu0 0.0
    %2953 = vmatpush2.msra.mxu0 0.0
    %2954 = vmatprep.subr.mxu0 0.0
    %2955 = vmatpush2.msra.mxu0 0.0
    %2956 = vmatprep.subr.mxu0 0.0
    %2957 = vmatpush2.msra.mxu0 0.0
    %2958 = vmatprep.subr.mxu0 0.0
    %2959 = vmatpush2.msra.mxu0 0.0
    %2960 = vmatprep.subr.mxu0 0.0
    %2961 = vmatpush2.msra.mxu0 0.0
    %2962 = vmatprep.subr.mxu0 0.0
    %2963 = vmatpush2.msra.mxu0 0.0
    %2964 = vmatprep.subr.mxu0 0.0
    %2965 = vmatpush2.msra.mxu0 0.0
    %2966 = vmatprep.subr.mxu0 0.0
    %2967 = vmatpush2.msra.mxu0 0.0
    %2968 = vmatprep.subr.mxu0 0.0
    %2969 = vmatpush2.msra.mxu0 0.0
    %2970 = vmatprep.subr.mxu0 0.0
    %2971 = vmatpush2.msra.mxu0 0.0
    %2972 = vmatprep.subr.mxu0 0.0
    %2973 = vmatpush2.msra.mxu0 0.0
    %2974 = vmatprep.subr.mxu0 0.0
    %2975 = vmatpush2.msra.mxu0 0.0
    %2976 = vmatprep.subr.mxu0 0.0
    %2977 = vmatpush2.msra.mxu0 0.0
    %2978 = vmatprep.subr.mxu0 0.0
    %2979 = vmatpush2.msra.mxu0 0.0
    %2980 = vmatprep.subr.mxu0 0.0
    %2981 = vmatpush2.msra.mxu0 0.0
    %2982 = vmatprep.subr.mxu0 0.0
    %2983 = vmatpush2.msra.mxu0 0.0
    %2984 = vmatprep.mubr.f32.mxu0 0.0
    %2985 = vmatmul.mubr.f32.gmra.mxu0 %v2918
    %v2986 = vpop.f32.mrf.mxu0
    %v2987 = vadd.f32 %v2912, %v2986
    %v2988 = vpop.f32.mrf.mxu0
    %2989 = vdwg.mxu0
    %v2990 = vadd.f32 %v2987, %v356
    %v2991 = vxor.u32 %v2990, 2147483648
    %v2992 = vmul.f32 %v2991, 1.442695
    %v2993 = vpow.pop %v2992
    %v2994 = vadd.f32 %v2993, 1.0
    %v2995 = vrcp.pop %v2994
    %v2996 = vmul.f32 1.0, %v2995
    %v2997 = vtanh.pop %v2990
    %v2998 = vmul.f32 %v2996, %v2735
    %3000 = vrot.lane.b32.xlu0 %v2997, 96
    %v3001 = vpop.permute.xlu0 %3000
    %v3003 = vmul.f32 %v2996, %v3001
    %3005 = vrot.lane.b32.xlu0 %v3003, 16
    %v3006 = vpop.permute.xlu0 %3005
    %v3008 = vadd.f32 %v2998, %v3006
    %v3009 = vtanh.pop %v3008
    %3011 = vrot.lane.b32.xlu0 %v3009, 32
    %v3012 = vpop.permute.xlu0 %3011
    %v3014 = vmul.f32 %v2996, %v3012
    %3016 = vrot.lane.b32.xlu0 %v3014, 80
    %v3017 = vpop.permute.xlu0 %3016
    %3019 = vst.msk [vmem:[#allocation4 + $0x8] sm:$0xff] %vm359, %v3017
    %v3020 = vld [vmem:[#allocation3 + $0x10] sm:$0xff]
    %3021 = vmatprep.subr.mxu0 0.0
    %3022 = vmatpush1.msra.mxu0 0.0
    %3023 = vmatprep.subr.mxu0 0.0
    %3024 = vmatpush1.msra.mxu0 0.0
    %3025 = vmatprep.subr.mxu0 0.0
    %3026 = vmatpush1.msra.mxu0 0.0
    %3027 = vmatprep.subr.mxu0 0.0
    %3028 = vmatpush1.msra.mxu0 0.0
    %3029 = vmatprep.subr.mxu0 0.0
    %3030 = vmatpush1.msra.mxu0 0.0
    %3031 = vmatprep.subr.mxu0 0.0
    %3032 = vmatpush1.msra.mxu0 0.0
    %3033 = vmatprep.subr.mxu0 0.0
    %3034 = vmatpush1.msra.mxu0 0.0
    %3035 = vmatprep.subr.mxu0 0.0
    %3036 = vmatpush1.msra.mxu0 0.0
    %3037 = vmatprep.subr.mxu0 0.0
    %3038 = vmatpush1.msra.mxu0 0.0
    %3039 = vmatprep.subr.mxu0 0.0
    %3040 = vmatpush1.msra.mxu0 0.0
    %3041 = vmatprep.subr.mxu0 0.0
    %3042 = vmatpush1.msra.mxu0 0.0
    %3043 = vmatprep.subr.mxu0 0.0
    %3044 = vmatpush1.msra.mxu0 0.0
    %3045 = vmatprep.subr.mxu0 0.0
    %3046 = vmatpush1.msra.mxu0 0.0
    %3047 = vmatprep.subr.mxu0 0.0
    %3048 = vmatpush1.msra.mxu0 0.0
    %3049 = vmatprep.subr.mxu0 0.0
    %3050 = vmatpush1.msra.mxu0 0.0
    %3051 = vmatprep.subr.mxu0 0.0
    %3052 = vmatpush1.msra.mxu0 %v347
    %3053 = vmatprep.subr.mxu0 0.0
    %3054 = vmatpush2.msra.mxu0 0.0
    %3055 = vmatprep.subr.mxu0 0.0
    %3056 = vmatpush2.msra.mxu0 0.0
    %3057 = vmatprep.subr.mxu0 0.0
    %3058 = vmatpush2.msra.mxu0 0.0
    %3059 = vmatprep.subr.mxu0 0.0
    %3060 = vmatpush2.msra.mxu0 0.0
    %3061 = vmatprep.subr.mxu0 0.0
    %3062 = vmatpush2.msra.mxu0 0.0
    %3063 = vmatprep.subr.mxu0 0.0
    %3064 = vmatpush2.msra.mxu0 0.0
    %3065 = vmatprep.subr.mxu0 0.0
    %3066 = vmatpush2.msra.mxu0 0.0
    %3067 = vmatprep.subr.mxu0 0.0
    %3068 = vmatpush2.msra.mxu0 0.0
    %3069 = vmatprep.subr.mxu0 0.0
    %3070 = vmatpush2.msra.mxu0 0.0
    %3071 = vmatprep.subr.mxu0 0.0
    %3072 = vmatpush2.msra.mxu0 0.0
    %3073 = vmatprep.subr.mxu0 0.0
    %3074 = vmatpush2.msra.mxu0 0.0
    %3075 = vmatprep.subr.mxu0 0.0
    %3076 = vmatpush2.msra.mxu0 0.0
    %3077 = vmatprep.subr.mxu0 0.0
    %3078 = vmatpush2.msra.mxu0 0.0
    %3079 = vmatprep.subr.mxu0 0.0
    %3080 = vmatpush2.msra.mxu0 0.0
    %3081 = vmatprep.subr.mxu0 0.0
    %3082 = vmatpush2.msra.mxu0 0.0
    %3083 = vmatprep.subr.mxu0 0.0
    %3084 = vmatpush2.msra.mxu0 0.0
    %3085 = vmatprep.mubr.f32.mxu0 0.0
    %3086 = vmatmul.mubr.f32.gmra.mxu0 %v2918
    %v3087 = vpop.f32.mrf.mxu0
    %v3088 = vadd.f32 0.0, %v3087
    %v3089 = vpop.f32.mrf.mxu0
    %3090 = vdwg.mxu0
    %v3091 = vadd.f32 %v3020, %v3088
    %v3092 = vxor.u32 %v3091, 2147483648
    %v3093 = vmul.f32 %v3092, 1.442695
    %v3094 = vpow.pop %v3093
    %v3095 = vadd.f32 %v3094, 1.0
    %v3096 = vrcp.pop %v3095
    %v3097 = vmul.f32 1.0, %v3096
    %v3098 = vtanh.pop %v3091
    %v3099 = vmul.f32 %v3097, %v2836
    %3101 = vrot.lane.b32.xlu0 %v3098, 112
    %v3102 = vpop.permute.xlu0 %3101
    %v3104 = vmul.f32 %v3097, %v3102
    %3106 = vrot.lane.b32.xlu0 %v3104, 8
    %v3107 = vpop.permute.xlu0 %3106
    %v3109 = vadd.f32 %v3099, %v3107
    %v3110 = vtanh.pop %v3109
    %3112 = vrot.lane.b32.xlu0 %v3110, 16
    %v3113 = vpop.permute.xlu0 %3112
    %v3115 = vmul.f32 %v3097, %v3113
    %v3116 = vsel %vm359, %v3017, 0
    %3118 = vmatprep.subr.mxu0 0.0
    %3119 = vmatpush1.msra.mxu0 0.0
    %3120 = vmatprep.subr.mxu0 0.0
    %3121 = vmatpush1.msra.mxu0 0.0
    %3122 = vmatprep.subr.mxu0 0.0
    %3123 = vmatpush1.msra.mxu0 0.0
    %3124 = vmatprep.subr.mxu0 0.0
    %3125 = vmatpush1.msra.mxu0 0.0
    %3126 = vmatprep.subr.mxu0 0.0
    %3127 = vmatpush1.msra.mxu0 0.0
    %3128 = vmatprep.subr.mxu0 0.0
    %3129 = vmatpush1.msra.mxu0 0.0
    %3130 = vmatprep.subr.mxu0 0.0
    %3131 = vmatpush1.msra.mxu0 0.0
    %3132 = vmatprep.subr.mxu0 0.0
    %3133 = vmatpush1.msra.mxu0 0.0
    %3134 = vmatprep.subr.mxu0 0.0
    %3135 = vmatpush1.msra.mxu0 0.0
    %3136 = vmatprep.subr.mxu0 0.0
    %3137 = vmatpush1.msra.mxu0 0.0
    %3138 = vmatprep.subr.mxu0 0.0
    %3139 = vmatpush1.msra.mxu0 0.0
    %3140 = vmatprep.subr.mxu0 0.0
    %3141 = vmatpush1.msra.mxu0 0.0
    %3142 = vmatprep.subr.mxu0 0.0
    %3143 = vmatpush1.msra.mxu0 0.0
    %3144 = vmatprep.subr.mxu0 0.0
    %3145 = vmatpush1.msra.mxu0 0.0
    %3146 = vmatprep.subr.mxu0 0.0
    %3147 = vmatpush1.msra.mxu0 %v350
    %3148 = vmatprep.subr.mxu0 0.0
    %3149 = vmatpush1.msra.mxu0 %v349
    %3150 = vmatprep.subr.mxu0 0.0
    %3151 = vmatpush2.msra.mxu0 0.0
    %3152 = vmatprep.subr.mxu0 0.0
    %3153 = vmatpush2.msra.mxu0 0.0
    %3154 = vmatprep.subr.mxu0 0.0
    %3155 = vmatpush2.msra.mxu0 0.0
    %3156 = vmatprep.subr.mxu0 0.0
    %3157 = vmatpush2.msra.mxu0 0.0
    %3158 = vmatprep.subr.mxu0 0.0
    %3159 = vmatpush2.msra.mxu0 0.0
    %3160 = vmatprep.subr.mxu0 0.0
    %3161 = vmatpush2.msra.mxu0 0.0
    %3162 = vmatprep.subr.mxu0 0.0
    %3163 = vmatpush2.msra.mxu0 0.0
    %3164 = vmatprep.subr.mxu0 0.0
    %3165 = vmatpush2.msra.mxu0 0.0
    %3166 = vmatprep.subr.mxu0 0.0
    %3167 = vmatpush2.msra.mxu0 0.0
    %3168 = vmatprep.subr.mxu0 0.0
    %3169 = vmatpush2.msra.mxu0 0.0
    %3170 = vmatprep.subr.mxu0 0.0
    %3171 = vmatpush2.msra.mxu0 0.0
    %3172 = vmatprep.subr.mxu0 0.0
    %3173 = vmatpush2.msra.mxu0 0.0
    %3174 = vmatprep.subr.mxu0 0.0
    %3175 = vmatpush2.msra.mxu0 0.0
    %3176 = vmatprep.subr.mxu0 0.0
    %3177 = vmatpush2.msra.mxu0 0.0
    %3178 = vmatprep.subr.mxu0 0.0
    %3179 = vmatpush2.msra.mxu0 0.0
    %3180 = vmatprep.subr.mxu0 0.0
    %3181 = vmatpush2.msra.mxu0 0.0
    %3182 = vmatprep.mubr.f32.mxu0 0.0
    %3183 = vmatmul.mubr.f32.gmra.mxu0 %v3116
    %v3184 = vpop.f32.mrf.mxu0
    %v3185 = vadd.f32 0.0, %v3184
    %v3186 = vpop.f32.mrf.mxu0
    %3187 = vdwg.mxu0
    %3189 = vrot.lane.b32.xlu0 %v3115, 104
    %v3190 = vpop.permute.xlu0 %3189
    %v3191 = vsel %vm458, %v3190, 0
    %3193 = vmatprep.subr.mxu0 0.0
    %3194 = vmatpush1.msra.mxu0 0.0
    %3195 = vmatprep.subr.mxu0 0.0
    %3196 = vmatpush1.msra.mxu0 0.0
    %3197 = vmatprep.subr.mxu0 0.0
    %3198 = vmatpush1.msra.mxu0 0.0
    %3199 = vmatprep.subr.mxu0 0.0
    %3200 = vmatpush1.msra.mxu0 0.0
    %3201 = vmatprep.subr.mxu0 0.0
    %3202 = vmatpush1.msra.mxu0 0.0
    %3203 = vmatprep.subr.mxu0 0.0
    %3204 = vmatpush1.msra.mxu0 0.0
    %3205 = vmatprep.subr.mxu0 0.0
    %3206 = vmatpush1.msra.mxu0 0.0
    %3207 = vmatprep.subr.mxu0 0.0
    %3208 = vmatpush1.msra.mxu0 0.0
    %3209 = vmatprep.subr.mxu0 0.0
    %3210 = vmatpush1.msra.mxu0 0.0
    %3211 = vmatprep.subr.mxu0 0.0
    %3212 = vmatpush1.msra.mxu0 0.0
    %3213 = vmatprep.subr.mxu0 0.0
    %3214 = vmatpush1.msra.mxu0 0.0
    %3215 = vmatprep.subr.mxu0 0.0
    %3216 = vmatpush1.msra.mxu0 0.0
    %3217 = vmatprep.subr.mxu0 0.0
    %3218 = vmatpush1.msra.mxu0 0.0
    %3219 = vmatprep.subr.mxu0 0.0
    %3220 = vmatpush1.msra.mxu0 0.0
    %3221 = vmatprep.subr.mxu0 0.0
    %3222 = vmatpush1.msra.mxu0 0.0
    %3223 = vmatprep.subr.mxu0 0.0
    %3224 = vmatpush1.msra.mxu0 %v348
    %3225 = vmatprep.subr.mxu0 0.0
    %3226 = vmatpush2.msra.mxu0 0.0
    %3227 = vmatprep.subr.mxu0 0.0
    %3228 = vmatpush2.msra.mxu0 0.0
    %3229 = vmatprep.subr.mxu0 0.0
    %3230 = vmatpush2.msra.mxu0 0.0
    %3231 = vmatprep.subr.mxu0 0.0
    %3232 = vmatpush2.msra.mxu0 0.0
    %3233 = vmatprep.subr.mxu0 0.0
    %3234 = vmatpush2.msra.mxu0 0.0
    %3235 = vmatprep.subr.mxu0 0.0
    %3236 = vmatpush2.msra.mxu0 0.0
    %3237 = vmatprep.subr.mxu0 0.0
    %3238 = vmatpush2.msra.mxu0 0.0
    %3239 = vmatprep.subr.mxu0 0.0
    %3240 = vmatpush2.msra.mxu0 0.0
    %3241 = vmatprep.subr.mxu0 0.0
    %3242 = vmatpush2.msra.mxu0 0.0
    %3243 = vmatprep.subr.mxu0 0.0
    %3244 = vmatpush2.msra.mxu0 0.0
    %3245 = vmatprep.subr.mxu0 0.0
    %3246 = vmatpush2.msra.mxu0 0.0
    %3247 = vmatprep.subr.mxu0 0.0
    %3248 = vmatpush2.msra.mxu0 0.0
    %3249 = vmatprep.subr.mxu0 0.0
    %3250 = vmatpush2.msra.mxu0 0.0
    %3251 = vmatprep.subr.mxu0 0.0
    %3252 = vmatpush2.msra.mxu0 0.0
    %3253 = vmatprep.subr.mxu0 0.0
    %3254 = vmatpush2.msra.mxu0 0.0
    %3255 = vmatprep.subr.mxu0 0.0
    %3256 = vmatpush2.msra.mxu0 0.0
    %3257 = vmatprep.mubr.f32.mxu0 0.0
    %3258 = vmatmul.mubr.f32.gmra.mxu0 %v3191
    %v3259 = vpop.f32.mrf.mxu0
    %v3260 = vadd.f32 %v3185, %v3259
    %v3261 = vpop.f32.mrf.mxu0
    %3262 = vdwg.mxu0
    %v3263 = vadd.f32 %v3260, %v356
    %v3264 = vxor.u32 %v3263, 2147483648
    %v3265 = vmul.f32 %v3264, 1.442695
    %v3266 = vpow.pop %v3265
    %v3267 = vadd.f32 %v3266, 1.0
    %v3268 = vrcp.pop %v3267
    %v3269 = vmul.f32 1.0, %v3268
    %v3270 = vtanh.pop %v3263
    %v3271 = vmul.f32 %v3269, %v3008
    %3273 = vrot.lane.b32.xlu0 %v3270, 96
    %v3274 = vpop.permute.xlu0 %3273
    %v3276 = vmul.f32 %v3269, %v3274
    %3278 = vrot.lane.b32.xlu0 %v3276, 16
    %v3279 = vpop.permute.xlu0 %3278
    %v3281 = vadd.f32 %v3271, %v3279
    %v3282 = vtanh.pop %v3281
    %3284 = vrot.lane.b32.xlu0 %v3282, 32
    %v3285 = vpop.permute.xlu0 %3284
    %v3287 = vmul.f32 %v3269, %v3285
    %3289 = vrot.lane.b32.xlu0 %v3287, 80
    %v3290 = vpop.permute.xlu0 %3289
    %3292 = vst.msk [vmem:[#allocation4 + $0x10] sm:$0xff] %vm359, %v3290
    %v3293 = vld [vmem:[#allocation3 + $0x18] sm:$0xff]
    %3294 = vmatprep.subr.mxu0 0.0
    %3295 = vmatpush1.msra.mxu0 0.0
    %3296 = vmatprep.subr.mxu0 0.0
    %3297 = vmatpush1.msra.mxu0 0.0
    %3298 = vmatprep.subr.mxu0 0.0
    %3299 = vmatpush1.msra.mxu0 0.0
    %3300 = vmatprep.subr.mxu0 0.0
    %3301 = vmatpush1.msra.mxu0 0.0
    %3302 = vmatprep.subr.mxu0 0.0
    %3303 = vmatpush1.msra.mxu0 0.0
    %3304 = vmatprep.subr.mxu0 0.0
    %3305 = vmatpush1.msra.mxu0 0.0
    %3306 = vmatprep.subr.mxu0 0.0
    %3307 = vmatpush1.msra.mxu0 0.0
    %3308 = vmatprep.subr.mxu0 0.0
    %3309 = vmatpush1.msra.mxu0 0.0
    %3310 = vmatprep.subr.mxu0 0.0
    %3311 = vmatpush1.msra.mxu0 0.0
    %3312 = vmatprep.subr.mxu0 0.0
    %3313 = vmatpush1.msra.mxu0 0.0
    %3314 = vmatprep.subr.mxu0 0.0
    %3315 = vmatpush1.msra.mxu0 0.0
    %3316 = vmatprep.subr.mxu0 0.0
    %3317 = vmatpush1.msra.mxu0 0.0
    %3318 = vmatprep.subr.mxu0 0.0
    %3319 = vmatpush1.msra.mxu0 0.0
    %3320 = vmatprep.subr.mxu0 0.0
    %3321 = vmatpush1.msra.mxu0 0.0
    %3322 = vmatprep.subr.mxu0 0.0
    %3323 = vmatpush1.msra.mxu0 0.0
    %3324 = vmatprep.subr.mxu0 0.0
    %3325 = vmatpush1.msra.mxu0 %v347
    %3326 = vmatprep.subr.mxu0 0.0
    %3327 = vmatpush2.msra.mxu0 0.0
    %3328 = vmatprep.subr.mxu0 0.0
    %3329 = vmatpush2.msra.mxu0 0.0
    %3330 = vmatprep.subr.mxu0 0.0
    %3331 = vmatpush2.msra.mxu0 0.0
    %3332 = vmatprep.subr.mxu0 0.0
    %3333 = vmatpush2.msra.mxu0 0.0
    %3334 = vmatprep.subr.mxu0 0.0
    %3335 = vmatpush2.msra.mxu0 0.0
    %3336 = vmatprep.subr.mxu0 0.0
    %3337 = vmatpush2.msra.mxu0 0.0
    %3338 = vmatprep.subr.mxu0 0.0
    %3339 = vmatpush2.msra.mxu0 0.0
    %3340 = vmatprep.subr.mxu0 0.0
    %3341 = vmatpush2.msra.mxu0 0.0
    %3342 = vmatprep.subr.mxu0 0.0
    %3343 = vmatpush2.msra.mxu0 0.0
    %3344 = vmatprep.subr.mxu0 0.0
    %3345 = vmatpush2.msra.mxu0 0.0
    %3346 = vmatprep.subr.mxu0 0.0
    %3347 = vmatpush2.msra.mxu0 0.0
    %3348 = vmatprep.subr.mxu0 0.0
    %3349 = vmatpush2.msra.mxu0 0.0
    %3350 = vmatprep.subr.mxu0 0.0
    %3351 = vmatpush2.msra.mxu0 0.0
    %3352 = vmatprep.subr.mxu0 0.0
    %3353 = vmatpush2.msra.mxu0 0.0
    %3354 = vmatprep.subr.mxu0 0.0
    %3355 = vmatpush2.msra.mxu0 0.0
    %3356 = vmatprep.subr.mxu0 0.0
    %3357 = vmatpush2.msra.mxu0 0.0
    %3358 = vmatprep.mubr.f32.mxu0 0.0
    %3359 = vmatmul.mubr.f32.gmra.mxu0 %v3191
    %v3360 = vpop.f32.mrf.mxu0
    %v3361 = vadd.f32 0.0, %v3360
    %v3362 = vpop.f32.mrf.mxu0
    %3363 = vdwg.mxu0
    %v3364 = vadd.f32 %v3293, %v3361
    %v3365 = vxor.u32 %v3364, 2147483648
    %v3366 = vmul.f32 %v3365, 1.442695
    %v3367 = vpow.pop %v3366
    %v3368 = vadd.f32 %v3367, 1.0
    %v3369 = vrcp.pop %v3368
    %v3370 = vmul.f32 1.0, %v3369
    %v3371 = vtanh.pop %v3364
    %v3372 = vmul.f32 %v3370, %v3109
    %3374 = vrot.lane.b32.xlu0 %v3371, 112
    %v3375 = vpop.permute.xlu0 %3374
    %v3377 = vmul.f32 %v3370, %v3375
    %3379 = vrot.lane.b32.xlu0 %v3377, 8
    %v3380 = vpop.permute.xlu0 %3379
    %v3382 = vadd.f32 %v3372, %v3380
    %v3383 = vtanh.pop %v3382
    %3385 = vrot.lane.b32.xlu0 %v3383, 16
    %v3386 = vpop.permute.xlu0 %3385
    %v3388 = vmul.f32 %v3370, %v3386
    %v3389 = vsel %vm359, %v3290, 0
    %3391 = vmatprep.subr.mxu0 0.0
    %3392 = vmatpush1.msra.mxu0 0.0
    %3393 = vmatprep.subr.mxu0 0.0
    %3394 = vmatpush1.msra.mxu0 0.0
    %3395 = vmatprep.subr.mxu0 0.0
    %3396 = vmatpush1.msra.mxu0 0.0
    %3397 = vmatprep.subr.mxu0 0.0
    %3398 = vmatpush1.msra.mxu0 0.0
    %3399 = vmatprep.subr.mxu0 0.0
    %3400 = vmatpush1.msra.mxu0 0.0
    %3401 = vmatprep.subr.mxu0 0.0
    %3402 = vmatpush1.msra.mxu0 0.0
    %3403 = vmatprep.subr.mxu0 0.0
    %3404 = vmatpush1.msra.mxu0 0.0
    %3405 = vmatprep.subr.mxu0 0.0
    %3406 = vmatpush1.msra.mxu0 0.0
    %3407 = vmatprep.subr.mxu0 0.0
    %3408 = vmatpush1.msra.mxu0 0.0
    %3409 = vmatprep.subr.mxu0 0.0
    %3410 = vmatpush1.msra.mxu0 0.0
    %3411 = vmatprep.subr.mxu0 0.0
    %3412 = vmatpush1.msra.mxu0 0.0
    %3413 = vmatprep.subr.mxu0 0.0
    %3414 = vmatpush1.msra.mxu0 0.0
    %3415 = vmatprep.subr.mxu0 0.0
    %3416 = vmatpush1.msra.mxu0 0.0
    %3417 = vmatprep.subr.mxu0 0.0
    %3418 = vmatpush1.msra.mxu0 0.0
    %3419 = vmatprep.subr.mxu0 0.0
    %3420 = vmatpush1.msra.mxu0 %v350
    %3421 = vmatprep.subr.mxu0 0.0
    %3422 = vmatpush1.msra.mxu0 %v349
    %3423 = vmatprep.subr.mxu0 0.0
    %3424 = vmatpush2.msra.mxu0 0.0
    %3425 = vmatprep.subr.mxu0 0.0
    %3426 = vmatpush2.msra.mxu0 0.0
    %3427 = vmatprep.subr.mxu0 0.0
    %3428 = vmatpush2.msra.mxu0 0.0
    %3429 = vmatprep.subr.mxu0 0.0
    %3430 = vmatpush2.msra.mxu0 0.0
    %3431 = vmatprep.subr.mxu0 0.0
    %3432 = vmatpush2.msra.mxu0 0.0
    %3433 = vmatprep.subr.mxu0 0.0
    %3434 = vmatpush2.msra.mxu0 0.0
    %3435 = vmatprep.subr.mxu0 0.0
    %3436 = vmatpush2.msra.mxu0 0.0
    %3437 = vmatprep.subr.mxu0 0.0
    %3438 = vmatpush2.msra.mxu0 0.0
    %3439 = vmatprep.subr.mxu0 0.0
    %3440 = vmatpush2.msra.mxu0 0.0
    %3441 = vmatprep.subr.mxu0 0.0
    %3442 = vmatpush2.msra.mxu0 0.0
    %3443 = vmatprep.subr.mxu0 0.0
    %3444 = vmatpush2.msra.mxu0 0.0
    %3445 = vmatprep.subr.mxu0 0.0
    %3446 = vmatpush2.msra.mxu0 0.0
    %3447 = vmatprep.subr.mxu0 0.0
    %3448 = vmatpush2.msra.mxu0 0.0
    %3449 = vmatprep.subr.mxu0 0.0
    %3450 = vmatpush2.msra.mxu0 0.0
    %3451 = vmatprep.subr.mxu0 0.0
    %3452 = vmatpush2.msra.mxu0 0.0
    %3453 = vmatprep.subr.mxu0 0.0
    %3454 = vmatpush2.msra.mxu0 0.0
    %3455 = vmatprep.mubr.f32.mxu0 0.0
    %3456 = vmatmul.mubr.f32.gmra.mxu0 %v3389
    %v3457 = vpop.f32.mrf.mxu0
    %v3458 = vadd.f32 0.0, %v3457
    %v3459 = vpop.f32.mrf.mxu0
    %3460 = vdwg.mxu0
    %3462 = vrot.lane.b32.xlu0 %v3388, 104
    %v3463 = vpop.permute.xlu0 %3462
    %v3464 = vsel %vm458, %v3463, 0
    %3466 = vmatprep.subr.mxu0 0.0
    %3467 = vmatpush1.msra.mxu0 0.0
    %3468 = vmatprep.subr.mxu0 0.0
    %3469 = vmatpush1.msra.mxu0 0.0
    %3470 = vmatprep.subr.mxu0 0.0
    %3471 = vmatpush1.msra.mxu0 0.0
    %3472 = vmatprep.subr.mxu0 0.0
    %3473 = vmatpush1.msra.mxu0 0.0
    %3474 = vmatprep.subr.mxu0 0.0
    %3475 = vmatpush1.msra.mxu0 0.0
    %3476 = vmatprep.subr.mxu0 0.0
    %3477 = vmatpush1.msra.mxu0 0.0
    %3478 = vmatprep.subr.mxu0 0.0
    %3479 = vmatpush1.msra.mxu0 0.0
    %3480 = vmatprep.subr.mxu0 0.0
    %3481 = vmatpush1.msra.mxu0 0.0
    %3482 = vmatprep.subr.mxu0 0.0
    %3483 = vmatpush1.msra.mxu0 0.0
    %3484 = vmatprep.subr.mxu0 0.0
    %3485 = vmatpush1.msra.mxu0 0.0
    %3486 = vmatprep.subr.mxu0 0.0
    %3487 = vmatpush1.msra.mxu0 0.0
    %3488 = vmatprep.subr.mxu0 0.0
    %3489 = vmatpush1.msra.mxu0 0.0
    %3490 = vmatprep.subr.mxu0 0.0
    %3491 = vmatpush1.msra.mxu0 0.0
    %3492 = vmatprep.subr.mxu0 0.0
    %3493 = vmatpush1.msra.mxu0 0.0
    %3494 = vmatprep.subr.mxu0 0.0
    %3495 = vmatpush1.msra.mxu0 0.0
    %3496 = vmatprep.subr.mxu0 0.0
    %3497 = vmatpush1.msra.mxu0 %v348
    %3498 = vmatprep.subr.mxu0 0.0
    %3499 = vmatpush2.msra.mxu0 0.0
    %3500 = vmatprep.subr.mxu0 0.0
    %3501 = vmatpush2.msra.mxu0 0.0
    %3502 = vmatprep.subr.mxu0 0.0
    %3503 = vmatpush2.msra.mxu0 0.0
    %3504 = vmatprep.subr.mxu0 0.0
    %3505 = vmatpush2.msra.mxu0 0.0
    %3506 = vmatprep.subr.mxu0 0.0
    %3507 = vmatpush2.msra.mxu0 0.0
    %3508 = vmatprep.subr.mxu0 0.0
    %3509 = vmatpush2.msra.mxu0 0.0
    %3510 = vmatprep.subr.mxu0 0.0
    %3511 = vmatpush2.msra.mxu0 0.0
    %3512 = vmatprep.subr.mxu0 0.0
    %3513 = vmatpush2.msra.mxu0 0.0
    %3514 = vmatprep.subr.mxu0 0.0
    %3515 = vmatpush2.msra.mxu0 0.0
    %3516 = vmatprep.subr.mxu0 0.0
    %3517 = vmatpush2.msra.mxu0 0.0
    %3518 = vmatprep.subr.mxu0 0.0
    %3519 = vmatpush2.msra.mxu0 0.0
    %3520 = vmatprep.subr.mxu0 0.0
    %3521 = vmatpush2.msra.mxu0 0.0
    %3522 = vmatprep.subr.mxu0 0.0
    %3523 = vmatpush2.msra.mxu0 0.0
    %3524 = vmatprep.subr.mxu0 0.0
    %3525 = vmatpush2.msra.mxu0 0.0
    %3526 = vmatprep.subr.mxu0 0.0
    %3527 = vmatpush2.msra.mxu0 0.0
    %3528 = vmatprep.subr.mxu0 0.0
    %3529 = vmatpush2.msra.mxu0 0.0
    %3530 = vmatprep.mubr.f32.mxu0 0.0
    %3531 = vmatmul.mubr.f32.gmra.mxu0 %v3464
    %v3532 = vpop.f32.mrf.mxu0
    %v3533 = vadd.f32 %v3458, %v3532
    %v3534 = vpop.f32.mrf.mxu0
    %3535 = vdwg.mxu0
    %v3536 = vadd.f32 %v3533, %v356
    %v3537 = vxor.u32 %v3536, 2147483648
    %v3538 = vmul.f32 %v3537, 1.442695
    %v3539 = vpow.pop %v3538
    %v3540 = vadd.f32 %v3539, 1.0
    %v3541 = vrcp.pop %v3540
    %v3542 = vmul.f32 1.0, %v3541
    %v3543 = vtanh.pop %v3536
    %v3544 = vmul.f32 %v3542, %v3281
    %3546 = vrot.lane.b32.xlu0 %v3543, 96
    %v3547 = vpop.permute.xlu0 %3546
    %v3549 = vmul.f32 %v3542, %v3547
    %3551 = vrot.lane.b32.xlu0 %v3549, 16
    %v3552 = vpop.permute.xlu0 %3551
    %v3554 = vadd.f32 %v3544, %v3552
    %v3555 = vtanh.pop %v3554
    %3557 = vrot.lane.b32.xlu0 %v3555, 32
    %v3558 = vpop.permute.xlu0 %3557
    %v3560 = vmul.f32 %v3542, %v3558
    %3562 = vrot.lane.b32.xlu0 %v3560, 80
    %v3563 = vpop.permute.xlu0 %3562
    %3565 = vst.msk [vmem:[#allocation4 + $0x18] sm:$0xff] %vm359, %v3563
    %v3566 = vld [vmem:[#allocation3 + $0x20] sm:$0xff]
    %3567 = vmatprep.subr.mxu0 0.0
    %3568 = vmatpush1.msra.mxu0 0.0
    %3569 = vmatprep.subr.mxu0 0.0
    %3570 = vmatpush1.msra.mxu0 0.0
    %3571 = vmatprep.subr.mxu0 0.0
    %3572 = vmatpush1.msra.mxu0 0.0
    %3573 = vmatprep.subr.mxu0 0.0
    %3574 = vmatpush1.msra.mxu0 0.0
    %3575 = vmatprep.subr.mxu0 0.0
    %3576 = vmatpush1.msra.mxu0 0.0
    %3577 = vmatprep.subr.mxu0 0.0
    %3578 = vmatpush1.msra.mxu0 0.0
    %3579 = vmatprep.subr.mxu0 0.0
    %3580 = vmatpush1.msra.mxu0 0.0
    %3581 = vmatprep.subr.mxu0 0.0
    %3582 = vmatpush1.msra.mxu0 0.0
    %3583 = vmatprep.subr.mxu0 0.0
    %3584 = vmatpush1.msra.mxu0 0.0
    %3585 = vmatprep.subr.mxu0 0.0
    %3586 = vmatpush1.msra.mxu0 0.0
    %3587 = vmatprep.subr.mxu0 0.0
    %3588 = vmatpush1.msra.mxu0 0.0
    %3589 = vmatprep.subr.mxu0 0.0
    %3590 = vmatpush1.msra.mxu0 0.0
    %3591 = vmatprep.subr.mxu0 0.0
    %3592 = vmatpush1.msra.mxu0 0.0
    %3593 = vmatprep.subr.mxu0 0.0
    %3594 = vmatpush1.msra.mxu0 0.0
    %3595 = vmatprep.subr.mxu0 0.0
    %3596 = vmatpush1.msra.mxu0 0.0
    %3597 = vmatprep.subr.mxu0 0.0
    %3598 = vmatpush1.msra.mxu0 %v347
    %3599 = vmatprep.subr.mxu0 0.0
    %3600 = vmatpush2.msra.mxu0 0.0
    %3601 = vmatprep.subr.mxu0 0.0
    %3602 = vmatpush2.msra.mxu0 0.0
    %3603 = vmatprep.subr.mxu0 0.0
    %3604 = vmatpush2.msra.mxu0 0.0
    %3605 = vmatprep.subr.mxu0 0.0
    %3606 = vmatpush2.msra.mxu0 0.0
    %3607 = vmatprep.subr.mxu0 0.0
    %3608 = vmatpush2.msra.mxu0 0.0
    %3609 = vmatprep.subr.mxu0 0.0
    %3610 = vmatpush2.msra.mxu0 0.0
    %3611 = vmatprep.subr.mxu0 0.0
    %3612 = vmatpush2.msra.mxu0 0.0
    %3613 = vmatprep.subr.mxu0 0.0
    %3614 = vmatpush2.msra.mxu0 0.0
    %3615 = vmatprep.subr.mxu0 0.0
    %3616 = vmatpush2.msra.mxu0 0.0
    %3617 = vmatprep.subr.mxu0 0.0
    %3618 = vmatpush2.msra.mxu0 0.0
    %3619 = vmatprep.subr.mxu0 0.0
    %3620 = vmatpush2.msra.mxu0 0.0
    %3621 = vmatprep.subr.mxu0 0.0
    %3622 = vmatpush2.msra.mxu0 0.0
    %3623 = vmatprep.subr.mxu0 0.0
    %3624 = vmatpush2.msra.mxu0 0.0
    %3625 = vmatprep.subr.mxu0 0.0
    %3626 = vmatpush2.msra.mxu0 0.0
    %3627 = vmatprep.subr.mxu0 0.0
    %3628 = vmatpush2.msra.mxu0 0.0
    %3629 = vmatprep.subr.mxu0 0.0
    %3630 = vmatpush2.msra.mxu0 0.0
    %3631 = vmatprep.mubr.f32.mxu0 0.0
    %3632 = vmatmul.mubr.f32.gmra.mxu0 %v3464
    %v3633 = vpop.f32.mrf.mxu0
    %v3634 = vadd.f32 0.0, %v3633
    %v3635 = vpop.f32.mrf.mxu0
    %3636 = vdwg.mxu0
    %v3637 = vadd.f32 %v3566, %v3634
    %v3638 = vxor.u32 %v3637, 2147483648
    %v3639 = vmul.f32 %v3638, 1.442695
    %v3640 = vpow.pop %v3639
    %v3641 = vadd.f32 %v3640, 1.0
    %v3642 = vrcp.pop %v3641
    %v3643 = vmul.f32 1.0, %v3642
    %v3644 = vtanh.pop %v3637
    %v3645 = vmul.f32 %v3643, %v3382
    %3647 = vrot.lane.b32.xlu0 %v3644, 112
    %v3648 = vpop.permute.xlu0 %3647
    %v3650 = vmul.f32 %v3643, %v3648
    %3652 = vrot.lane.b32.xlu0 %v3650, 8
    %v3653 = vpop.permute.xlu0 %3652
    %v3655 = vadd.f32 %v3645, %v3653
    %v3656 = vtanh.pop %v3655
    %3658 = vrot.lane.b32.xlu0 %v3656, 16
    %v3659 = vpop.permute.xlu0 %3658
    %v3661 = vmul.f32 %v3643, %v3659
    %v3662 = vsel %vm359, %v3563, 0
    %3664 = vmatprep.subr.mxu0 0.0
    %3665 = vmatpush1.msra.mxu0 0.0
    %3666 = vmatprep.subr.mxu0 0.0
    %3667 = vmatpush1.msra.mxu0 0.0
    %3668 = vmatprep.subr.mxu0 0.0
    %3669 = vmatpush1.msra.mxu0 0.0
    %3670 = vmatprep.subr.mxu0 0.0
    %3671 = vmatpush1.msra.mxu0 0.0
    %3672 = vmatprep.subr.mxu0 0.0
    %3673 = vmatpush1.msra.mxu0 0.0
    %3674 = vmatprep.subr.mxu0 0.0
    %3675 = vmatpush1.msra.mxu0 0.0
    %3676 = vmatprep.subr.mxu0 0.0
    %3677 = vmatpush1.msra.mxu0 0.0
    %3678 = vmatprep.subr.mxu0 0.0
    %3679 = vmatpush1.msra.mxu0 0.0
    %3680 = vmatprep.subr.mxu0 0.0
    %3681 = vmatpush1.msra.mxu0 0.0
    %3682 = vmatprep.subr.mxu0 0.0
    %3683 = vmatpush1.msra.mxu0 0.0
    %3684 = vmatprep.subr.mxu0 0.0
    %3685 = vmatpush1.msra.mxu0 0.0
    %3686 = vmatprep.subr.mxu0 0.0
    %3687 = vmatpush1.msra.mxu0 0.0
    %3688 = vmatprep.subr.mxu0 0.0
    %3689 = vmatpush1.msra.mxu0 0.0
    %3690 = vmatprep.subr.mxu0 0.0
    %3691 = vmatpush1.msra.mxu0 0.0
    %3692 = vmatprep.subr.mxu0 0.0
    %3693 = vmatpush1.msra.mxu0 %v350
    %3694 = vmatprep.subr.mxu0 0.0
    %3695 = vmatpush1.msra.mxu0 %v349
    %3696 = vmatprep.subr.mxu0 0.0
    %3697 = vmatpush2.msra.mxu0 0.0
    %3698 = vmatprep.subr.mxu0 0.0
    %3699 = vmatpush2.msra.mxu0 0.0
    %3700 = vmatprep.subr.mxu0 0.0
    %3701 = vmatpush2.msra.mxu0 0.0
    %3702 = vmatprep.subr.mxu0 0.0
    %3703 = vmatpush2.msra.mxu0 0.0
    %3704 = vmatprep.subr.mxu0 0.0
    %3705 = vmatpush2.msra.mxu0 0.0
    %3706 = vmatprep.subr.mxu0 0.0
    %3707 = vmatpush2.msra.mxu0 0.0
    %3708 = vmatprep.subr.mxu0 0.0
    %3709 = vmatpush2.msra.mxu0 0.0
    %3710 = vmatprep.subr.mxu0 0.0
    %3711 = vmatpush2.msra.mxu0 0.0
    %3712 = vmatprep.subr.mxu0 0.0
    %3713 = vmatpush2.msra.mxu0 0.0
    %3714 = vmatprep.subr.mxu0 0.0
    %3715 = vmatpush2.msra.mxu0 0.0
    %3716 = vmatprep.subr.mxu0 0.0
    %3717 = vmatpush2.msra.mxu0 0.0
    %3718 = vmatprep.subr.mxu0 0.0
    %3719 = vmatpush2.msra.mxu0 0.0
    %3720 = vmatprep.subr.mxu0 0.0
    %3721 = vmatpush2.msra.mxu0 0.0
    %3722 = vmatprep.subr.mxu0 0.0
    %3723 = vmatpush2.msra.mxu0 0.0
    %3724 = vmatprep.subr.mxu0 0.0
    %3725 = vmatpush2.msra.mxu0 0.0
    %3726 = vmatprep.subr.mxu0 0.0
    %3727 = vmatpush2.msra.mxu0 0.0
    %3728 = vmatprep.mubr.f32.mxu0 0.0
    %3729 = vmatmul.mubr.f32.gmra.mxu0 %v3662
    %v3730 = vpop.f32.mrf.mxu0
    %v3731 = vadd.f32 0.0, %v3730
    %v3732 = vpop.f32.mrf.mxu0
    %3733 = vdwg.mxu0
    %3735 = vrot.lane.b32.xlu0 %v3661, 104
    %v3736 = vpop.permute.xlu0 %3735
    %v3737 = vsel %vm458, %v3736, 0
    %3739 = vmatprep.subr.mxu0 0.0
    %3740 = vmatpush1.msra.mxu0 0.0
    %3741 = vmatprep.subr.mxu0 0.0
    %3742 = vmatpush1.msra.mxu0 0.0
    %3743 = vmatprep.subr.mxu0 0.0
    %3744 = vmatpush1.msra.mxu0 0.0
    %3745 = vmatprep.subr.mxu0 0.0
    %3746 = vmatpush1.msra.mxu0 0.0
    %3747 = vmatprep.subr.mxu0 0.0
    %3748 = vmatpush1.msra.mxu0 0.0
    %3749 = vmatprep.subr.mxu0 0.0
    %3750 = vmatpush1.msra.mxu0 0.0
    %3751 = vmatprep.subr.mxu0 0.0
    %3752 = vmatpush1.msra.mxu0 0.0
    %3753 = vmatprep.subr.mxu0 0.0
    %3754 = vmatpush1.msra.mxu0 0.0
    %3755 = vmatprep.subr.mxu0 0.0
    %3756 = vmatpush1.msra.mxu0 0.0
    %3757 = vmatprep.subr.mxu0 0.0
    %3758 = vmatpush1.msra.mxu0 0.0
    %3759 = vmatprep.subr.mxu0 0.0
    %3760 = vmatpush1.msra.mxu0 0.0
    %3761 = vmatprep.subr.mxu0 0.0
    %3762 = vmatpush1.msra.mxu0 0.0
    %3763 = vmatprep.subr.mxu0 0.0
    %3764 = vmatpush1.msra.mxu0 0.0
    %3765 = vmatprep.subr.mxu0 0.0
    %3766 = vmatpush1.msra.mxu0 0.0
    %3767 = vmatprep.subr.mxu0 0.0
    %3768 = vmatpush1.msra.mxu0 0.0
    %3769 = vmatprep.subr.mxu0 0.0
    %3770 = vmatpush1.msra.mxu0 %v348
    %3771 = vmatprep.subr.mxu0 0.0
    %3772 = vmatpush2.msra.mxu0 0.0
    %3773 = vmatprep.subr.mxu0 0.0
    %3774 = vmatpush2.msra.mxu0 0.0
    %3775 = vmatprep.subr.mxu0 0.0
    %3776 = vmatpush2.msra.mxu0 0.0
    %3777 = vmatprep.subr.mxu0 0.0
    %3778 = vmatpush2.msra.mxu0 0.0
    %3779 = vmatprep.subr.mxu0 0.0
    %3780 = vmatpush2.msra.mxu0 0.0
    %3781 = vmatprep.subr.mxu0 0.0
    %3782 = vmatpush2.msra.mxu0 0.0
    %3783 = vmatprep.subr.mxu0 0.0
    %3784 = vmatpush2.msra.mxu0 0.0
    %3785 = vmatprep.subr.mxu0 0.0
    %3786 = vmatpush2.msra.mxu0 0.0
    %3787 = vmatprep.subr.mxu0 0.0
    %3788 = vmatpush2.msra.mxu0 0.0
    %3789 = vmatprep.subr.mxu0 0.0
    %3790 = vmatpush2.msra.mxu0 0.0
    %3791 = vmatprep.subr.mxu0 0.0
    %3792 = vmatpush2.msra.mxu0 0.0
    %3793 = vmatprep.subr.mxu0 0.0
    %3794 = vmatpush2.msra.mxu0 0.0
    %3795 = vmatprep.subr.mxu0 0.0
    %3796 = vmatpush2.msra.mxu0 0.0
    %3797 = vmatprep.subr.mxu0 0.0
    %3798 = vmatpush2.msra.mxu0 0.0
    %3799 = vmatprep.subr.mxu0 0.0
    %3800 = vmatpush2.msra.mxu0 0.0
    %3801 = vmatprep.subr.mxu0 0.0
    %3802 = vmatpush2.msra.mxu0 0.0
    %3803 = vmatprep.mubr.f32.mxu0 0.0
    %3804 = vmatmul.mubr.f32.gmra.mxu0 %v3737
    %v3805 = vpop.f32.mrf.mxu0
    %v3806 = vadd.f32 %v3731, %v3805
    %v3807 = vpop.f32.mrf.mxu0
    %3808 = vdwg.mxu0
    %v3809 = vadd.f32 %v3806, %v356
    %v3810 = vxor.u32 %v3809, 2147483648
    %v3811 = vmul.f32 %v3810, 1.442695
    %v3812 = vpow.pop %v3811
    %v3813 = vadd.f32 %v3812, 1.0
    %v3814 = vrcp.pop %v3813
    %v3815 = vmul.f32 1.0, %v3814
    %v3816 = vtanh.pop %v3809
    %v3817 = vmul.f32 %v3815, %v3554
    %3819 = vrot.lane.b32.xlu0 %v3816, 96
    %v3820 = vpop.permute.xlu0 %3819
    %v3822 = vmul.f32 %v3815, %v3820
    %3824 = vrot.lane.b32.xlu0 %v3822, 16
    %v3825 = vpop.permute.xlu0 %3824
    %v3827 = vadd.f32 %v3817, %v3825
    %v3828 = vtanh.pop %v3827
    %3830 = vrot.lane.b32.xlu0 %v3828, 32
    %v3831 = vpop.permute.xlu0 %3830
    %v3833 = vmul.f32 %v3815, %v3831
    %3835 = vrot.lane.b32.xlu0 %v3833, 80
    %v3836 = vpop.permute.xlu0 %3835
    %3838 = vst.msk [vmem:[#allocation4 + $0x20] sm:$0xff] %vm359, %v3836
    %v3839 = vld [vmem:[#allocation3 + $0x28] sm:$0xff]
    %3840 = vmatprep.subr.mxu0 0.0
    %3841 = vmatpush1.msra.mxu0 0.0
    %3842 = vmatprep.subr.mxu0 0.0
    %3843 = vmatpush1.msra.mxu0 0.0
    %3844 = vmatprep.subr.mxu0 0.0
    %3845 = vmatpush1.msra.mxu0 0.0
    %3846 = vmatprep.subr.mxu0 0.0
    %3847 = vmatpush1.msra.mxu0 0.0
    %3848 = vmatprep.subr.mxu0 0.0
    %3849 = vmatpush1.msra.mxu0 0.0
    %3850 = vmatprep.subr.mxu0 0.0
    %3851 = vmatpush1.msra.mxu0 0.0
    %3852 = vmatprep.subr.mxu0 0.0
    %3853 = vmatpush1.msra.mxu0 0.0
    %3854 = vmatprep.subr.mxu0 0.0
    %3855 = vmatpush1.msra.mxu0 0.0
    %3856 = vmatprep.subr.mxu0 0.0
    %3857 = vmatpush1.msra.mxu0 0.0
    %3858 = vmatprep.subr.mxu0 0.0
    %3859 = vmatpush1.msra.mxu0 0.0
    %3860 = vmatprep.subr.mxu0 0.0
    %3861 = vmatpush1.msra.mxu0 0.0
    %3862 = vmatprep.subr.mxu0 0.0
    %3863 = vmatpush1.msra.mxu0 0.0
    %3864 = vmatprep.subr.mxu0 0.0
    %3865 = vmatpush1.msra.mxu0 0.0
    %3866 = vmatprep.subr.mxu0 0.0
    %3867 = vmatpush1.msra.mxu0 0.0
    %3868 = vmatprep.subr.mxu0 0.0
    %3869 = vmatpush1.msra.mxu0 0.0
    %3870 = vmatprep.subr.mxu0 0.0
    %3871 = vmatpush1.msra.mxu0 %v347
    %3872 = vmatprep.subr.mxu0 0.0
    %3873 = vmatpush2.msra.mxu0 0.0
    %3874 = vmatprep.subr.mxu0 0.0
    %3875 = vmatpush2.msra.mxu0 0.0
    %3876 = vmatprep.subr.mxu0 0.0
    %3877 = vmatpush2.msra.mxu0 0.0
    %3878 = vmatprep.subr.mxu0 0.0
    %3879 = vmatpush2.msra.mxu0 0.0
    %3880 = vmatprep.subr.mxu0 0.0
    %3881 = vmatpush2.msra.mxu0 0.0
    %3882 = vmatprep.subr.mxu0 0.0
    %3883 = vmatpush2.msra.mxu0 0.0
    %3884 = vmatprep.subr.mxu0 0.0
    %3885 = vmatpush2.msra.mxu0 0.0
    %3886 = vmatprep.subr.mxu0 0.0
    %3887 = vmatpush2.msra.mxu0 0.0
    %3888 = vmatprep.subr.mxu0 0.0
    %3889 = vmatpush2.msra.mxu0 0.0
    %3890 = vmatprep.subr.mxu0 0.0
    %3891 = vmatpush2.msra.mxu0 0.0
    %3892 = vmatprep.subr.mxu0 0.0
    %3893 = vmatpush2.msra.mxu0 0.0
    %3894 = vmatprep.subr.mxu0 0.0
    %3895 = vmatpush2.msra.mxu0 0.0
    %3896 = vmatprep.subr.mxu0 0.0
    %3897 = vmatpush2.msra.mxu0 0.0
    %3898 = vmatprep.subr.mxu0 0.0
    %3899 = vmatpush2.msra.mxu0 0.0
    %3900 = vmatprep.subr.mxu0 0.0
    %3901 = vmatpush2.msra.mxu0 0.0
    %3902 = vmatprep.subr.mxu0 0.0
    %3903 = vmatpush2.msra.mxu0 0.0
    %3904 = vmatprep.mubr.f32.mxu0 0.0
    %3905 = vmatmul.mubr.f32.gmra.mxu0 %v3737
    %v3906 = vpop.f32.mrf.mxu0
    %v3907 = vadd.f32 0.0, %v3906
    %v3908 = vpop.f32.mrf.mxu0
    %3909 = vdwg.mxu0
    %v3910 = vadd.f32 %v3839, %v3907
    %v3911 = vxor.u32 %v3910, 2147483648
    %v3912 = vmul.f32 %v3911, 1.442695
    %v3913 = vpow.pop %v3912
    %v3914 = vadd.f32 %v3913, 1.0
    %v3915 = vrcp.pop %v3914
    %v3916 = vmul.f32 1.0, %v3915
    %v3917 = vtanh.pop %v3910
    %v3918 = vmul.f32 %v3916, %v3655
    %3920 = vrot.lane.b32.xlu0 %v3917, 112
    %v3921 = vpop.permute.xlu0 %3920
    %v3923 = vmul.f32 %v3916, %v3921
    %3925 = vrot.lane.b32.xlu0 %v3923, 8
    %v3926 = vpop.permute.xlu0 %3925
    %v3928 = vadd.f32 %v3918, %v3926
    %v3929 = vtanh.pop %v3928
    %3931 = vrot.lane.b32.xlu0 %v3929, 16
    %v3932 = vpop.permute.xlu0 %3931
    %v3934 = vmul.f32 %v3916, %v3932
    %v3935 = vsel %vm359, %v3836, 0
    %3937 = vmatprep.subr.mxu0 0.0
    %3938 = vmatpush1.msra.mxu0 0.0
    %3939 = vmatprep.subr.mxu0 0.0
    %3940 = vmatpush1.msra.mxu0 0.0
    %3941 = vmatprep.subr.mxu0 0.0
    %3942 = vmatpush1.msra.mxu0 0.0
    %3943 = vmatprep.subr.mxu0 0.0
    %3944 = vmatpush1.msra.mxu0 0.0
    %3945 = vmatprep.subr.mxu0 0.0
    %3946 = vmatpush1.msra.mxu0 0.0
    %3947 = vmatprep.subr.mxu0 0.0
    %3948 = vmatpush1.msra.mxu0 0.0
    %3949 = vmatprep.subr.mxu0 0.0
    %3950 = vmatpush1.msra.mxu0 0.0
    %3951 = vmatprep.subr.mxu0 0.0
    %3952 = vmatpush1.msra.mxu0 0.0
    %3953 = vmatprep.subr.mxu0 0.0
    %3954 = vmatpush1.msra.mxu0 0.0
    %3955 = vmatprep.subr.mxu0 0.0
    %3956 = vmatpush1.msra.mxu0 0.0
    %3957 = vmatprep.subr.mxu0 0.0
    %3958 = vmatpush1.msra.mxu0 0.0
    %3959 = vmatprep.subr.mxu0 0.0
    %3960 = vmatpush1.msra.mxu0 0.0
    %3961 = vmatprep.subr.mxu0 0.0
    %3962 = vmatpush1.msra.mxu0 0.0
    %3963 = vmatprep.subr.mxu0 0.0
    %3964 = vmatpush1.msra.mxu0 0.0
    %3965 = vmatprep.subr.mxu0 0.0
    %3966 = vmatpush1.msra.mxu0 %v350
    %3967 = vmatprep.subr.mxu0 0.0
    %3968 = vmatpush1.msra.mxu0 %v349
    %3969 = vmatprep.subr.mxu0 0.0
    %3970 = vmatpush2.msra.mxu0 0.0
    %3971 = vmatprep.subr.mxu0 0.0
    %3972 = vmatpush2.msra.mxu0 0.0
    %3973 = vmatprep.subr.mxu0 0.0
    %3974 = vmatpush2.msra.mxu0 0.0
    %3975 = vmatprep.subr.mxu0 0.0
    %3976 = vmatpush2.msra.mxu0 0.0
    %3977 = vmatprep.subr.mxu0 0.0
    %3978 = vmatpush2.msra.mxu0 0.0
    %3979 = vmatprep.subr.mxu0 0.0
    %3980 = vmatpush2.msra.mxu0 0.0
    %3981 = vmatprep.subr.mxu0 0.0
    %3982 = vmatpush2.msra.mxu0 0.0
    %3983 = vmatprep.subr.mxu0 0.0
    %3984 = vmatpush2.msra.mxu0 0.0
    %3985 = vmatprep.subr.mxu0 0.0
    %3986 = vmatpush2.msra.mxu0 0.0
    %3987 = vmatprep.subr.mxu0 0.0
    %3988 = vmatpush2.msra.mxu0 0.0
    %3989 = vmatprep.subr.mxu0 0.0
    %3990 = vmatpush2.msra.mxu0 0.0
    %3991 = vmatprep.subr.mxu0 0.0
    %3992 = vmatpush2.msra.mxu0 0.0
    %3993 = vmatprep.subr.mxu0 0.0
    %3994 = vmatpush2.msra.mxu0 0.0
    %3995 = vmatprep.subr.mxu0 0.0
    %3996 = vmatpush2.msra.mxu0 0.0
    %3997 = vmatprep.subr.mxu0 0.0
    %3998 = vmatpush2.msra.mxu0 0.0
    %3999 = vmatprep.subr.mxu0 0.0
    %4000 = vmatpush2.msra.mxu0 0.0
    %4001 = vmatprep.mubr.f32.mxu0 0.0
    %4002 = vmatmul.mubr.f32.gmra.mxu0 %v3935
    %v4003 = vpop.f32.mrf.mxu0
    %v4004 = vadd.f32 0.0, %v4003
    %v4005 = vpop.f32.mrf.mxu0
    %4006 = vdwg.mxu0
    %4008 = vrot.lane.b32.xlu0 %v3934, 104
    %v4009 = vpop.permute.xlu0 %4008
    %v4010 = vsel %vm458, %v4009, 0
    %4012 = vmatprep.subr.mxu0 0.0
    %4013 = vmatpush1.msra.mxu0 0.0
    %4014 = vmatprep.subr.mxu0 0.0
    %4015 = vmatpush1.msra.mxu0 0.0
    %4016 = vmatprep.subr.mxu0 0.0
    %4017 = vmatpush1.msra.mxu0 0.0
    %4018 = vmatprep.subr.mxu0 0.0
    %4019 = vmatpush1.msra.mxu0 0.0
    %4020 = vmatprep.subr.mxu0 0.0
    %4021 = vmatpush1.msra.mxu0 0.0
    %4022 = vmatprep.subr.mxu0 0.0
    %4023 = vmatpush1.msra.mxu0 0.0
    %4024 = vmatprep.subr.mxu0 0.0
    %4025 = vmatpush1.msra.mxu0 0.0
    %4026 = vmatprep.subr.mxu0 0.0
    %4027 = vmatpush1.msra.mxu0 0.0
    %4028 = vmatprep.subr.mxu0 0.0
    %4029 = vmatpush1.msra.mxu0 0.0
    %4030 = vmatprep.subr.mxu0 0.0
    %4031 = vmatpush1.msra.mxu0 0.0
    %4032 = vmatprep.subr.mxu0 0.0
    %4033 = vmatpush1.msra.mxu0 0.0
    %4034 = vmatprep.subr.mxu0 0.0
    %4035 = vmatpush1.msra.mxu0 0.0
    %4036 = vmatprep.subr.mxu0 0.0
    %4037 = vmatpush1.msra.mxu0 0.0
    %4038 = vmatprep.subr.mxu0 0.0
    %4039 = vmatpush1.msra.mxu0 0.0
    %4040 = vmatprep.subr.mxu0 0.0
    %4041 = vmatpush1.msra.mxu0 0.0
    %4042 = vmatprep.subr.mxu0 0.0
    %4043 = vmatpush1.msra.mxu0 %v348
    %4044 = vmatprep.subr.mxu0 0.0
    %4045 = vmatpush2.msra.mxu0 0.0
    %4046 = vmatprep.subr.mxu0 0.0
    %4047 = vmatpush2.msra.mxu0 0.0
    %4048 = vmatprep.subr.mxu0 0.0
    %4049 = vmatpush2.msra.mxu0 0.0
    %4050 = vmatprep.subr.mxu0 0.0
    %4051 = vmatpush2.msra.mxu0 0.0
    %4052 = vmatprep.subr.mxu0 0.0
    %4053 = vmatpush2.msra.mxu0 0.0
    %4054 = vmatprep.subr.mxu0 0.0
    %4055 = vmatpush2.msra.mxu0 0.0
    %4056 = vmatprep.subr.mxu0 0.0
    %4057 = vmatpush2.msra.mxu0 0.0
    %4058 = vmatprep.subr.mxu0 0.0
    %4059 = vmatpush2.msra.mxu0 0.0
    %4060 = vmatprep.subr.mxu0 0.0
    %4061 = vmatpush2.msra.mxu0 0.0
    %4062 = vmatprep.subr.mxu0 0.0
    %4063 = vmatpush2.msra.mxu0 0.0
    %4064 = vmatprep.subr.mxu0 0.0
    %4065 = vmatpush2.msra.mxu0 0.0
    %4066 = vmatprep.subr.mxu0 0.0
    %4067 = vmatpush2.msra.mxu0 0.0
    %4068 = vmatprep.subr.mxu0 0.0
    %4069 = vmatpush2.msra.mxu0 0.0
    %4070 = vmatprep.subr.mxu0 0.0
    %4071 = vmatpush2.msra.mxu0 0.0
    %4072 = vmatprep.subr.mxu0 0.0
    %4073 = vmatpush2.msra.mxu0 0.0
    %4074 = vmatprep.subr.mxu0 0.0
    %4075 = vmatpush2.msra.mxu0 0.0
    %4076 = vmatprep.mubr.f32.mxu0 0.0
    %4077 = vmatmul.mubr.f32.gmra.mxu0 %v4010
    %v4078 = vpop.f32.mrf.mxu0
    %v4079 = vadd.f32 %v4004, %v4078
    %v4080 = vpop.f32.mrf.mxu0
    %4081 = vdwg.mxu0
    %v4082 = vadd.f32 %v4079, %v356
    %v4083 = vxor.u32 %v4082, 2147483648
    %v4084 = vmul.f32 %v4083, 1.442695
    %v4085 = vpow.pop %v4084
    %v4086 = vadd.f32 %v4085, 1.0
    %v4087 = vrcp.pop %v4086
    %v4088 = vmul.f32 1.0, %v4087
    %v4089 = vtanh.pop %v4082
    %v4090 = vmul.f32 %v4088, %v3827
    %4092 = vrot.lane.b32.xlu0 %v4089, 96
    %v4093 = vpop.permute.xlu0 %4092
    %v4095 = vmul.f32 %v4088, %v4093
    %4097 = vrot.lane.b32.xlu0 %v4095, 16
    %v4098 = vpop.permute.xlu0 %4097
    %v4100 = vadd.f32 %v4090, %v4098
    %v4101 = vtanh.pop %v4100
    %4103 = vrot.lane.b32.xlu0 %v4101, 32
    %v4104 = vpop.permute.xlu0 %4103
    %v4106 = vmul.f32 %v4088, %v4104
    %4108 = vrot.lane.b32.xlu0 %v4106, 80
    %v4109 = vpop.permute.xlu0 %4108
    %4111 = vst.msk [vmem:[#allocation4 + $0x28] sm:$0xff] %vm359, %v4109
    %v4112 = vld [vmem:[#allocation3 + $0x30] sm:$0xff]
    %4113 = vmatprep.subr.mxu0 0.0
    %4114 = vmatpush1.msra.mxu0 0.0
    %4115 = vmatprep.subr.mxu0 0.0
    %4116 = vmatpush1.msra.mxu0 0.0
    %4117 = vmatprep.subr.mxu0 0.0
    %4118 = vmatpush1.msra.mxu0 0.0
    %4119 = vmatprep.subr.mxu0 0.0
    %4120 = vmatpush1.msra.mxu0 0.0
    %4121 = vmatprep.subr.mxu0 0.0
    %4122 = vmatpush1.msra.mxu0 0.0
    %4123 = vmatprep.subr.mxu0 0.0
    %4124 = vmatpush1.msra.mxu0 0.0
    %4125 = vmatprep.subr.mxu0 0.0
    %4126 = vmatpush1.msra.mxu0 0.0
    %4127 = vmatprep.subr.mxu0 0.0
    %4128 = vmatpush1.msra.mxu0 0.0
    %4129 = vmatprep.subr.mxu0 0.0
    %4130 = vmatpush1.msra.mxu0 0.0
    %4131 = vmatprep.subr.mxu0 0.0
    %4132 = vmatpush1.msra.mxu0 0.0
    %4133 = vmatprep.subr.mxu0 0.0
    %4134 = vmatpush1.msra.mxu0 0.0
    %4135 = vmatprep.subr.mxu0 0.0
    %4136 = vmatpush1.msra.mxu0 0.0
    %4137 = vmatprep.subr.mxu0 0.0
    %4138 = vmatpush1.msra.mxu0 0.0
    %4139 = vmatprep.subr.mxu0 0.0
    %4140 = vmatpush1.msra.mxu0 0.0
    %4141 = vmatprep.subr.mxu0 0.0
    %4142 = vmatpush1.msra.mxu0 0.0
    %4143 = vmatprep.subr.mxu0 0.0
    %4144 = vmatpush1.msra.mxu0 %v347
    %4145 = vmatprep.subr.mxu0 0.0
    %4146 = vmatpush2.msra.mxu0 0.0
    %4147 = vmatprep.subr.mxu0 0.0
    %4148 = vmatpush2.msra.mxu0 0.0
    %4149 = vmatprep.subr.mxu0 0.0
    %4150 = vmatpush2.msra.mxu0 0.0
    %4151 = vmatprep.subr.mxu0 0.0
    %4152 = vmatpush2.msra.mxu0 0.0
    %4153 = vmatprep.subr.mxu0 0.0
    %4154 = vmatpush2.msra.mxu0 0.0
    %4155 = vmatprep.subr.mxu0 0.0
    %4156 = vmatpush2.msra.mxu0 0.0
    %4157 = vmatprep.subr.mxu0 0.0
    %4158 = vmatpush2.msra.mxu0 0.0
    %4159 = vmatprep.subr.mxu0 0.0
    %4160 = vmatpush2.msra.mxu0 0.0
    %4161 = vmatprep.subr.mxu0 0.0
    %4162 = vmatpush2.msra.mxu0 0.0
    %4163 = vmatprep.subr.mxu0 0.0
    %4164 = vmatpush2.msra.mxu0 0.0
    %4165 = vmatprep.subr.mxu0 0.0
    %4166 = vmatpush2.msra.mxu0 0.0
    %4167 = vmatprep.subr.mxu0 0.0
    %4168 = vmatpush2.msra.mxu0 0.0
    %4169 = vmatprep.subr.mxu0 0.0
    %4170 = vmatpush2.msra.mxu0 0.0
    %4171 = vmatprep.subr.mxu0 0.0
    %4172 = vmatpush2.msra.mxu0 0.0
    %4173 = vmatprep.subr.mxu0 0.0
    %4174 = vmatpush2.msra.mxu0 0.0
    %4175 = vmatprep.subr.mxu0 0.0
    %4176 = vmatpush2.msra.mxu0 0.0
    %4177 = vmatprep.mubr.f32.mxu0 0.0
    %4178 = vmatmul.mubr.f32.gmra.mxu0 %v4010
    %v4179 = vpop.f32.mrf.mxu0
    %v4180 = vadd.f32 0.0, %v4179
    %v4181 = vpop.f32.mrf.mxu0
    %4182 = vdwg.mxu0
    %v4183 = vadd.f32 %v4112, %v4180
    %v4184 = vxor.u32 %v4183, 2147483648
    %v4185 = vmul.f32 %v4184, 1.442695
    %v4186 = vpow.pop %v4185
    %v4187 = vadd.f32 %v4186, 1.0
    %v4188 = vrcp.pop %v4187
    %v4189 = vmul.f32 1.0, %v4188
    %v4190 = vtanh.pop %v4183
    %v4191 = vmul.f32 %v4189, %v3928
    %4193 = vrot.lane.b32.xlu0 %v4190, 112
    %v4194 = vpop.permute.xlu0 %4193
    %v4196 = vmul.f32 %v4189, %v4194
    %4198 = vrot.lane.b32.xlu0 %v4196, 8
    %v4199 = vpop.permute.xlu0 %4198
    %v4201 = vadd.f32 %v4191, %v4199
    %v4202 = vtanh.pop %v4201
    %4204 = vrot.lane.b32.xlu0 %v4202, 16
    %v4205 = vpop.permute.xlu0 %4204
    %v4207 = vmul.f32 %v4189, %v4205
    %v4208 = vsel %vm359, %v4109, 0
    %4210 = vmatprep.subr.mxu0 0.0
    %4211 = vmatpush1.msra.mxu0 0.0
    %4212 = vmatprep.subr.mxu0 0.0
    %4213 = vmatpush1.msra.mxu0 0.0
    %4214 = vmatprep.subr.mxu0 0.0
    %4215 = vmatpush1.msra.mxu0 0.0
    %4216 = vmatprep.subr.mxu0 0.0
    %4217 = vmatpush1.msra.mxu0 0.0
    %4218 = vmatprep.subr.mxu0 0.0
    %4219 = vmatpush1.msra.mxu0 0.0
    %4220 = vmatprep.subr.mxu0 0.0
    %4221 = vmatpush1.msra.mxu0 0.0
    %4222 = vmatprep.subr.mxu0 0.0
    %4223 = vmatpush1.msra.mxu0 0.0
    %4224 = vmatprep.subr.mxu0 0.0
    %4225 = vmatpush1.msra.mxu0 0.0
    %4226 = vmatprep.subr.mxu0 0.0
    %4227 = vmatpush1.msra.mxu0 0.0
    %4228 = vmatprep.subr.mxu0 0.0
    %4229 = vmatpush1.msra.mxu0 0.0
    %4230 = vmatprep.subr.mxu0 0.0
    %4231 = vmatpush1.msra.mxu0 0.0
    %4232 = vmatprep.subr.mxu0 0.0
    %4233 = vmatpush1.msra.mxu0 0.0
    %4234 = vmatprep.subr.mxu0 0.0
    %4235 = vmatpush1.msra.mxu0 0.0
    %4236 = vmatprep.subr.mxu0 0.0
    %4237 = vmatpush1.msra.mxu0 0.0
    %4238 = vmatprep.subr.mxu0 0.0
    %4239 = vmatpush1.msra.mxu0 %v350
    %4240 = vmatprep.subr.mxu0 0.0
    %4241 = vmatpush1.msra.mxu0 %v349
    %4242 = vmatprep.subr.mxu0 0.0
    %4243 = vmatpush2.msra.mxu0 0.0
    %4244 = vmatprep.subr.mxu0 0.0
    %4245 = vmatpush2.msra.mxu0 0.0
    %4246 = vmatprep.subr.mxu0 0.0
    %4247 = vmatpush2.msra.mxu0 0.0
    %4248 = vmatprep.subr.mxu0 0.0
    %4249 = vmatpush2.msra.mxu0 0.0
    %4250 = vmatprep.subr.mxu0 0.0
    %4251 = vmatpush2.msra.mxu0 0.0
    %4252 = vmatprep.subr.mxu0 0.0
    %4253 = vmatpush2.msra.mxu0 0.0
    %4254 = vmatprep.subr.mxu0 0.0
    %4255 = vmatpush2.msra.mxu0 0.0
    %4256 = vmatprep.subr.mxu0 0.0
    %4257 = vmatpush2.msra.mxu0 0.0
    %4258 = vmatprep.subr.mxu0 0.0
    %4259 = vmatpush2.msra.mxu0 0.0
    %4260 = vmatprep.subr.mxu0 0.0
    %4261 = vmatpush2.msra.mxu0 0.0
    %4262 = vmatprep.subr.mxu0 0.0
    %4263 = vmatpush2.msra.mxu0 0.0
    %4264 = vmatprep.subr.mxu0 0.0
    %4265 = vmatpush2.msra.mxu0 0.0
    %4266 = vmatprep.subr.mxu0 0.0
    %4267 = vmatpush2.msra.mxu0 0.0
    %4268 = vmatprep.subr.mxu0 0.0
    %4269 = vmatpush2.msra.mxu0 0.0
    %4270 = vmatprep.subr.mxu0 0.0
    %4271 = vmatpush2.msra.mxu0 0.0
    %4272 = vmatprep.subr.mxu0 0.0
    %4273 = vmatpush2.msra.mxu0 0.0
    %4274 = vmatprep.mubr.f32.mxu0 0.0
    %4275 = vmatmul.mubr.f32.gmra.mxu0 %v4208
    %v4276 = vpop.f32.mrf.mxu0
    %v4277 = vadd.f32 0.0, %v4276
    %v4278 = vpop.f32.mrf.mxu0
    %4279 = vdwg.mxu0
    %4281 = vrot.lane.b32.xlu0 %v4207, 104
    %v4282 = vpop.permute.xlu0 %4281
    %v4283 = vsel %vm458, %v4282, 0
    %4285 = vmatprep.subr.mxu0 0.0
    %4286 = vmatpush1.msra.mxu0 0.0
    %4287 = vmatprep.subr.mxu0 0.0
    %4288 = vmatpush1.msra.mxu0 0.0
    %4289 = vmatprep.subr.mxu0 0.0
    %4290 = vmatpush1.msra.mxu0 0.0
    %4291 = vmatprep.subr.mxu0 0.0
    %4292 = vmatpush1.msra.mxu0 0.0
    %4293 = vmatprep.subr.mxu0 0.0
    %4294 = vmatpush1.msra.mxu0 0.0
    %4295 = vmatprep.subr.mxu0 0.0
    %4296 = vmatpush1.msra.mxu0 0.0
    %4297 = vmatprep.subr.mxu0 0.0
    %4298 = vmatpush1.msra.mxu0 0.0
    %4299 = vmatprep.subr.mxu0 0.0
    %4300 = vmatpush1.msra.mxu0 0.0
    %4301 = vmatprep.subr.mxu0 0.0
    %4302 = vmatpush1.msra.mxu0 0.0
    %4303 = vmatprep.subr.mxu0 0.0
    %4304 = vmatpush1.msra.mxu0 0.0
    %4305 = vmatprep.subr.mxu0 0.0
    %4306 = vmatpush1.msra.mxu0 0.0
    %4307 = vmatprep.subr.mxu0 0.0
    %4308 = vmatpush1.msra.mxu0 0.0
    %4309 = vmatprep.subr.mxu0 0.0
    %4310 = vmatpush1.msra.mxu0 0.0
    %4311 = vmatprep.subr.mxu0 0.0
    %4312 = vmatpush1.msra.mxu0 0.0
    %4313 = vmatprep.subr.mxu0 0.0
    %4314 = vmatpush1.msra.mxu0 0.0
    %4315 = vmatprep.subr.mxu0 0.0
    %4316 = vmatpush1.msra.mxu0 %v348
    %4317 = vmatprep.subr.mxu0 0.0
    %4318 = vmatpush2.msra.mxu0 0.0
    %4319 = vmatprep.subr.mxu0 0.0
    %4320 = vmatpush2.msra.mxu0 0.0
    %4321 = vmatprep.subr.mxu0 0.0
    %4322 = vmatpush2.msra.mxu0 0.0
    %4323 = vmatprep.subr.mxu0 0.0
    %4324 = vmatpush2.msra.mxu0 0.0
    %4325 = vmatprep.subr.mxu0 0.0
    %4326 = vmatpush2.msra.mxu0 0.0
    %4327 = vmatprep.subr.mxu0 0.0
    %4328 = vmatpush2.msra.mxu0 0.0
    %4329 = vmatprep.subr.mxu0 0.0
    %4330 = vmatpush2.msra.mxu0 0.0
    %4331 = vmatprep.subr.mxu0 0.0
    %4332 = vmatpush2.msra.mxu0 0.0
    %4333 = vmatprep.subr.mxu0 0.0
    %4334 = vmatpush2.msra.mxu0 0.0
    %4335 = vmatprep.subr.mxu0 0.0
    %4336 = vmatpush2.msra.mxu0 0.0
    %4337 = vmatprep.subr.mxu0 0.0
    %4338 = vmatpush2.msra.mxu0 0.0
    %4339 = vmatprep.subr.mxu0 0.0
    %4340 = vmatpush2.msra.mxu0 0.0
    %4341 = vmatprep.subr.mxu0 0.0
    %4342 = vmatpush2.msra.mxu0 0.0
    %4343 = vmatprep.subr.mxu0 0.0
    %4344 = vmatpush2.msra.mxu0 0.0
    %4345 = vmatprep.subr.mxu0 0.0
    %4346 = vmatpush2.msra.mxu0 0.0
    %4347 = vmatprep.subr.mxu0 0.0
    %4348 = vmatpush2.msra.mxu0 0.0
    %4349 = vmatprep.mubr.f32.mxu0 0.0
    %4350 = vmatmul.mubr.f32.gmra.mxu0 %v4283
    %v4351 = vpop.f32.mrf.mxu0
    %v4352 = vadd.f32 %v4277, %v4351
    %v4353 = vpop.f32.mrf.mxu0
    %4354 = vdwg.mxu0
    %v4355 = vadd.f32 %v4352, %v356
    %v4356 = vxor.u32 %v4355, 2147483648
    %v4357 = vmul.f32 %v4356, 1.442695
    %v4358 = vpow.pop %v4357
    %v4359 = vadd.f32 %v4358, 1.0
    %v4360 = vrcp.pop %v4359
    %v4361 = vmul.f32 1.0, %v4360
    %v4362 = vtanh.pop %v4355
    %v4363 = vmul.f32 %v4361, %v4100
    %4365 = vrot.lane.b32.xlu0 %v4362, 96
    %v4366 = vpop.permute.xlu0 %4365
    %v4368 = vmul.f32 %v4361, %v4366
    %4370 = vrot.lane.b32.xlu0 %v4368, 16
    %v4371 = vpop.permute.xlu0 %4370
    %v4373 = vadd.f32 %v4363, %v4371
    %v4374 = vtanh.pop %v4373
    %4376 = vrot.lane.b32.xlu0 %v4374, 32
    %v4377 = vpop.permute.xlu0 %4376
    %v4379 = vmul.f32 %v4361, %v4377
    %4381 = vrot.lane.b32.xlu0 %v4379, 80
    %v4382 = vpop.permute.xlu0 %4381
    %4384 = vst.msk [vmem:[#allocation4 + $0x30] sm:$0xff] %vm359, %v4382
    %v4385 = vld [vmem:[#allocation4] sm:$0xff]
    %v4386 = vld [vmem:[#allocation4 + $0x8] sm:$0xff]
    %v4387 = vld [vmem:[#allocation4 + $0x10] sm:$0xff]
    %v4388 = vld [vmem:[#allocation4 + $0x18] sm:$0xff]
    %v4389 = vld [vmem:[#allocation4 + $0x20] sm:$0xff]
    %v4390 = vld [vmem:[#allocation4 + $0x28] sm:$0xff]
    %v4391 = vld [vmem:[#allocation4 + $0x30] sm:$0xff]
    %v4392 = vld [vmem:[%s14] sm:$0xff]
    %v4393 = vld [vmem:[%s14 + $0x8] sm:$0xff]
    %v4394 = vld [vmem:[%s15] sm:$0x1]
    %v4396 = vlaneseq
    %v4397 = vshrl.u32 %v4396, 7
    %v4398 = vsub.s32 0, %v4397
    %v4399 = vrot.slane %v4394, %v4398
    %v4402 = vsel %vm359, %v4385, 0
    %v4405 = vsel %vm359, %v4386, 0
    %v4408 = vsel %vm359, %v4387, 0
    %v4411 = vsel %vm359, %v4388, 0
    %v4414 = vsel %vm359, %v4389, 0
    %v4417 = vsel %vm359, %v4390, 0
    %v4420 = vsel %vm359, %v4391, 0
    %4422 = vmatprep.subr.mxu0 0.0
    %4423 = vmatpush1.msra.mxu0 0.0
    %4424 = vmatprep.subr.mxu0 0.0
    %4425 = vmatpush1.msra.mxu0 0.0
    %4426 = vmatprep.subr.mxu0 0.0
    %4427 = vmatpush1.msra.mxu0 0.0
    %4428 = vmatprep.subr.mxu0 0.0
    %4429 = vmatpush1.msra.mxu0 0.0
    %4430 = vmatprep.subr.mxu0 0.0
    %4431 = vmatpush1.msra.mxu0 0.0
    %4432 = vmatprep.subr.mxu0 0.0
    %4433 = vmatpush1.msra.mxu0 0.0
    %4434 = vmatprep.subr.mxu0 0.0
    %4435 = vmatpush1.msra.mxu0 0.0
    %4436 = vmatprep.subr.mxu0 0.0
    %4437 = vmatpush1.msra.mxu0 0.0
    %4438 = vmatprep.subr.mxu0 0.0
    %4439 = vmatpush1.msra.mxu0 0.0
    %4440 = vmatprep.subr.mxu0 0.0
    %4441 = vmatpush1.msra.mxu0 0.0
    %4442 = vmatprep.subr.mxu0 0.0
    %4443 = vmatpush1.msra.mxu0 0.0
    %4444 = vmatprep.subr.mxu0 0.0
    %4445 = vmatpush1.msra.mxu0 0.0
    %4446 = vmatprep.subr.mxu0 0.0
    %4447 = vmatpush1.msra.mxu0 0.0
    %4448 = vmatprep.subr.mxu0 0.0
    %4449 = vmatpush1.msra.mxu0 0.0
    %4450 = vmatprep.subr.mxu0 0.0
    %4451 = vmatpush1.msra.mxu0 %v4393
    %4452 = vmatprep.subr.mxu0 0.0
    %4453 = vmatpush1.msra.mxu0 %v4392
    %4454 = vmatprep.subr.mxu0 0.0
    %4455 = vmatpush2.msra.mxu0 0.0
    %4456 = vmatprep.subr.mxu0 0.0
    %4457 = vmatpush2.msra.mxu0 0.0
    %4458 = vmatprep.subr.mxu0 0.0
    %4459 = vmatpush2.msra.mxu0 0.0
    %4460 = vmatprep.subr.mxu0 0.0
    %4461 = vmatpush2.msra.mxu0 0.0
    %4462 = vmatprep.subr.mxu0 0.0
    %4463 = vmatpush2.msra.mxu0 0.0
    %4464 = vmatprep.subr.mxu0 0.0
    %4465 = vmatpush2.msra.mxu0 0.0
    %4466 = vmatprep.subr.mxu0 0.0
    %4467 = vmatpush2.msra.mxu0 0.0
    %4468 = vmatprep.subr.mxu0 0.0
    %4469 = vmatpush2.msra.mxu0 0.0
    %4470 = vmatprep.subr.mxu0 0.0
    %4471 = vmatpush2.msra.mxu0 0.0
    %4472 = vmatprep.subr.mxu0 0.0
    %4473 = vmatpush2.msra.mxu0 0.0
    %4474 = vmatprep.subr.mxu0 0.0
    %4475 = vmatpush2.msra.mxu0 0.0
    %4476 = vmatprep.subr.mxu0 0.0
    %4477 = vmatpush2.msra.mxu0 0.0
    %4478 = vmatprep.subr.mxu0 0.0
    %4479 = vmatpush2.msra.mxu0 0.0
    %4480 = vmatprep.subr.mxu0 0.0
    %4481 = vmatpush2.msra.mxu0 0.0
    %4482 = vmatprep.subr.mxu0 0.0
    %4483 = vmatpush2.msra.mxu0 0.0
    %4484 = vmatprep.subr.mxu0 0.0
    %4485 = vmatpush2.msra.mxu0 0.0
    %4486 = vmatprep.mubr.f32.mxu0 0.0
    %4487 = vmatmul.mubr.f32.gmra.mxu0 %v4402
    %v4488 = vpop.f32.mrf.mxu0
    %v4489 = vadd.f32 %v4399, %v4488
    %v4490 = vpop.f32.mrf.mxu0
    %4491 = vmatprep.mubr.f32.mxu0 0.0
    %4492 = vmatmul.mubr.f32.gmra.mxu0 %v4405
    %v4493 = vpop.f32.mrf.mxu0
    %v4494 = vadd.f32 %v4399, %v4493
    %v4495 = vpop.f32.mrf.mxu0
    %4496 = vmatprep.mubr.f32.mxu0 0.0
    %4497 = vmatmul.mubr.f32.gmra.mxu0 %v4408
    %v4498 = vpop.f32.mrf.mxu0
    %v4499 = vadd.f32 %v4399, %v4498
    %v4500 = vpop.f32.mrf.mxu0
    %4501 = vmatprep.mubr.f32.mxu0 0.0
    %4502 = vmatmul.mubr.f32.gmra.mxu0 %v4411
    %v4503 = vpop.f32.mrf.mxu0
    %v4504 = vadd.f32 %v4399, %v4503
    %v4505 = vpop.f32.mrf.mxu0
    %4506 = vmatprep.mubr.f32.mxu0 0.0
    %4507 = vmatmul.mubr.f32.gmra.mxu0 %v4414
    %v4508 = vpop.f32.mrf.mxu0
    %v4509 = vadd.f32 %v4399, %v4508
    %v4510 = vpop.f32.mrf.mxu0
    %4511 = vmatprep.mubr.f32.mxu0 0.0
    %4512 = vmatmul.mubr.f32.gmra.mxu0 %v4417
    %v4513 = vpop.f32.mrf.mxu0
    %v4514 = vadd.f32 %v4399, %v4513
    %v4515 = vpop.f32.mrf.mxu0
    %4516 = vmatprep.mubr.f32.mxu0 0.0
    %4517 = vmatmul.mubr.f32.gmra.mxu0 %v4420
    %v4518 = vpop.f32.mrf.mxu0
    %v4519 = vadd.f32 %v4399, %v4518
    %v4520 = vpop.f32.mrf.mxu0
    %4521 = vdwg.mxu0
    %4523 = vrot.lane.b32.xlu0 %v4494, 2
    %v4524 = vpop.permute.xlu0 %4523
    %4527 = vrot.lane.b32.xlu0 %v4499, 4
    %v4528 = vpop.permute.xlu0 %4527
    %4531 = vrot.lane.b32.xlu0 %v4504, 6
    %v4532 = vpop.permute.xlu0 %4531
    %4535 = vrot.lane.b32.xlu0 %v4509, 8
    %v4536 = vpop.permute.xlu0 %4535
    %4539 = vrot.lane.b32.xlu0 %v4514, 10
    %v4540 = vpop.permute.xlu0 %4539
    %4543 = vrot.lane.b32.xlu0 %v4519, 12
    %v4544 = vpop.permute.xlu0 %4543
    %vm4546 = vcmask 15360
    %v4547 = vsel %vm4546, %v4489, %v4524
    %v4548 = vsel %vm208, %v4547, %v4528
    %vm4549 = vcmask 48128
    %v4550 = vsel %vm4549, %v4548, %v4532
    %v4551 = vsel %vm458, %v4550, %v4536
    %vm4552 = vcmask 80896
    %v4553 = vsel %vm4552, %v4551, %v4540
    %vm4554 = vcmask 97280
    %v4555 = vsel %vm4554, %v4553, %v4544
    %v4556 = vsel %vm359, %v4555, 0.0
    %4557 = vst [vmem:[%s16] sm:$0xff] %v4556
    // Predicated region
    $region110: #{_lambda_.1} parent=1 // pred_check
      _
    $region111: #{_lambda_.1} parent=1 // pred_check_branch
      %4559 = sbr.rel (0) target = $region113
    $region112: #{_lambda_.1} parent=1 // pred_region
      _
    $region113: #{_lambda_.1} parent=1 // pred_fallthru
      _
    // Predicated region
    $region114: #{_lambda_.1} parent=1 // pred_check
      _
    $region115: #{_lambda_.1} parent=1 // pred_check_branch
      %4561 = sbr.rel (0) target = $region117
    $region116: #{_lambda_.1} parent=1 // pred_region
      _
    $region117: #{_lambda_.1} parent=1 // pred_fallthru
      _
    %4562 = vsyncpa [#allocation6], 1
    %4563 = vsyncpa [#allocation8], 1
    %4564 = vsyncpa [#allocation11], 1
    %4565 = vsyncpa [#allocation14], 1
    %4566 = vsyncpa [#allocation17], 1
    %4567 = vsyncpa [#allocation20], 1

</llo_original>
